<compile_context>
chip_gen: v6e
topology: v6e:2x2x1
jax: 0.10.0
libtpu: 0.0.40
codegen_flags: <defaults>
</compile_context>

<pallas_src>
import functools
import numpy as np
import jax
import jax.numpy as jnp
from jax.experimental import pallas as pl
from jax.experimental.pallas import tpu as pltpu

_VMEM_LIMIT = 32 * 1024 * 1024   # fits v5e/v6e/v7x; per-step working set << this


def _round_up(x, m):
    return (x + m - 1) // m * m


def _ctile(c, cap=512):
    """Channel tile: full dim if small, else a multiple-of-128 divisor <= cap."""
    if c <= cap:
        return c
    t = (cap // 128) * 128
    while t >= 128 and c % t != 0:
        t -= 128
    return t if t >= 128 else c


# ----------------------------------------------------------------------------
# Kernel 1: fused 3x3 conv (stride 1, pad 1) on padded-flattened NHWC input
#   out[j, :] = sum_{tap} relu?(x[j + off_tap, :]) @ W[tap]  (+ bias) (+ residual)
# ----------------------------------------------------------------------------
def _conv3x3_kernel(*refs, relu_in, has_bias, has_res, wp, m):
    i = 0
    x_ref = refs[i]; i += 1            # (1, Lp, tCin)  f32
    w_ref = refs[i]; i += 1            # (9, tCin, tCout) bf16
    b_ref = None
    r_ref = None
    if has_bias:
        b_ref = refs[i]; i += 1        # (1, tCout) f32
    if has_res:
        r_ref = refs[i]; i += 1        # (1, Lp, tCout) f32 (same padded-flat layout)
    o_ref = refs[i]; i += 1            # (1, M, tCout) f32
    acc_ref = refs[i]                  # (M, tCout) f32 scratch

    k = pl.program_id(2)

    @pl.when(k == 0)
    def _init():
        acc_ref[...] = jnp.zeros_like(acc_ref)

    x = x_ref[0]                                   # (Lp, tCin) f32
    if relu_in:
        x = jnp.maximum(x, 0.0)                    # fused actvn (f32, pre-cast)

    for tap in range(9):
        dh, dw = divmod(tap, 3)
        off = dh * wp + dw
        patch = x[off:off + m, :].astype(jnp.bfloat16)     # contiguous slice
        acc_ref[...] += jnp.dot(patch, w_ref[tap],
                                preferred_element_type=jnp.float32)

    @pl.when(k == pl.num_programs(2) - 1)
    def _finalize():
        out = acc_ref[...]
        if has_bias:
            out = out + b_ref[...]
        if has_res:
            out = out + r_ref[0][wp + 1: wp + 1 + m, :]    # x_s add, f32
        o_ref[0] = out.astype(o_ref.dtype)


def pad_flatten(x_nhwc):
    """(N,H,W,C) -> zero-pad (1,2)/(1,1) on H/W and flatten spatial -> (N,(H+3)*(W+2),C)."""
    n, h, w, c = x_nhwc.shape
    xp = jnp.pad(x_nhwc, ((0, 0), (1, 2), (1, 1), (0, 0)))
    return xp.reshape(n, (h + 3) * (w + 2), c)


def extract_valid(flat, h, w):
    """Drop the two garbage columns per row group: (N, H*(W+2), C) -> (N,H,W,C)."""
    n, _, c = flat.shape
    return flat.reshape(n, h, w + 2, c)[:, :, :w, :]


def conv3x3_flat(xpf, h, w, w9, bias=None, relu_in=False, res_pf=None):
    n, lp, cin = xpf.shape
    wp = w + 2
    assert lp == (h + 3) * wp
    cout = w9.shape[2]
    m = h * wp
    tci = _ctile(cin)
    tco = _ctile(cout)
    grid = (n, cout // tco, cin // tci)

    in_specs = [
        pl.BlockSpec((1, lp, tci), lambda b, j, k: (b, 0, k)),
        pl.BlockSpec((9, tci, tco), lambda b, j, k: (0, k, j)),
    ]
    args = [xpf.astype(jnp.float32), w9.astype(jnp.bfloat16)]
    if bias is not None:
        in_specs.append(pl.BlockSpec((1, tco), lambda b, j, k: (0, j)))
        args.append(bias.reshape(1, cout).astype(jnp.float32))
    if res_pf is not None:
        assert res_pf.shape == (n, lp, cout)
        in_specs.append(pl.BlockSpec((1, lp, tco), lambda b, j, k: (b, 0, j)))
        args.append(res_pf.astype(jnp.float32))

    kernel = functools.partial(_conv3x3_kernel, relu_in=relu_in,
                               has_bias=bias is not None,
                               has_res=res_pf is not None, wp=wp, m=m)
    return pl.pallas_call(
        kernel,
        out_shape=jax.ShapeDtypeStruct((n, m, cout), jnp.float32),
        grid=grid,
        in_specs=in_specs,
        out_specs=pl.BlockSpec((1, m, tco), lambda b, j, k: (b, 0, j)),
        scratch_shapes=[pltpu.VMEM((m, tco), jnp.float32)],
        compiler_params=pltpu.CompilerParams(
            dimension_semantics=("parallel", "parallel", "arbitrary"),
            vmem_limit_bytes=_VMEM_LIMIT),
    )(*args)


# ----------------------------------------------------------------------------
# Kernel 2: tiled matmul  out = maybe_relu(X) @ W (+ bias) (+ residual)
# (used for the 1x1 shortcut conv and the final fc)
# ----------------------------------------------------------------------------
def _matmul_kernel(*refs, relu_in, has_bias, has_res):
    i = 0
    x_ref = refs[i]; i += 1            # (tm, tk) f32
    w_ref = refs[i]; i += 1            # (tk, tn) bf16
    b_ref = None
    r_ref = None
    if has_bias:
        b_ref = refs[i]; i += 1        # (1, tn) f32
    if has_res:
        r_ref = refs[i]; i += 1        # (tm, tn) f32
    o_ref = refs[i]; i += 1            # (tm, tn) f32
    acc_ref = refs[i]                  # (tm, tn) f32 scratch

    k = pl.program_id(2)

    @pl.when(k == 0)
    def _init():
        acc_ref[...] = jnp.zeros_like(acc_ref)

    x = x_ref[...]
    if relu_in:
        x = jnp.maximum(x, 0.0)
    acc_ref[...] += jnp.dot(x.astype(jnp.bfloat16), w_ref[...],
                            preferred_element_type=jnp.float32)

    @pl.when(k == pl.num_programs(2) - 1)
    def _finalize():
        out = acc_ref[...]
        if has_bias:
            out = out + b_ref[...]
        if has_res:
            out = out + r_ref[...]
        o_ref[...] = out.astype(o_ref.dtype)


def fused_matmul(x2d, w2d, bias=None, residual=None, relu_in=False):
    m, kdim = x2d.shape
    k2, n = w2d.shape
    assert kdim == k2
    tm = 256 if m >= 256 else _round_up(m, 8)
    mp = _round_up(m, tm)
    x2d = x2d.astype(jnp.float32)
    if residual is not None:
        residual = residual.astype(jnp.float32)
    if mp != m:
        x2d = jnp.pad(x2d, ((0, mp - m), (0, 0)))
        if residual is not None:
            residual = jnp.pad(residual, ((0, mp - m), (0, 0)))
    tk = _ctile(kdim, 1024)
    tn = _ctile(n, 512)
    grid = (mp // tm, n // tn, kdim // tk)

    in_specs = [
        pl.BlockSpec((tm, tk), lambda i, j, k: (i, k)),
        pl.BlockSpec((tk, tn), lambda i, j, k: (k, j)),
    ]
    args = [x2d, w2d.astype(jnp.bfloat16)]
    if bias is not None:
        in_specs.append(pl.BlockSpec((1, tn), lambda i, j, k: (0, j)))
        args.append(bias.reshape(1, n).astype(jnp.float32))
    if residual is not None:
        in_specs.append(pl.BlockSpec((tm, tn), lambda i, j, k: (i, j)))
        args.append(residual)

    kernel = functools.partial(_matmul_kernel, relu_in=relu_in,
                               has_bias=bias is not None,
                               has_res=residual is not None)
    out = pl.pallas_call(
        kernel,
        out_shape=jax.ShapeDtypeStruct((mp, n), jnp.float32),
        grid=grid,
        in_specs=in_specs,
        out_specs=pl.BlockSpec((tm, tn), lambda i, j, k: (i, j)),
        scratch_shapes=[pltpu.VMEM((tm, tn), jnp.float32)],
        compiler_params=pltpu.CompilerParams(
            dimension_semantics=("parallel", "parallel", "arbitrary"),
            vmem_limit_bytes=_VMEM_LIMIT),
    )(*args)
    return out[:m]


# ----------------------------------------------------------------------------
# Kernel 3: AvgPool2d(3, stride=2, padding=1) as a pure VPU reduction
# ----------------------------------------------------------------------------
def _avgpool_kernel(x_ref, o_ref, *, H, W):
    ho = H // 2
    x = x_ref[0]                                          # (H+2, W+2, tC)
    c = x.shape[-1]
    # 3-tap stride-1 sums along W (sublane-shifted adds)
    rs = x[:, 0:W, :] + x[:, 1:W + 1, :] + x[:, 2:W + 2, :]     # (H+2, W, tC)
    # 3-tap stride-2 sums along H via major-dim reshape (no data movement)
    a = rs[0:2 * ho].reshape(ho, 2, W, c)
    b = rs[2:2 * ho + 2].reshape(ho, 2, W, c)
    s = a[:, 0] + a[:, 1] + b[:, 0]                       # (Ho, W, tC)
    o_ref[0] = (s * (1.0 / 9.0)).astype(o_ref.dtype)


def avgpool_3x3_s2(x_nhwc):
    n, h, w, c = x_nhwc.shape
    assert h % 2 == 0 and w % 2 == 0
    ho = h // 2
    xp = jnp.pad(x_nhwc.astype(jnp.float32), ((0, 0), (1, 1), (1, 1), (0, 0)))
    tc = _ctile(c)
    out = pl.pallas_call(
        functools.partial(_avgpool_kernel, H=h, W=w),
        out_shape=jax.ShapeDtypeStruct((n, ho, w, c), jnp.float32),
        grid=(n, c // tc),
        in_specs=[pl.BlockSpec((1, h + 2, w + 2, tc), lambda b, j: (b, 0, 0, j))],
        out_specs=pl.BlockSpec((1, ho, w, tc), lambda b, j: (b, 0, 0, j)),
        compiler_params=pltpu.CompilerParams(
            dimension_semantics=("parallel", "parallel"),
            vmem_limit_bytes=_VMEM_LIMIT),
    )(xp)
    return out[:, :, ::2, :]   # W-direction stride-2 subsample (cheap XLA slice)


# ----------------------------------------------------------------------------
# Parameter init (synthetic, stored pre-transposed in kernel layout, bf16 weights)
# ----------------------------------------------------------------------------
def init_conv3x3(key, cin, cout, bias=True):
    k1, k2 = jax.random.split(key)
    fan_in = cin * 9
    w = (jax.random.normal(k1, (9, cin, cout), jnp.float32)
         / np.sqrt(fan_in)).astype(jnp.bfloat16)          # (tap, Cin, Cout)
    b = (jax.random.normal(k2, (1, cout), jnp.float32) * 0.01) if bias else None
    return w, b


def init_conv1x1(key, cin, cout):
    w = (jax.random.normal(key, (cin, cout), jnp.float32)
         / np.sqrt(cin)).astype(jnp.bfloat16)
    return w


def init_resnet_block(key, fin, fout, fhidden=None, is_bias=True):
    if fhidden is None:
        fhidden = min(fin, fout)
    k0, k1, k2 = jax.random.split(key, 3)
    p = {
        "conv_0": init_conv3x3(k0, fin, fhidden, bias=True),
        "conv_1": init_conv3x3(k1, fhidden, fout, bias=is_bias),
        "learned_shortcut": fin != fout,
    }
    if p["learned_shortcut"]:
        p["conv_s"] = init_conv1x1(k2, fin, fout)
    return p


def init_discriminator(key, nlabels=1, size=32, nfilter=64, nfilter_max=1024):
    s0 = 4
    nf = nfilter
    nlayers = int(np.log2(size / s0))
    nf0 = min(nfilter_max, nf * 2 ** nlayers)
    keys = jax.random.split(key, nlayers + 3)
    params = {"s0": s0, "nf0": nf0, "nlabels": nlabels, "nlayers": nlayers}
    params["conv_img"] = init_conv3x3(keys[0], 3, nf, bias=True)
    blocks = [init_resnet_block(keys[1], nf, nf)]
    for i in range(nlayers):
        nf_i = min(nf * 2 ** i, nfilter_max)
        nf_i1 = min(nf * 2 ** (i + 1), nfilter_max)
        blocks.append(init_resnet_block(keys[2 + i], nf_i, nf_i1))
    params["blocks"] = blocks
    kfw, kfb = jax.random.split(keys[2 + nlayers])
    in_f = nf0 * s0 * s0
    npad = _round_up(max(nlabels, 1), 128)                 # lane-dense fc output
    fc_w = jax.random.normal(kfw, (in_f, nlabels), jnp.float32) / np.sqrt(in_f)
    fc_b = jax.random.normal(kfb, (nlabels,), jnp.float32) * 0.01
    params["fc_w"] = jnp.pad(fc_w, ((0, 0), (0, npad - nlabels))).astype(jnp.bfloat16)
    params["fc_b"] = jnp.pad(fc_b.reshape(1, -1), ((0, 0), (0, npad - nlabels)))
    return params


# ----------------------------------------------------------------------------
# Forward pass
# ----------------------------------------------------------------------------
def resnet_block_forward(x, p):
    n, h, w, cin = x.shape
    xpf = pad_flatten(x)
    w0, b0 = p["conv_0"]
    dx0 = extract_valid(conv3x3_flat(xpf, h, w, w0, bias=b0, relu_in=True), h, w)
    w1, b1 = p["conv_1"]
    dx0_pf = pad_flatten(dx0)
    if p["learned_shortcut"]:
        dx1 = extract_valid(conv3x3_flat(dx0_pf, h, w, w1, bias=b1, relu_in=True), h, w)
        cout = dx1.shape[-1]
        # x_s = conv_s(x): 1x1 conv as tiled matmul, dx residual fused at finalize
        out2d = fused_matmul(x.reshape(n * h * w, cin), p["conv_s"],
                             residual=dx1.reshape(n * h * w, cout))
        return out2d.reshape(n, h, w, cout)
    # identity shortcut: fuse x_s + dx into conv_1's finalize, reusing the
    # padded-flat x buffer (same layout, offset W+3) as the residual input
    dx1_flat = conv3x3_flat(dx0_pf, h, w, w1, bias=b1, relu_in=True, res_pf=xpf)
    return extract_valid(dx1_flat, h, w)


def discriminator_forward(x_nchw, params, y=None):
    n = x_nchw.shape[0]
    x = jnp.transpose(x_nchw, (0, 2, 3, 1)).astype(jnp.float32)   # NCHW -> NHWC
    _, h, w, _ = x.shape

    wci, bci = params["conv_img"]
    out = extract_valid(conv3x3_flat(pad_flatten(x), h, w, wci, bias=bci,
                                     relu_in=False), h, w)
    out = resnet_block_forward(out, params["blocks"][0])
    for i in range(params["nlayers"]):
        out = avgpool_3x3_s2(out)
        out = resnet_block_forward(out, params["blocks"][i + 1])

    nb, hh, ww, c = out.shape                              # hh = ww = s0, c = nf0
    # match PyTorch .view(B, nf0*s0*s0) on an NCHW tensor (channel-major flatten)
    feat = jnp.transpose(out, (0, 3, 1, 2)).reshape(nb, c * hh * ww)
    logits = fused_matmul(feat, params["fc_w"], bias=params["fc_b"], relu_in=True)
    logits = logits[:, :params["nlabels"]]
    if y is None:
        y = jnp.zeros((n,), jnp.int32)
    return logits[jnp.arange(n), y]                        # out[index, y]


if __name__ == "__main__":
    key = jax.random.PRNGKey(0)
    kp, kx = jax.random.split(key)
    size = 16  # nlayers = log2(16/4) = 2, final spatial 4x4
    params = init_discriminator(kp, nlabels=1, size=size, nfilter=8, nfilter_max=32)
    x = jax.random.normal(kx, (2, 3, size, size), jnp.float32)
    out = discriminator_forward(x, params)
    out = jax.block_until_ready(out)
    assert out.shape == (2,), out.shape
    assert bool(jnp.all(jnp.isfinite(out)))
    print("KERNEL_OK")
</pallas_src>

<mosaic_0001>
module attributes {stable_mosaic.version = 11 : i64} {
  func.func @_conv3x3_kernel(%arg0: i32, %arg1: i32, %arg2: i32, %arg3: memref<1x342x3xf32, #tpu.memory_space<vmem>>, %arg4: memref<9x3x8xbf16, #tpu.memory_space<vmem>>, %arg5: memref<1x8xf32, #tpu.memory_space<vmem>>, %arg6: memref<1x288x8xf32, #tpu.memory_space<vmem>>, %arg7: memref<288x8xf32, #tpu.memory_space<vmem>>) attributes {dimension_semantics = [#tpu.dimension_semantics<parallel>, #tpu.dimension_semantics<parallel>, #tpu.dimension_semantics<arbitrary>], iteration_bounds = array<i64: 2, 1, 1>, scalar_prefetch = 0 : i64, scratch_operands = 1 : i64, tpu.core_type = #tpu.core_type<tc>, window_params = [{transform_indices = @transform_0, window_bounds = array<i64: 1, 342, 3>}, {transform_indices = @transform_1, window_bounds = array<i64: 9, 3, 8>}, {transform_indices = @transform_2, window_bounds = array<i64: 1, 8>}, {transform_indices = @transform_3, window_bounds = array<i64: 1, 288, 8>}]} {
    %c0_i32 = arith.constant 0 : i32
    %0 = arith.cmpi eq, %arg2, %c0_i32 : i32
    %1 = arith.extui %0 : i1 to i32
    %c0_i32_0 = arith.constant 0 : i32
    %2 = arith.cmpi ne, %1, %c0_i32_0 : i32
    scf.if %2 {
      %cst_68 = arith.constant 0.000000e+00 : f32
      %80 = vector.broadcast %cst_68 : f32 to vector<288x8xf32>
      %c0_69 = arith.constant 0 : index
      %c0_70 = arith.constant 0 : index
      %81 = vector.load %arg7[%c0_69, %c0_70] : memref<288x8xf32, #tpu.memory_space<vmem>>, vector<288x8xf32>
      tpu.vector_store %arg7[%c0_69, %c0_70], %80 {strides = array<i32>} : memref<288x8xf32, #tpu.memory_space<vmem>>, vector<288x8xf32>,
    } else {
    }
    %c0 = arith.constant 0 : index
    %c0_1 = arith.constant 0 : index
    %c0_2 = arith.constant 0 : index
    %3 = vector.load %arg3[%c0, %c0_1, %c0_2] : memref<1x342x3xf32, #tpu.memory_space<vmem>>, vector<1x342x3xf32>
    %4 = vector.shape_cast %3 : vector<1x342x3xf32> to vector<342x3xf32>
    %5 = vector.extract_strided_slice %4 {offsets = [0, 0], sizes = [288, 3], strides = [1, 1]} : vector<342x3xf32> to vector<288x3xf32>
    %6 = arith.truncf %5 : vector<288x3xf32> to vector<288x3xbf16>
    %c0_3 = arith.constant 0 : index
    %c0_4 = arith.constant 0 : index
    %7 = vector.load %arg7[%c0_3, %c0_4] : memref<288x8xf32, #tpu.memory_space<vmem>>, vector<288x8xf32>
    %c0_5 = arith.constant 0 : index
    %c0_6 = arith.constant 0 : index
    %c0_7 = arith.constant 0 : index
    %8 = vector.load %arg4[%c0_5, %c0_6, %c0_7] : memref<9x3x8xbf16, #tpu.memory_space<vmem>>, vector<1x3x8xbf16>
    %9 = vector.shape_cast %8 : vector<1x3x8xbf16> to vector<3x8xbf16>
    %cst = arith.constant dense<0.000000e+00> : vector<288x8xf32>
    %10 = tpu.matmul %6, %9, %cst {dimension_numbers = #tpu.dot_dimension_numbers<[1], [0], [0], [1], [0, 0, 1, 1], [], []>} : vector<288x3xbf16>, vector<3x8xbf16>, vector<288x8xf32> -> vector<288x8xf32>
    %11 = arith.addf %7, %10 : vector<288x8xf32>
    %c0_8 = arith.constant 0 : index
    %c0_9 = arith.constant 0 : index
    %12 = vector.load %arg7[%c0_8, %c0_9] : memref<288x8xf32, #tpu.memory_space<vmem>>, vector<288x8xf32>
    tpu.vector_store %arg7[%c0_8, %c0_9], %11 {strides = array<i32>} : memref<288x8xf32, #tpu.memory_space<vmem>>, vector<288x8xf32>,
    %13 = vector.extract_strided_slice %4 {offsets = [1, 0], sizes = [288, 3], strides = [1, 1]} : vector<342x3xf32> to vector<288x3xf32>
    %14 = arith.truncf %13 : vector<288x3xf32> to vector<288x3xbf16>
    %c0_10 = arith.constant 0 : index
    %c0_11 = arith.constant 0 : index
    %15 = vector.load %arg7[%c0_10, %c0_11] : memref<288x8xf32, #tpu.memory_space<vmem>>, vector<288x8xf32>
    %c1 = arith.constant 1 : index
    %c0_12 = arith.constant 0 : index
    %c0_13 = arith.constant 0 : index
    %16 = vector.load %arg4[%c1, %c0_12, %c0_13] : memref<9x3x8xbf16, #tpu.memory_space<vmem>>, vector<1x3x8xbf16>
    %17 = vector.shape_cast %16 : vector<1x3x8xbf16> to vector<3x8xbf16>
    %cst_14 = arith.constant dense<0.000000e+00> : vector<288x8xf32>
    %18 = tpu.matmul %14, %17, %cst_14 {dimension_numbers = #tpu.dot_dimension_numbers<[1], [0], [0], [1], [0, 0, 1, 1], [], []>} : vector<288x3xbf16>, vector<3x8xbf16>, vector<288x8xf32> -> vector<288x8xf32>
    %19 = arith.addf %15, %18 : vector<288x8xf32>
    %c0_15 = arith.constant 0 : index
    %c0_16 = arith.constant 0 : index
    %20 = vector.load %arg7[%c0_15, %c0_16] : memref<288x8xf32, #tpu.memory_space<vmem>>, vector<288x8xf32>
    tpu.vector_store %arg7[%c0_15, %c0_16], %19 {strides = array<i32>} : memref<288x8xf32, #tpu.memory_space<vmem>>, vector<288x8xf32>,
    %21 = vector.extract_strided_slice %4 {offsets = [2, 0], sizes = [288, 3], strides = [1, 1]} : vector<342x3xf32> to vector<288x3xf32>
    %22 = arith.truncf %21 : vector<288x3xf32> to vector<288x3xbf16>
    %c0_17 = arith.constant 0 : index
    %c0_18 = arith.constant 0 : index
    %23 = vector.load %arg7[%c0_17, %c0_18] : memref<288x8xf32, #tpu.memory_space<vmem>>, vector<288x8xf32>
    %c2 = arith.constant 2 : index
    %c0_19 = arith.constant 0 : index
    %c0_20 = arith.constant 0 : index
    %24 = vector.load %arg4[%c2, %c0_19, %c0_20] : memref<9x3x8xbf16, #tpu.memory_space<vmem>>, vector<1x3x8xbf16>
    %25 = vector.shape_cast %24 : vector<1x3x8xbf16> to vector<3x8xbf16>
    %cst_21 = arith.constant dense<0.000000e+00> : vector<288x8xf32>
    %26 = tpu.matmul %22, %25, %cst_21 {dimension_numbers = #tpu.dot_dimension_numbers<[1], [0], [0], [1], [0, 0, 1, 1], [], []>} : vector<288x3xbf16>, vector<3x8xbf16>, vector<288x8xf32> -> vector<288x8xf32>
    %27 = arith.addf %23, %26 : vector<288x8xf32>
    %c0_22 = arith.constant 0 : index
    %c0_23 = arith.constant 0 : index
    %28 = vector.load %arg7[%c0_22, %c0_23] : memref<288x8xf32, #tpu.memory_space<vmem>>, vector<288x8xf32>
    tpu.vector_store %arg7[%c0_22, %c0_23], %27 {strides = array<i32>} : memref<288x8xf32, #tpu.memory_space<vmem>>, vector<288x8xf32>,
    %29 = vector.extract_strided_slice %4 {offsets = [18, 0], sizes = [288, 3], strides = [1, 1]} : vector<342x3xf32> to vector<288x3xf32>
    %30 = arith.truncf %29 : vector<288x3xf32> to vector<288x3xbf16>
    %c0_24 = arith.constant 0 : index
    %c0_25 = arith.constant 0 : index
    %31 = vector.load %arg7[%c0_24, %c0_25] : memref<288x8xf32, #tpu.memory_space<vmem>>, vector<288x8xf32>
    %c3 = arith.constant 3 : index
    %c0_26 = arith.constant 0 : index
    %c0_27 = arith.constant 0 : index
    %32 = vector.load %arg4[%c3, %c0_26, %c0_27] : memref<9x3x8xbf16, #tpu.memory_space<vmem>>, vector<1x3x8xbf16>
    %33 = vector.shape_cast %32 : vector<1x3x8xbf16> to vector<3x8xbf16>
    %cst_28 = arith.constant dense<0.000000e+00> : vector<288x8xf32>
    %34 = tpu.matmul %30, %33, %cst_28 {dimension_numbers = #tpu.dot_dimension_numbers<[1], [0], [0], [1], [0, 0, 1, 1], [], []>} : vector<288x3xbf16>, vector<3x8xbf16>, vector<288x8xf32> -> vector<288x8xf32>
    %35 = arith.addf %31, %34 : vector<288x8xf32>
    %c0_29 = arith.constant 0 : index
    %c0_30 = arith.constant 0 : index
    %36 = vector.load %arg7[%c0_29, %c0_30] : memref<288x8xf32, #tpu.memory_space<vmem>>, vector<288x8xf32>
    tpu.vector_store %arg7[%c0_29, %c0_30], %35 {strides = array<i32>} : memref<288x8xf32, #tpu.memory_space<vmem>>, vector<288x8xf32>,
    %37 = vector.extract_strided_slice %4 {offsets = [19, 0], sizes = [288, 3], strides = [1, 1]} : vector<342x3xf32> to vector<288x3xf32>
    %38 = arith.truncf %37 : vector<288x3xf32> to vector<288x3xbf16>
    %c0_31 = arith.constant 0 : index
    %c0_32 = arith.constant 0 : index
    %39 = vector.load %arg7[%c0_31, %c0_32] : memref<288x8xf32, #tpu.memory_space<vmem>>, vector<288x8xf32>
    %c4 = arith.constant 4 : index
    %c0_33 = arith.constant 0 : index
    %c0_34 = arith.constant 0 : index
    %40 = vector.load %arg4[%c4, %c0_33, %c0_34] : memref<9x3x8xbf16, #tpu.memory_space<vmem>>, vector<1x3x8xbf16>
    %41 = vector.shape_cast %40 : vector<1x3x8xbf16> to vector<3x8xbf16>
    %cst_35 = arith.constant dense<0.000000e+00> : vector<288x8xf32>
    %42 = tpu.matmul %38, %41, %cst_35 {dimension_numbers = #tpu.dot_dimension_numbers<[1], [0], [0], [1], [0, 0, 1, 1], [], []>} : vector<288x3xbf16>, vector<3x8xbf16>, vector<288x8xf32> -> vector<288x8xf32>
    %43 = arith.addf %39, %42 : vector<288x8xf32>
    %c0_36 = arith.constant 0 : index
    %c0_37 = arith.constant 0 : index
    %44 = vector.load %arg7[%c0_36, %c0_37] : memref<288x8xf32, #tpu.memory_space<vmem>>, vector<288x8xf32>
    tpu.vector_store %arg7[%c0_36, %c0_37], %43 {strides = array<i32>} : memref<288x8xf32, #tpu.memory_space<vmem>>, vector<288x8xf32>,
    %45 = vector.extract_strided_slice %4 {offsets = [20, 0], sizes = [288, 3], strides = [1, 1]} : vector<342x3xf32> to vector<288x3xf32>
    %46 = arith.truncf %45 : vector<288x3xf32> to vector<288x3xbf16>
    %c0_38 = arith.constant 0 : index
    %c0_39 = arith.constant 0 : index
    %47 = vector.load %arg7[%c0_38, %c0_39] : memref<288x8xf32, #tpu.memory_space<vmem>>, vector<288x8xf32>
    %c5 = arith.constant 5 : index
    %c0_40 = arith.constant 0 : index
    %c0_41 = arith.constant 0 : index
    %48 = vector.load %arg4[%c5, %c0_40, %c0_41] : memref<9x3x8xbf16, #tpu.memory_space<vmem>>, vector<1x3x8xbf16>
    %49 = vector.shape_cast %48 : vector<1x3x8xbf16> to vector<3x8xbf16>
    %cst_42 = arith.constant dense<0.000000e+00> : vector<288x8xf32>
    %50 = tpu.matmul %46, %49, %cst_42 {dimension_numbers = #tpu.dot_dimension_numbers<[1], [0], [0], [1], [0, 0, 1, 1], [], []>} : vector<288x3xbf16>, vector<3x8xbf16>, vector<288x8xf32> -> vector<288x8xf32>
    %51 = arith.addf %47, %50 : vector<288x8xf32>
    %c0_43 = arith.constant 0 : index
    %c0_44 = arith.constant 0 : index
    %52 = vector.load %arg7[%c0_43, %c0_44] : memref<288x8xf32, #tpu.memory_space<vmem>>, vector<288x8xf32>
    tpu.vector_store %arg7[%c0_43, %c0_44], %51 {strides = array<i32>} : memref<288x8xf32, #tpu.memory_space<vmem>>, vector<288x8xf32>,
    %53 = vector.extract_strided_slice %4 {offsets = [36, 0], sizes = [288, 3], strides = [1, 1]} : vector<342x3xf32> to vector<288x3xf32>
    %54 = arith.truncf %53 : vector<288x3xf32> to vector<288x3xbf16>
    %c0_45 = arith.constant 0 : index
    %c0_46 = arith.constant 0 : index
    %55 = vector.load %arg7[%c0_45, %c0_46] : memref<288x8xf32, #tpu.memory_space<vmem>>, vector<288x8xf32>
    %c6 = arith.constant 6 : index
    %c0_47 = arith.constant 0 : index
    %c0_48 = arith.constant 0 : index
    %56 = vector.load %arg4[%c6, %c0_47, %c0_48] : memref<9x3x8xbf16, #tpu.memory_space<vmem>>, vector<1x3x8xbf16>
    %57 = vector.shape_cast %56 : vector<1x3x8xbf16> to vector<3x8xbf16>
    %cst_49 = arith.constant dense<0.000000e+00> : vector<288x8xf32>
    %58 = tpu.matmul %54, %57, %cst_49 {dimension_numbers = #tpu.dot_dimension_numbers<[1], [0], [0], [1], [0, 0, 1, 1], [], []>} : vector<288x3xbf16>, vector<3x8xbf16>, vector<288x8xf32> -> vector<288x8xf32>
    %59 = arith.addf %55, %58 : vector<288x8xf32>
    %c0_50 = arith.constant 0 : index
    %c0_51 = arith.constant 0 : index
    %60 = vector.load %arg7[%c0_50, %c0_51] : memref<288x8xf32, #tpu.memory_space<vmem>>, vector<288x8xf32>
    tpu.vector_store %arg7[%c0_50, %c0_51], %59 {strides = array<i32>} : memref<288x8xf32, #tpu.memory_space<vmem>>, vector<288x8xf32>,
    %61 = vector.extract_strided_slice %4 {offsets = [37, 0], sizes = [288, 3], strides = [1, 1]} : vector<342x3xf32> to vector<288x3xf32>
    %62 = arith.truncf %61 : vector<288x3xf32> to vector<288x3xbf16>
    %c0_52 = arith.constant 0 : index
    %c0_53 = arith.constant 0 : index
    %63 = vector.load %arg7[%c0_52, %c0_53] : memref<288x8xf32, #tpu.memory_space<vmem>>, vector<288x8xf32>
    %c7 = arith.constant 7 : index
    %c0_54 = arith.constant 0 : index
    %c0_55 = arith.constant 0 : index
    %64 = vector.load %arg4[%c7, %c0_54, %c0_55] : memref<9x3x8xbf16, #tpu.memory_space<vmem>>, vector<1x3x8xbf16>
    %65 = vector.shape_cast %64 : vector<1x3x8xbf16> to vector<3x8xbf16>
    %cst_56 = arith.constant dense<0.000000e+00> : vector<288x8xf32>
    %66 = tpu.matmul %62, %65, %cst_56 {dimension_numbers = #tpu.dot_dimension_numbers<[1], [0], [0], [1], [0, 0, 1, 1], [], []>} : vector<288x3xbf16>, vector<3x8xbf16>, vector<288x8xf32> -> vector<288x8xf32>
    %67 = arith.addf %63, %66 : vector<288x8xf32>
    %c0_57 = arith.constant 0 : index
    %c0_58 = arith.constant 0 : index
    %68 = vector.load %arg7[%c0_57, %c0_58] : memref<288x8xf32, #tpu.memory_space<vmem>>, vector<288x8xf32>
    tpu.vector_store %arg7[%c0_57, %c0_58], %67 {strides = array<i32>} : memref<288x8xf32, #tpu.memory_space<vmem>>, vector<288x8xf32>,
    %69 = vector.extract_strided_slice %4 {offsets = [38, 0], sizes = [288, 3], strides = [1, 1]} : vector<342x3xf32> to vector<288x3xf32>
    %70 = arith.truncf %69 : vector<288x3xf32> to vector<288x3xbf16>
    %c0_59 = arith.constant 0 : index
    %c0_60 = arith.constant 0 : index
    %71 = vector.load %arg7[%c0_59, %c0_60] : memref<288x8xf32, #tpu.memory_space<vmem>>, vector<288x8xf32>
    %c8 = arith.constant 8 : index
    %c0_61 = arith.constant 0 : index
    %c0_62 = arith.constant 0 : index
    %72 = vector.load %arg4[%c8, %c0_61, %c0_62] : memref<9x3x8xbf16, #tpu.memory_space<vmem>>, vector<1x3x8xbf16>
    %73 = vector.shape_cast %72 : vector<1x3x8xbf16> to vector<3x8xbf16>
    %cst_63 = arith.constant dense<0.000000e+00> : vector<288x8xf32>
    %74 = tpu.matmul %70, %73, %cst_63 {dimension_numbers = #tpu.dot_dimension_numbers<[1], [0], [0], [1], [0, 0, 1, 1], [], []>} : vector<288x3xbf16>, vector<3x8xbf16>, vector<288x8xf32> -> vector<288x8xf32>
    %75 = arith.addf %71, %74 : vector<288x8xf32>
    %c0_64 = arith.constant 0 : index
    %c0_65 = arith.constant 0 : index
    %76 = vector.load %arg7[%c0_64, %c0_65] : memref<288x8xf32, #tpu.memory_space<vmem>>, vector<288x8xf32>
    tpu.vector_store %arg7[%c0_64, %c0_65], %75 {strides = array<i32>} : memref<288x8xf32, #tpu.memory_space<vmem>>, vector<288x8xf32>,
    %c0_i32_66 = arith.constant 0 : i32
    %77 = arith.cmpi eq, %arg2, %c0_i32_66 : i32
    %78 = arith.extui %77 : i1 to i32
    %c0_i32_67 = arith.constant 0 : i32
    %79 = arith.cmpi ne, %78, %c0_i32_67 : i32
    scf.if %79 {
      %c0_68 = arith.constant 0 : index
      %c0_69 = arith.constant 0 : index
      %80 = vector.load %arg7[%c0_68, %c0_69] : memref<288x8xf32, #tpu.memory_space<vmem>>, vector<288x8xf32>
      %c0_70 = arith.constant 0 : index
      %c0_71 = arith.constant 0 : index
      %81 = vector.load %arg5[%c0_70, %c0_71] : memref<1x8xf32, #tpu.memory_space<vmem>>, vector<1x8xf32>
      %82 = vector.broadcast %81 : vector<1x8xf32> to vector<288x8xf32>
      %83 = arith.addf %80, %82 : vector<288x8xf32>
      %c0_72 = arith.constant 0 : index
      %c0_73 = arith.constant 0 : index
      %c0_74 = arith.constant 0 : index
      %84 = vector.load %arg6[%c0_72, %c0_73, %c0_74] : memref<1x288x8xf32, #tpu.memory_space<vmem>>, vector<1x288x8xf32>
      %85 = vector.shape_cast %84 : vector<1x288x8xf32> to vector<288x8xf32>
      %86 = vector.shape_cast %83 : vector<288x8xf32> to vector<1x288x8xf32>
      tpu.vector_store %arg6[%c0_72, %c0_73, %c0_74], %86 {strides = array<i32>} : memref<1x288x8xf32, #tpu.memory_space<vmem>>, vector<1x288x8xf32>,
    } else {
    }
    return
  }
  func.func @transform_0(%arg0: i32, %arg1: i32, %arg2: i32) -> (i32, i32, i32) {
    %c0_i32 = arith.constant 0 : i32
    %c0_i32_0 = arith.constant 0 : i32
    return %arg0, %c0_i32, %arg2 : i32, i32, i32
  }
  func.func @transform_1(%arg0: i32, %arg1: i32, %arg2: i32) -> (i32, i32, i32) {
    %c0_i32 = arith.constant 0 : i32
    %c0_i32_0 = arith.constant 0 : i32
    return %c0_i32, %arg2, %arg1 : i32, i32, i32
  }
  func.func @transform_2(%arg0: i32, %arg1: i32, %arg2: i32) -> (i32, i32) {
    %c0_i32 = arith.constant 0 : i32
    %c0_i32_0 = arith.constant 0 : i32
    return %c0_i32, %arg1 : i32, i32
  }
  func.func @transform_3(%arg0: i32, %arg1: i32, %arg2: i32) -> (i32, i32, i32) {
    %c0_i32 = arith.constant 0 : i32
    %c0_i32_0 = arith.constant 0 : i32
    return %arg0, %c0_i32, %arg1 : i32, i32, i32
  }
}

</mosaic_0001>

<llo_original>
// kernel: tpu_custom_call.1
$region0: #{tpu_custom_call.1}
  #allocation0 [shape = 'u32[]', space=smem, size = 0x4, offset = 0x4, fixed_abs, tag = 'smem constant byte address 0x4 - core index']
  #allocation1 [shape = 'u32[144,128]{1,0:T(1,128)}', space=vmem, size = 0x12000, scoped, tag = 'internal scratch']
  #allocation2 [shape = 'f32[288,8]{1,0:T(8,128)}', space=vmem, size = 0x24000, scoped, tag = 'scratch operand']
  %s0 = inlined_call_operand.vmem [shape: f32[2,342,3], index: 0, kind: input, shape index: {}]
  %s1 = inlined_call_operand.vmem [shape: bf16[9,3,8], index: 1, kind: input, shape index: {}]
  %s2 = inlined_call_operand.vmem [shape: f32[1,8], index: 2, kind: input, shape index: {}]
  %s3 = inlined_call_operand.vmem [shape: f32[2,288,8], index: 3, kind: output, shape index: {}]
  %s4 = sld [smem:[#allocation0]]
  $region53: #{tpu_custom_call.1} parent=0
    _
  %s6 = ssub.s32 1, %s4
  %s7 = scalar_select 0, %s6, %s4
  loop: start=0, step=1, limit=4
  $region2: #{tpu_custom_call.1} parent=0 // loop_pre_header
    _
  $region3: #{tpu_custom_call.1} parent=0 // loop_header
    %s9 = sphi 0, %s13
    %p10 = scmp.ge.s32.totalorder %s9, 4
    %s16 = sphi 0, %s35
    %s17 = sphi 0, %s31
    %s18 = sphi 0, %s27
    %s19 = sphi 0, %s16
    %s20 = sphi 0, %s17
    %s21 = sphi 0, %s18
    %s22 = sphi 0, %s19
    %s23 = sphi 0, %s20
    %s24 = sphi 0, %s21
    %s40 = sphi 0, %s42
    %s43 = sphi 0, %s40
    %s44 = sphi 0, %s43
    %s60 = sphi 0, %s44
    %s68 = sphi 0, %s70
    %s71 = sphi 0, %s68
    %s72 = sphi 0, %s71
    %s88 = sphi 0, %s72
    %s94 = sphi 0, %s96
    %s97 = sphi 0, %s94
    %s98 = sphi 0, %s97
    %s114 = sphi 0, %s98
    %s122 = sphi 0, %s124
    %s125 = sphi 0, %s122
    %s126 = sphi 0, %s125
    %s142 = sphi 0, %s126
  $region4: #{tpu_custom_call.1} parent=0 // loop_header_branch
    %12 = sbr.rel (%p10) target = $region8
  $region5: #{tpu_custom_call.1} parent=0 // loop_body
    %s14 = ssub.s32 %s9, 1
    %s15 = ssub.s32 %s9, 2
    %s25 = sadd.s32 1, %s18
    %p26 = scmp.ge.s32.totalorder %s25, 1
    %s27 = scalar_select %p26, 0, %s25
    %s28 = sadd.s32 1, %s17
    %s29 = scalar_select %p26, %s28, %s17
    %p30 = scmp.ge.s32.totalorder %s29, 1
    %s31 = scalar_select %p30, 0, %s29
    %s32 = sadd.s32 1, %s16
    %s33 = scalar_select %p30, %s32, %s16
    %p34 = scmp.ge.s32.totalorder %s33, 2
    %s35 = scalar_select %p34, 0, %s33
    %s36 = ssub.s32 %s16, %s35
    %s37 = ssub.s32 %s18, %s27
    %s38 = sor.u32 %s36, %s37
    %p39 = scmp.eq.s32.totalorder %s38, 0
    %s41 = sadd.s32 %s40, 1
    %s42 = scalar_select %p39, %s40, %s41
    %p45 = pneg %p39
    %p46 = scmp.eq.s32.totalorder %s9, 1
    %p47 = por %p45, %p46
    %p48 = scmp.ne.s32.totalorder %s40, %s43
    %p49 = scmp.eq.s32.totalorder %s9, 0
    %p50 = por %p48, %p49
    %p51 = scmp.ne.s32.totalorder %s40, %s43
    %p52 = scmp.eq.s32.totalorder %s14, 1
    %p53 = por %p51, %p52
    %p54 = scmp.ne.s32.totalorder %s43, %s44
    %p55 = scmp.eq.s32.totalorder %s14, 0
    %p56 = por %p54, %p55
    %p57 = scmp.ne.s32.totalorder %s43, %s44
    %p58 = scmp.eq.s32.totalorder %s15, 1
    %p59 = por %p57, %p58
    %p61 = scmp.ne.s32.totalorder %s44, %s60
    %p62 = scmp.eq.s32.totalorder %s15, 0
    %p63 = por %p61, %p62
    %s64 = ssub.s32 %s18, %s27
    %s65 = ssub.s32 %s17, %s31
    %s66 = sor.u32 %s64, %s65
    %p67 = scmp.eq.s32.totalorder %s66, 0
    %s69 = sadd.s32 %s68, 1
    %s70 = scalar_select %p67, %s68, %s69
    %p73 = pneg %p67
    %p74 = scmp.eq.s32.totalorder %s9, 1
    %p75 = por %p73, %p74
    %p76 = scmp.ne.s32.totalorder %s68, %s71
    %p77 = scmp.eq.s32.totalorder %s9, 0
    %p78 = por %p76, %p77
    %p79 = scmp.ne.s32.totalorder %s68, %s71
    %p80 = scmp.eq.s32.totalorder %s14, 1
    %p81 = por %p79, %p80
    %p82 = scmp.ne.s32.totalorder %s71, %s72
    %p83 = scmp.eq.s32.totalorder %s14, 0
    %p84 = por %p82, %p83
    %p85 = scmp.ne.s32.totalorder %s71, %s72
    %p86 = scmp.eq.s32.totalorder %s15, 1
    %p87 = por %p85, %p86
    %p89 = scmp.ne.s32.totalorder %s72, %s88
    %p90 = scmp.eq.s32.totalorder %s15, 0
    %p91 = por %p89, %p90
    %s92 = ssub.s32 %s17, %s31
    %p93 = scmp.eq.s32.totalorder %s92, 0
    %s95 = sadd.s32 %s94, 1
    %s96 = scalar_select %p93, %s94, %s95
    %p99 = pneg %p93
    %p100 = scmp.eq.s32.totalorder %s9, 1
    %p101 = por %p99, %p100
    %p102 = scmp.ne.s32.totalorder %s94, %s97
    %p103 = scmp.eq.s32.totalorder %s9, 0
    %p104 = por %p102, %p103
    %p105 = scmp.ne.s32.totalorder %s94, %s97
    %p106 = scmp.eq.s32.totalorder %s14, 1
    %p107 = por %p105, %p106
    %p108 = scmp.ne.s32.totalorder %s97, %s98
    %p109 = scmp.eq.s32.totalorder %s14, 0
    %p110 = por %p108, %p109
    %p111 = scmp.ne.s32.totalorder %s97, %s98
    %p112 = scmp.eq.s32.totalorder %s15, 1
    %p113 = por %p111, %p112
    %p115 = scmp.ne.s32.totalorder %s98, %s114
    %p116 = scmp.eq.s32.totalorder %s15, 0
    %p117 = por %p115, %p116
    %s118 = ssub.s32 %s16, %s35
    %s119 = ssub.s32 %s17, %s31
    %s120 = sor.u32 %s118, %s119
    %p121 = scmp.eq.s32.totalorder %s120, 0
    %s123 = sadd.s32 %s122, 1
    %s124 = scalar_select %p121, %s122, %s123
    %p127 = pneg %p121
    %p128 = scmp.eq.s32.totalorder %s9, 1
    %p129 = por %p127, %p128
    %p130 = scmp.ne.s32.totalorder %s122, %s125
    %p131 = scmp.eq.s32.totalorder %s9, 0
    %p132 = por %p130, %p131
    %p133 = scmp.ne.s32.totalorder %s122, %s125
    %p134 = scmp.eq.s32.totalorder %s14, 1
    %p135 = por %p133, %p134
    %p136 = scmp.ne.s32.totalorder %s125, %s126
    %p137 = scmp.eq.s32.totalorder %s14, 0
    %p138 = por %p136, %p137
    %p139 = scmp.ne.s32.totalorder %s125, %s126
    %p140 = scmp.eq.s32.totalorder %s15, 1
    %p141 = por %p139, %p140
    %p143 = scmp.ne.s32.totalorder %s126, %s142
    %p144 = scmp.eq.s32.totalorder %s15, 0
    %p145 = por %p143, %p144
    %p146 = scmp.le.s32.totalorder 1, %s9
    %p147 = scmp.lt.s32.totalorder %s9, 3
    %p148 = pnand %p146, %p147
    %p149 = pneg %p148
    // Predicated region
    $region9: #{tpu_custom_call.1} parent=5 // pred_check
      _
    $region10: #{tpu_custom_call.1} parent=5 // pred_check_branch
      %151 = sbr.rel (%p148) target = $region12
    $region11: #{tpu_custom_call.1} parent=5 // pred_region
      %s152 = ssub.s32 %s9, 1
      // Predicated region
      $region13: #{tpu_custom_call.1} parent=11 // pred_check
        %p153 = pneg %p84
      $region14: #{tpu_custom_call.1} parent=11 // pred_check_branch
        %155 = sbr.rel (%p153) target = $region16
      $region15: #{tpu_custom_call.1} parent=11 // pred_region
        %p156 = scmp.lt.s32.totalorder %s21, 0
        %s157 = scalar_select %p156, %s21, 0
        %p158 = scmp.lt.s32.totalorder %s20, 0
        %s159 = scalar_select %p158, %s20, 0
        %s160 = sadd.s32 %s159, %s157
        %s161 = smul.addr %s160, 2
        %s162 = scalar_lea.vmem %s1, %s161
      $region16: #{tpu_custom_call.1} parent=11 // pred_fallthru
        _
      // Predicated region
      $region17: #{tpu_custom_call.1} parent=11 // pred_check
        %p163 = pneg %p110
      $region18: #{tpu_custom_call.1} parent=11 // pred_check_branch
        %165 = sbr.rel (%p163) target = $region20
      $region19: #{tpu_custom_call.1} parent=11 // pred_region
        %p166 = scmp.lt.s32.totalorder %s20, 0
        %s167 = scalar_select %p166, %s20, 0
        %s168 = scalar_lea.vmem %s2, %s167
      $region20: #{tpu_custom_call.1} parent=11 // pred_fallthru
        _
    $region12: #{tpu_custom_call.1} parent=5 // pred_fallthru
      _
    %p169 = scmp.lt.s32.totalorder %s9, 2
    // Predicated region
    $region21: #{tpu_custom_call.1} parent=5 // pred_check
      %p170 = pneg %p169
    $region22: #{tpu_custom_call.1} parent=5 // pred_check_branch
      %172 = sbr.rel (%p170) target = $region24
    $region23: #{tpu_custom_call.1} parent=5 // pred_region
      // Predicated region
      $region25: #{tpu_custom_call.1} parent=23 // pred_check
        %p173 = pneg %p50
      $region26: #{tpu_custom_call.1} parent=23 // pred_check_branch
        %175 = sbr.rel (%p173) target = $region28
      $region27: #{tpu_custom_call.1} parent=23 // pred_region
        %p176 = scmp.lt.s32.totalorder %s16, 1
        %s177 = scalar_select %p176, %s16, 1
        %p178 = scmp.lt.s32.totalorder %s18, 0
        %s179 = scalar_select %p178, %s18, 0
        %s180 = smul.addr %s177, 43
        %s181 = sadd.s32 %s179, %s180
        %s182 = smul.addr %s181, 8
        %s183 = scalar_lea.vmem %s0, %s182
      $region28: #{tpu_custom_call.1} parent=23 // pred_fallthru
        _
    $region24: #{tpu_custom_call.1} parent=5 // pred_fallthru
      _
    %p184 = scmp.le.s32.totalorder 1, %s9
    %p185 = scmp.lt.s32.totalorder %s9, 3
    %p186 = pnand %p184, %p185
    %p187 = pneg %p186
    // Predicated region
    $region29: #{tpu_custom_call.1} parent=5 // pred_check
      _
    $region30: #{tpu_custom_call.1} parent=5 // pred_check_branch
      %189 = sbr.rel (%p186) target = $region32
    $region31: #{tpu_custom_call.1} parent=5 // pred_region
      %s190 = ssub.s32 %s9, 1
      %p191 = scmp.lt.s32.totalorder %s19, 1
      %s192 = scalar_select %p191, %s19, 1
      %p193 = scmp.lt.s32.totalorder %s21, 0
      %s194 = scalar_select %p193, %s21, 0
      %s195 = smul.addr %s192, 43
      %s196 = sadd.s32 %s194, %s195
      %s197 = smul.addr %s196, 8
      %s198 = scalar_lea.vmem %s0, %s197
      %p199 = pneg %p56
      %p200 = pneg %p53
      %p201 = scmp.lt.s32.totalorder %s21, 0
      %s202 = scalar_select %p201, %s21, 0
      %p203 = scmp.lt.s32.totalorder %s20, 0
      %s204 = scalar_select %p203, %s20, 0
      %s205 = sadd.s32 %s204, %s202
      %s206 = smul.addr %s205, 2
      %s207 = scalar_lea.vmem %s1, %s206
      %p208 = pneg %p84
      %p209 = pneg %p81
      %p210 = scmp.lt.s32.totalorder %s20, 0
      %s211 = scalar_select %p210, %s20, 0
      %s212 = scalar_lea.vmem %s2, %s211
      %p213 = pneg %p110
      %p214 = pneg %p107
      %p215 = pneg %p138
      %p216 = pneg %p135
      %p217 = scmp.lt.s32.totalorder %s19, 1
      %s218 = scalar_select %p217, %s19, 1
      %p219 = scmp.lt.s32.totalorder %s20, 0
      %s220 = scalar_select %p219, %s20, 0
      %s221 = smul.addr %s218, 36
      %s222 = sadd.s32 %s220, %s221
      %s223 = smul.addr %s222, 8
      %s224 = scalar_lea.vmem %s3, %s223
      %p225 = scmp.lt.s32.totalorder %s19, 1
      %s226 = scalar_select %p225, %s19, 1
      %p227 = scmp.lt.s32.totalorder %s21, 0
      %s228 = scalar_select %p227, %s21, 0
      %s229 = smul.addr %s226, 43
      %s230 = sadd.s32 %s228, %s229
      %s231 = smul.addr %s230, 8
      %s232 = scalar_lea.vmem %s0, %s231
      %p233 = scmp.lt.s32.totalorder %s21, 0
      %s234 = scalar_select %p233, %s21, 0
      %p235 = scmp.lt.s32.totalorder %s20, 0
      %s236 = scalar_select %p235, %s20, 0
      %s237 = sadd.s32 %s236, %s234
      %s238 = smul.addr %s237, 2
      %s239 = scalar_lea.vmem %s1, %s238
      %p240 = scmp.lt.s32.totalorder %s20, 0
      %s241 = scalar_select %p240, %s20, 0
      %s242 = scalar_lea.vmem %s2, %s241
      %p243 = scmp.lt.s32.totalorder %s19, 1
      %s244 = scalar_select %p243, %s19, 1
      %p245 = scmp.lt.s32.totalorder %s20, 0
      %s246 = scalar_select %p245, %s20, 0
      %s247 = smul.addr %s244, 36
      %s248 = sadd.s32 %s246, %s247
      %s249 = smul.addr %s248, 8
      %s250 = scalar_lea.vmem %s3, %s249
      %p252 = scmp.eq.s32.totalorder %s21, 0
      // Predicated region
      $region33: #{tpu_custom_call.1} parent=31 // pred_check
        %p253 = pneg %p252
      $region34: #{tpu_custom_call.1} parent=31 // pred_check_branch
        %255 = sbr.rel (%p253) target = $region36
      $region35: #{tpu_custom_call.1} parent=31 // pred_region
        %vm256 = vcmask 64512
        %257 = vst.msk [vmem:[#allocation2] sm:$0xff] %vm256, 0.0
        %258 = vst.msk [vmem:[#allocation2 + $0x8] sm:$0xff] %vm256, 0.0
        %259 = vst.msk [vmem:[#allocation2 + $0x10] sm:$0xff] %vm256, 0.0
        %260 = vst.msk [vmem:[#allocation2 + $0x18] sm:$0xff] %vm256, 0.0
        %261 = vst.msk [vmem:[#allocation2 + $0x20] sm:$0xff] %vm256, 0.0
        %262 = vst.msk [vmem:[#allocation2 + $0x28] sm:$0xff] %vm256, 0.0
        %263 = vst.msk [vmem:[#allocation2 + $0x30] sm:$0xff] %vm256, 0.0
        %264 = vst.msk [vmem:[#allocation2 + $0x38] sm:$0xff] %vm256, 0.0
        %265 = vst.msk [vmem:[#allocation2 + $0x40] sm:$0xff] %vm256, 0.0
        %266 = vst.msk [vmem:[#allocation2 + $0x48] sm:$0xff] %vm256, 0.0
        %267 = vst.msk [vmem:[#allocation2 + $0x50] sm:$0xff] %vm256, 0.0
        %268 = vst.msk [vmem:[#allocation2 + $0x58] sm:$0xff] %vm256, 0.0
        %269 = vst.msk [vmem:[#allocation2 + $0x60] sm:$0xff] %vm256, 0.0
        %270 = vst.msk [vmem:[#allocation2 + $0x68] sm:$0xff] %vm256, 0.0
        %271 = vst.msk [vmem:[#allocation2 + $0x70] sm:$0xff] %vm256, 0.0
        %272 = vst.msk [vmem:[#allocation2 + $0x78] sm:$0xff] %vm256, 0.0
        %273 = vst.msk [vmem:[#allocation2 + $0x80] sm:$0xff] %vm256, 0.0
        %274 = vst.msk [vmem:[#allocation2 + $0x88] sm:$0xff] %vm256, 0.0
        %275 = vst.msk [vmem:[#allocation2 + $0x90] sm:$0xff] %vm256, 0.0
        %276 = vst.msk [vmem:[#allocation2 + $0x98] sm:$0xff] %vm256, 0.0
        %277 = vst.msk [vmem:[#allocation2 + $0xa0] sm:$0xff] %vm256, 0.0
        %278 = vst.msk [vmem:[#allocation2 + $0xa8] sm:$0xff] %vm256, 0.0
        %279 = vst.msk [vmem:[#allocation2 + $0xb0] sm:$0xff] %vm256, 0.0
        %280 = vst.msk [vmem:[#allocation2 + $0xb8] sm:$0xff] %vm256, 0.0
        %281 = vst.msk [vmem:[#allocation2 + $0xc0] sm:$0xff] %vm256, 0.0
        %282 = vst.msk [vmem:[#allocation2 + $0xc8] sm:$0xff] %vm256, 0.0
        %283 = vst.msk [vmem:[#allocation2 + $0xd0] sm:$0xff] %vm256, 0.0
        %284 = vst.msk [vmem:[#allocation2 + $0xd8] sm:$0xff] %vm256, 0.0
        %285 = vst.msk [vmem:[#allocation2 + $0xe0] sm:$0xff] %vm256, 0.0
        %286 = vst.msk [vmem:[#allocation2 + $0xe8] sm:$0xff] %vm256, 0.0
        %287 = vst.msk [vmem:[#allocation2 + $0xf0] sm:$0xff] %vm256, 0.0
        %288 = vst.msk [vmem:[#allocation2 + $0xf8] sm:$0xff] %vm256, 0.0
        %289 = vst.msk [vmem:[#allocation2 + $0x100] sm:$0xff] %vm256, 0.0
        %290 = vst.msk [vmem:[#allocation2 + $0x108] sm:$0xff] %vm256, 0.0
        %291 = vst.msk [vmem:[#allocation2 + $0x110] sm:$0xff] %vm256, 0.0
        %292 = vst.msk [vmem:[#allocation2 + $0x118] sm:$0xff] %vm256, 0.0
      $region36: #{tpu_custom_call.1} parent=31 // pred_fallthru
        _
      %v293 = vld [vmem:[%s232] sm:$0xff]
      %v294 = vld [vmem:[%s232 + $0x8] sm:$0xff]
      %v295 = vld [vmem:[%s232 + $0x10] sm:$0xff]
      %v296 = vld [vmem:[%s232 + $0x18] sm:$0xff]
      %v297 = vld [vmem:[%s232 + $0x20] sm:$0xff]
      %v298 = vld [vmem:[%s232 + $0x28] sm:$0xff]
      %v299 = vld [vmem:[%s232 + $0x30] sm:$0xff]
      %v300 = vld [vmem:[%s232 + $0x38] sm:$0xff]
      %v301 = vld [vmem:[%s232 + $0x40] sm:$0xff]
      %v302 = vld [vmem:[%s232 + $0x48] sm:$0xff]
      %v303 = vld [vmem:[%s232 + $0x50] sm:$0xff]
      %v304 = vld [vmem:[%s232 + $0x58] sm:$0xff]
      %v305 = vld [vmem:[%s232 + $0x60] sm:$0xff]
      %v306 = vld [vmem:[%s232 + $0x68] sm:$0xff]
      %v307 = vld [vmem:[%s232 + $0x70] sm:$0xff]
      %v308 = vld [vmem:[%s232 + $0x78] sm:$0xff]
      %v309 = vld [vmem:[%s232 + $0x80] sm:$0xff]
      %v310 = vld [vmem:[%s232 + $0x88] sm:$0xff]
      %v311 = vld [vmem:[%s232 + $0x90] sm:$0xff]
      %v312 = vld [vmem:[%s232 + $0x98] sm:$0xff]
      %v313 = vld [vmem:[%s232 + $0xa0] sm:$0xff]
      %v314 = vld [vmem:[%s232 + $0xa8] sm:$0xff]
      %v315 = vld [vmem:[%s232 + $0xb0] sm:$0xff]
      %v316 = vld [vmem:[%s232 + $0xb8] sm:$0xff]
      %v317 = vld [vmem:[%s232 + $0xc0] sm:$0xff]
      %v318 = vld [vmem:[%s232 + $0xc8] sm:$0xff]
      %v319 = vld [vmem:[%s232 + $0xd0] sm:$0xff]
      %v320 = vld [vmem:[%s232 + $0xd8] sm:$0xff]
      %v321 = vld [vmem:[%s232 + $0xe0] sm:$0xff]
      %v322 = vld [vmem:[%s232 + $0xe8] sm:$0xff]
      %v323 = vld [vmem:[%s232 + $0xf0] sm:$0xff]
      %v324 = vld [vmem:[%s232 + $0xf8] sm:$0xff]
      %v325 = vld [vmem:[%s232 + $0x100] sm:$0xff]
      %v326 = vld [vmem:[%s232 + $0x108] sm:$0xff]
      %v327 = vld [vmem:[%s232 + $0x110] sm:$0xff]
      %v328 = vld [vmem:[%s232 + $0x118] sm:$0xff]
      %v329 = vld [vmem:[%s232 + $0x120] sm:$0xff]
      %v330 = vld [vmem:[%s232 + $0x128] sm:$0xff]
      %v331 = vld [vmem:[%s232 + $0x130] sm:$0xff]
      %v332 = vld [vmem:[%s232 + $0x138] sm:$0xff]
      %v333 = vld [vmem:[%s232 + $0x140] sm:$0xff]
      %v334 = vpack.c.bf16 %v294, %v293
      %v335 = vpack.c.bf16 %v296, %v295
      %v336 = vpack.c.bf16 %v298, %v297
      %v337 = vpack.c.bf16 %v300, %v299
      %v338 = vpack.c.bf16 %v302, %v301
      %v339 = vpack.c.bf16 %v304, %v303
      %v340 = vpack.c.bf16 %v306, %v305
      %v341 = vpack.c.bf16 %v308, %v307
      %v342 = vpack.c.bf16 %v310, %v309
      %v343 = vpack.c.bf16 %v312, %v311
      %v344 = vpack.c.bf16 %v314, %v313
      %v345 = vpack.c.bf16 %v316, %v315
      %v346 = vpack.c.bf16 %v318, %v317
      %v347 = vpack.c.bf16 %v320, %v319
      %v348 = vpack.c.bf16 %v322, %v321
      %v349 = vpack.c.bf16 %v324, %v323
      %v350 = vpack.c.bf16 %v326, %v325
      %v351 = vpack.c.bf16 %v328, %v327
      %v352 = vld [vmem:[#allocation2] sm:$0xff]
      %v353 = vld [vmem:[#allocation2 + $0x8] sm:$0xff]
      %v354 = vld [vmem:[#allocation2 + $0x10] sm:$0xff]
      %v355 = vld [vmem:[#allocation2 + $0x18] sm:$0xff]
      %v356 = vld [vmem:[#allocation2 + $0x20] sm:$0xff]
      %v357 = vld [vmem:[#allocation2 + $0x28] sm:$0xff]
      %v358 = vld [vmem:[#allocation2 + $0x30] sm:$0xff]
      %v359 = vld [vmem:[#allocation2 + $0x38] sm:$0xff]
      %v360 = vld [vmem:[#allocation2 + $0x40] sm:$0xff]
      %v361 = vld [vmem:[#allocation2 + $0x48] sm:$0xff]
      %v362 = vld [vmem:[#allocation2 + $0x50] sm:$0xff]
      %v363 = vld [vmem:[#allocation2 + $0x58] sm:$0xff]
      %v364 = vld [vmem:[#allocation2 + $0x60] sm:$0xff]
      %v365 = vld [vmem:[#allocation2 + $0x68] sm:$0xff]
      %v366 = vld [vmem:[#allocation2 + $0x70] sm:$0xff]
      %v367 = vld [vmem:[#allocation2 + $0x78] sm:$0xff]
      %v368 = vld [vmem:[#allocation2 + $0x80] sm:$0xff]
      %v369 = vld [vmem:[#allocation2 + $0x88] sm:$0xff]
      %v370 = vld [vmem:[#allocation2 + $0x90] sm:$0xff]
      %v371 = vld [vmem:[#allocation2 + $0x98] sm:$0xff]
      %v372 = vld [vmem:[#allocation2 + $0xa0] sm:$0xff]
      %v373 = vld [vmem:[#allocation2 + $0xa8] sm:$0xff]
      %v374 = vld [vmem:[#allocation2 + $0xb0] sm:$0xff]
      %v375 = vld [vmem:[#allocation2 + $0xb8] sm:$0xff]
      %v376 = vld [vmem:[#allocation2 + $0xc0] sm:$0xff]
      %v377 = vld [vmem:[#allocation2 + $0xc8] sm:$0xff]
      %v378 = vld [vmem:[#allocation2 + $0xd0] sm:$0xff]
      %v379 = vld [vmem:[#allocation2 + $0xd8] sm:$0xff]
      %v380 = vld [vmem:[#allocation2 + $0xe0] sm:$0xff]
      %v381 = vld [vmem:[#allocation2 + $0xe8] sm:$0xff]
      %v382 = vld [vmem:[#allocation2 + $0xf0] sm:$0xff]
      %v383 = vld [vmem:[#allocation2 + $0xf8] sm:$0xff]
      %v384 = vld [vmem:[#allocation2 + $0x100] sm:$0xff]
      %v385 = vld [vmem:[#allocation2 + $0x108] sm:$0xff]
      %v386 = vld [vmem:[#allocation2 + $0x110] sm:$0xff]
      %v387 = vld [vmem:[#allocation2 + $0x118] sm:$0xff]
      %v388 = vld [vmem:[%s239] sm:$0x3]
      %vm389 = vcmask 23552
      %v391 = vsel %vm389, %v334, 0
      %v394 = vsel %vm389, %v335, 0
      %v397 = vsel %vm389, %v336, 0
      %v400 = vsel %vm389, %v337, 0
      %v403 = vsel %vm389, %v338, 0
      %v406 = vsel %vm389, %v339, 0
      %v409 = vsel %vm389, %v340, 0
      %v412 = vsel %vm389, %v341, 0
      %v415 = vsel %vm389, %v342, 0
      %v418 = vsel %vm389, %v343, 0
      %v421 = vsel %vm389, %v344, 0
      %v424 = vsel %vm389, %v345, 0
      %v427 = vsel %vm389, %v346, 0
      %v430 = vsel %vm389, %v347, 0
      %v433 = vsel %vm389, %v348, 0
      %v436 = vsel %vm389, %v349, 0
      %v439 = vsel %vm389, %v350, 0
      %v442 = vsel %vm389, %v351, 0
      %vm444 = vcmask 1040384
      %vm445 = vcmask 1041408
      %v446 = vsel %vm444, 4294967295, 65535
      %v447 = vsel %vm445, %v446, 0
      %v449 = vand.u32 %v388, %v447
      %451 = vmatprep.subr.bf16.mxu0 0
      %452 = vmatpush1.bf16.msra.mxu0 0
      %453 = vmatprep.subr.bf16.mxu0 0
      %454 = vmatpush1.bf16.msra.mxu0 0
      %455 = vmatprep.subr.bf16.mxu0 0
      %456 = vmatpush1.bf16.msra.mxu0 0
      %457 = vmatprep.subr.bf16.mxu0 0
      %458 = vmatpush1.bf16.msra.mxu0 0
      %459 = vmatprep.subr.bf16.mxu0 0
      %460 = vmatpush1.bf16.msra.mxu0 0
      %461 = vmatprep.subr.bf16.mxu0 0
      %462 = vmatpush1.bf16.msra.mxu0 0
      %463 = vmatprep.subr.bf16.mxu0 0
      %464 = vmatpush1.bf16.msra.mxu0 0
      %465 = vmatprep.subr.bf16.mxu0 0
      %466 = vmatpush1.bf16.msra.mxu0 %v449
      %467 = vmatprep.subr.bf16.mxu0 0
      %468 = vmatpush2.bf16.msra.mxu0 0
      %469 = vmatprep.subr.bf16.mxu0 0
      %470 = vmatpush2.bf16.msra.mxu0 0
      %471 = vmatprep.subr.bf16.mxu0 0
      %472 = vmatpush2.bf16.msra.mxu0 0
      %473 = vmatprep.subr.bf16.mxu0 0
      %474 = vmatpush2.bf16.msra.mxu0 0
      %475 = vmatprep.subr.bf16.mxu0 0
      %476 = vmatpush2.bf16.msra.mxu0 0
      %477 = vmatprep.subr.bf16.mxu0 0
      %478 = vmatpush2.bf16.msra.mxu0 0
      %479 = vmatprep.subr.bf16.mxu0 0
      %480 = vmatpush2.bf16.msra.mxu0 0
      %481 = vmatprep.subr.bf16.mxu0 0
      %482 = vmatpush2.bf16.msra.mxu0 0
      %483 = vmatprep.mubr.bf16.mxu0 0
      %484 = vmatmul.mubr.bf16.gmra.mxu0 %v391
      %v485 = vpop.f32.mrf.mxu0
      %v486 = vadd.f32 0.0, %v485
      %v487 = vpop.f32.mrf.mxu0
      %v488 = vpop.f32.mrf.mxu0
      %v489 = vadd.f32 0.0, %v488
      %v490 = vpop.f32.mrf.mxu0
      %491 = vmatprep.mubr.bf16.mxu0 0
      %492 = vmatmul.mubr.bf16.gmra.mxu0 %v394
      %v493 = vpop.f32.mrf.mxu0
      %v494 = vadd.f32 0.0, %v493
      %v495 = vpop.f32.mrf.mxu0
      %v496 = vpop.f32.mrf.mxu0
      %v497 = vadd.f32 0.0, %v496
      %v498 = vpop.f32.mrf.mxu0
      %499 = vmatprep.mubr.bf16.mxu0 0
      %500 = vmatmul.mubr.bf16.gmra.mxu0 %v397
      %v501 = vpop.f32.mrf.mxu0
      %v502 = vadd.f32 0.0, %v501
      %v503 = vpop.f32.mrf.mxu0
      %v504 = vpop.f32.mrf.mxu0
      %v505 = vadd.f32 0.0, %v504
      %v506 = vpop.f32.mrf.mxu0
      %507 = vmatprep.mubr.bf16.mxu0 0
      %508 = vmatmul.mubr.bf16.gmra.mxu0 %v400
      %v509 = vpop.f32.mrf.mxu0
      %v510 = vadd.f32 0.0, %v509
      %v511 = vpop.f32.mrf.mxu0
      %v512 = vpop.f32.mrf.mxu0
      %v513 = vadd.f32 0.0, %v512
      %v514 = vpop.f32.mrf.mxu0
      %515 = vmatprep.mubr.bf16.mxu0 0
      %516 = vmatmul.mubr.bf16.gmra.mxu0 %v403
      %v517 = vpop.f32.mrf.mxu0
      %v518 = vadd.f32 0.0, %v517
      %v519 = vpop.f32.mrf.mxu0
      %v520 = vpop.f32.mrf.mxu0
      %v521 = vadd.f32 0.0, %v520
      %v522 = vpop.f32.mrf.mxu0
      %523 = vmatprep.mubr.bf16.mxu0 0
      %524 = vmatmul.mubr.bf16.gmra.mxu0 %v406
      %v525 = vpop.f32.mrf.mxu0
      %v526 = vadd.f32 0.0, %v525
      %v527 = vpop.f32.mrf.mxu0
      %v528 = vpop.f32.mrf.mxu0
      %v529 = vadd.f32 0.0, %v528
      %v530 = vpop.f32.mrf.mxu0
      %531 = vmatprep.mubr.bf16.mxu0 0
      %532 = vmatmul.mubr.bf16.gmra.mxu0 %v409
      %v533 = vpop.f32.mrf.mxu0
      %v534 = vadd.f32 0.0, %v533
      %v535 = vpop.f32.mrf.mxu0
      %v536 = vpop.f32.mrf.mxu0
      %v537 = vadd.f32 0.0, %v536
      %v538 = vpop.f32.mrf.mxu0
      %539 = vmatprep.mubr.bf16.mxu0 0
      %540 = vmatmul.mubr.bf16.gmra.mxu0 %v412
      %v541 = vpop.f32.mrf.mxu0
      %v542 = vadd.f32 0.0, %v541
      %v543 = vpop.f32.mrf.mxu0
      %v544 = vpop.f32.mrf.mxu0
      %v545 = vadd.f32 0.0, %v544
      %v546 = vpop.f32.mrf.mxu0
      %547 = vmatprep.mubr.bf16.mxu0 0
      %548 = vmatmul.mubr.bf16.gmra.mxu0 %v415
      %v549 = vpop.f32.mrf.mxu0
      %v550 = vadd.f32 0.0, %v549
      %v551 = vpop.f32.mrf.mxu0
      %v552 = vpop.f32.mrf.mxu0
      %v553 = vadd.f32 0.0, %v552
      %v554 = vpop.f32.mrf.mxu0
      %555 = vmatprep.mubr.bf16.mxu0 0
      %556 = vmatmul.mubr.bf16.gmra.mxu0 %v418
      %v557 = vpop.f32.mrf.mxu0
      %v558 = vadd.f32 0.0, %v557
      %v559 = vpop.f32.mrf.mxu0
      %v560 = vpop.f32.mrf.mxu0
      %v561 = vadd.f32 0.0, %v560
      %v562 = vpop.f32.mrf.mxu0
      %563 = vmatprep.mubr.bf16.mxu0 0
      %564 = vmatmul.mubr.bf16.gmra.mxu0 %v421
      %v565 = vpop.f32.mrf.mxu0
      %v566 = vadd.f32 0.0, %v565
      %v567 = vpop.f32.mrf.mxu0
      %v568 = vpop.f32.mrf.mxu0
      %v569 = vadd.f32 0.0, %v568
      %v570 = vpop.f32.mrf.mxu0
      %571 = vmatprep.mubr.bf16.mxu0 0
      %572 = vmatmul.mubr.bf16.gmra.mxu0 %v424
      %v573 = vpop.f32.mrf.mxu0
      %v574 = vadd.f32 0.0, %v573
      %v575 = vpop.f32.mrf.mxu0
      %v576 = vpop.f32.mrf.mxu0
      %v577 = vadd.f32 0.0, %v576
      %v578 = vpop.f32.mrf.mxu0
      %579 = vmatprep.mubr.bf16.mxu0 0
      %580 = vmatmul.mubr.bf16.gmra.mxu0 %v427
      %v581 = vpop.f32.mrf.mxu0
      %v582 = vadd.f32 0.0, %v581
      %v583 = vpop.f32.mrf.mxu0
      %v584 = vpop.f32.mrf.mxu0
      %v585 = vadd.f32 0.0, %v584
      %v586 = vpop.f32.mrf.mxu0
      %587 = vmatprep.mubr.bf16.mxu0 0
      %588 = vmatmul.mubr.bf16.gmra.mxu0 %v430
      %v589 = vpop.f32.mrf.mxu0
      %v590 = vadd.f32 0.0, %v589
      %v591 = vpop.f32.mrf.mxu0
      %v592 = vpop.f32.mrf.mxu0
      %v593 = vadd.f32 0.0, %v592
      %v594 = vpop.f32.mrf.mxu0
      %595 = vmatprep.mubr.bf16.mxu0 0
      %596 = vmatmul.mubr.bf16.gmra.mxu0 %v433
      %v597 = vpop.f32.mrf.mxu0
      %v598 = vadd.f32 0.0, %v597
      %v599 = vpop.f32.mrf.mxu0
      %v600 = vpop.f32.mrf.mxu0
      %v601 = vadd.f32 0.0, %v600
      %v602 = vpop.f32.mrf.mxu0
      %603 = vmatprep.mubr.bf16.mxu0 0
      %604 = vmatmul.mubr.bf16.gmra.mxu0 %v436
      %v605 = vpop.f32.mrf.mxu0
      %v606 = vadd.f32 0.0, %v605
      %v607 = vpop.f32.mrf.mxu0
      %v608 = vpop.f32.mrf.mxu0
      %v609 = vadd.f32 0.0, %v608
      %v610 = vpop.f32.mrf.mxu0
      %611 = vmatprep.mubr.bf16.mxu0 0
      %612 = vmatmul.mubr.bf16.gmra.mxu0 %v439
      %v613 = vpop.f32.mrf.mxu0
      %v614 = vadd.f32 0.0, %v613
      %v615 = vpop.f32.mrf.mxu0
      %v616 = vpop.f32.mrf.mxu0
      %v617 = vadd.f32 0.0, %v616
      %v618 = vpop.f32.mrf.mxu0
      %619 = vmatprep.mubr.bf16.mxu0 0
      %620 = vmatmul.mubr.bf16.gmra.mxu0 %v442
      %v621 = vpop.f32.mrf.mxu0
      %v622 = vadd.f32 0.0, %v621
      %v623 = vpop.f32.mrf.mxu0
      %v624 = vpop.f32.mrf.mxu0
      %v625 = vadd.f32 0.0, %v624
      %v626 = vpop.f32.mrf.mxu0
      %627 = vdwg.mxu0
      %v628 = vadd.f32 %v352, %v486
      %v629 = vadd.f32 %v353, %v489
      %v630 = vadd.f32 %v354, %v494
      %v631 = vadd.f32 %v355, %v497
      %v632 = vadd.f32 %v356, %v502
      %v633 = vadd.f32 %v357, %v505
      %v634 = vadd.f32 %v358, %v510
      %v635 = vadd.f32 %v359, %v513
      %v636 = vadd.f32 %v360, %v518
      %v637 = vadd.f32 %v361, %v521
      %v638 = vadd.f32 %v362, %v526
      %v639 = vadd.f32 %v363, %v529
      %v640 = vadd.f32 %v364, %v534
      %v641 = vadd.f32 %v365, %v537
      %v642 = vadd.f32 %v366, %v542
      %v643 = vadd.f32 %v367, %v545
      %v644 = vadd.f32 %v368, %v550
      %v645 = vadd.f32 %v369, %v553
      %v646 = vadd.f32 %v370, %v558
      %v647 = vadd.f32 %v371, %v561
      %v648 = vadd.f32 %v372, %v566
      %v649 = vadd.f32 %v373, %v569
      %v650 = vadd.f32 %v374, %v574
      %v651 = vadd.f32 %v375, %v577
      %v652 = vadd.f32 %v376, %v582
      %v653 = vadd.f32 %v377, %v585
      %v654 = vadd.f32 %v378, %v590
      %v655 = vadd.f32 %v379, %v593
      %v656 = vadd.f32 %v380, %v598
      %v657 = vadd.f32 %v381, %v601
      %v658 = vadd.f32 %v382, %v606
      %v659 = vadd.f32 %v383, %v609
      %v660 = vadd.f32 %v384, %v614
      %v661 = vadd.f32 %v385, %v617
      %v662 = vadd.f32 %v386, %v622
      %v663 = vadd.f32 %v387, %v625
      %vm664 = vcmask 64512
      %665 = vst.msk [vmem:[#allocation2] sm:$0xff] %vm664, %v628
      %666 = vst.msk [vmem:[#allocation2 + $0x8] sm:$0xff] %vm664, %v629
      %667 = vst.msk [vmem:[#allocation2 + $0x10] sm:$0xff] %vm664, %v630
      %668 = vst.msk [vmem:[#allocation2 + $0x18] sm:$0xff] %vm664, %v631
      %669 = vst.msk [vmem:[#allocation2 + $0x20] sm:$0xff] %vm664, %v632
      %670 = vst.msk [vmem:[#allocation2 + $0x28] sm:$0xff] %vm664, %v633
      %671 = vst.msk [vmem:[#allocation2 + $0x30] sm:$0xff] %vm664, %v634
      %672 = vst.msk [vmem:[#allocation2 + $0x38] sm:$0xff] %vm664, %v635
      %673 = vst.msk [vmem:[#allocation2 + $0x40] sm:$0xff] %vm664, %v636
      %674 = vst.msk [vmem:[#allocation2 + $0x48] sm:$0xff] %vm664, %v637
      %675 = vst.msk [vmem:[#allocation2 + $0x50] sm:$0xff] %vm664, %v638
      %676 = vst.msk [vmem:[#allocation2 + $0x58] sm:$0xff] %vm664, %v639
      %677 = vst.msk [vmem:[#allocation2 + $0x60] sm:$0xff] %vm664, %v640
      %678 = vst.msk [vmem:[#allocation2 + $0x68] sm:$0xff] %vm664, %v641
      %679 = vst.msk [vmem:[#allocation2 + $0x70] sm:$0xff] %vm664, %v642
      %680 = vst.msk [vmem:[#allocation2 + $0x78] sm:$0xff] %vm664, %v643
      %681 = vst.msk [vmem:[#allocation2 + $0x80] sm:$0xff] %vm664, %v644
      %682 = vst.msk [vmem:[#allocation2 + $0x88] sm:$0xff] %vm664, %v645
      %683 = vst.msk [vmem:[#allocation2 + $0x90] sm:$0xff] %vm664, %v646
      %684 = vst.msk [vmem:[#allocation2 + $0x98] sm:$0xff] %vm664, %v647
      %685 = vst.msk [vmem:[#allocation2 + $0xa0] sm:$0xff] %vm664, %v648
      %686 = vst.msk [vmem:[#allocation2 + $0xa8] sm:$0xff] %vm664, %v649
      %687 = vst.msk [vmem:[#allocation2 + $0xb0] sm:$0xff] %vm664, %v650
      %688 = vst.msk [vmem:[#allocation2 + $0xb8] sm:$0xff] %vm664, %v651
      %689 = vst.msk [vmem:[#allocation2 + $0xc0] sm:$0xff] %vm664, %v652
      %690 = vst.msk [vmem:[#allocation2 + $0xc8] sm:$0xff] %vm664, %v653
      %691 = vst.msk [vmem:[#allocation2 + $0xd0] sm:$0xff] %vm664, %v654
      %692 = vst.msk [vmem:[#allocation2 + $0xd8] sm:$0xff] %vm664, %v655
      %693 = vst.msk [vmem:[#allocation2 + $0xe0] sm:$0xff] %vm664, %v656
      %694 = vst.msk [vmem:[#allocation2 + $0xe8] sm:$0xff] %vm664, %v657
      %695 = vst.msk [vmem:[#allocation2 + $0xf0] sm:$0xff] %vm664, %v658
      %696 = vst.msk [vmem:[#allocation2 + $0xf8] sm:$0xff] %vm664, %v659
      %697 = vst.msk [vmem:[#allocation2 + $0x100] sm:$0xff] %vm664, %v660
      %698 = vst.msk [vmem:[#allocation2 + $0x108] sm:$0xff] %vm664, %v661
      %699 = vst.msk [vmem:[#allocation2 + $0x110] sm:$0xff] %vm664, %v662
      %700 = vst.msk [vmem:[#allocation2 + $0x118] sm:$0xff] %vm664, %v663
      %v701 = vpack.c.bf16 %v329, %v329
      %v702 = vld [vmem:[#allocation2] sm:$0xff]
      %v703 = vld [vmem:[#allocation2 + $0x8] sm:$0xff]
      %v704 = vld [vmem:[#allocation2 + $0x10] sm:$0xff]
      %v705 = vld [vmem:[#allocation2 + $0x18] sm:$0xff]
      %v706 = vld [vmem:[#allocation2 + $0x20] sm:$0xff]
      %v707 = vld [vmem:[#allocation2 + $0x28] sm:$0xff]
      %v708 = vld [vmem:[#allocation2 + $0x30] sm:$0xff]
      %v709 = vld [vmem:[#allocation2 + $0x38] sm:$0xff]
      %v710 = vld [vmem:[#allocation2 + $0x40] sm:$0xff]
      %v711 = vld [vmem:[#allocation2 + $0x48] sm:$0xff]
      %v712 = vld [vmem:[#allocation2 + $0x50] sm:$0xff]
      %v713 = vld [vmem:[#allocation2 + $0x58] sm:$0xff]
      %v714 = vld [vmem:[#allocation2 + $0x60] sm:$0xff]
      %v715 = vld [vmem:[#allocation2 + $0x68] sm:$0xff]
      %v716 = vld [vmem:[#allocation2 + $0x70] sm:$0xff]
      %v717 = vld [vmem:[#allocation2 + $0x78] sm:$0xff]
      %v718 = vld [vmem:[#allocation2 + $0x80] sm:$0xff]
      %v719 = vld [vmem:[#allocation2 + $0x88] sm:$0xff]
      %v720 = vld [vmem:[#allocation2 + $0x90] sm:$0xff]
      %v721 = vld [vmem:[#allocation2 + $0x98] sm:$0xff]
      %v722 = vld [vmem:[#allocation2 + $0xa0] sm:$0xff]
      %v723 = vld [vmem:[#allocation2 + $0xa8] sm:$0xff]
      %v724 = vld [vmem:[#allocation2 + $0xb0] sm:$0xff]
      %v725 = vld [vmem:[#allocation2 + $0xb8] sm:$0xff]
      %v726 = vld [vmem:[#allocation2 + $0xc0] sm:$0xff]
      %v727 = vld [vmem:[#allocation2 + $0xc8] sm:$0xff]
      %v728 = vld [vmem:[#allocation2 + $0xd0] sm:$0xff]
      %v729 = vld [vmem:[#allocation2 + $0xd8] sm:$0xff]
      %v730 = vld [vmem:[#allocation2 + $0xe0] sm:$0xff]
      %v731 = vld [vmem:[#allocation2 + $0xe8] sm:$0xff]
      %v732 = vld [vmem:[#allocation2 + $0xf0] sm:$0xff]
      %v733 = vld [vmem:[#allocation2 + $0xf8] sm:$0xff]
      %v734 = vld [vmem:[#allocation2 + $0x100] sm:$0xff]
      %v735 = vld [vmem:[#allocation2 + $0x108] sm:$0xff]
      %v736 = vld [vmem:[#allocation2 + $0x110] sm:$0xff]
      %v737 = vld [vmem:[#allocation2 + $0x118] sm:$0xff]
      %s738 = scalar_lea.vmem %s239, 2
      %v739 = vld [vmem:[%s738] sm:$0x3]
      %vm740 = vsmask.f32 7424
      %v741 = vshrl.u32 %v334, 16
      %v743 = vshll.u32 %v334, 16
      %v745 = vrot.slane %v743, 1
      %v746 = vor.u32 %v741, %v745
      %v747 = vshll.u32 %v335, 16
      %v749 = vrot.slane %v747, 1
      %v750 = vsel %vm740, %v746, %v749
      %v751 = vshrl.u32 %v335, 16
      %v753 = vor.u32 %v751, %v749
      %v754 = vshll.u32 %v336, 16
      %v756 = vrot.slane %v754, 1
      %v757 = vsel %vm740, %v753, %v756
      %v758 = vshrl.u32 %v336, 16
      %v760 = vor.u32 %v758, %v756
      %v761 = vshll.u32 %v337, 16
      %v763 = vrot.slane %v761, 1
      %v764 = vsel %vm740, %v760, %v763
      %v765 = vshrl.u32 %v337, 16
      %v767 = vor.u32 %v765, %v763
      %v768 = vshll.u32 %v338, 16
      %v770 = vrot.slane %v768, 1
      %v771 = vsel %vm740, %v767, %v770
      %v772 = vshrl.u32 %v338, 16
      %v774 = vor.u32 %v772, %v770
      %v775 = vshll.u32 %v339, 16
      %v777 = vrot.slane %v775, 1
      %v778 = vsel %vm740, %v774, %v777
      %v779 = vshrl.u32 %v339, 16
      %v781 = vor.u32 %v779, %v777
      %v782 = vshll.u32 %v340, 16
      %v784 = vrot.slane %v782, 1
      %v785 = vsel %vm740, %v781, %v784
      %v786 = vshrl.u32 %v340, 16
      %v788 = vor.u32 %v786, %v784
      %v789 = vshll.u32 %v341, 16
      %v791 = vrot.slane %v789, 1
      %v792 = vsel %vm740, %v788, %v791
      %v793 = vshrl.u32 %v341, 16
      %v795 = vor.u32 %v793, %v791
      %v796 = vshll.u32 %v342, 16
      %v798 = vrot.slane %v796, 1
      %v799 = vsel %vm740, %v795, %v798
      %v800 = vshrl.u32 %v342, 16
      %v802 = vor.u32 %v800, %v798
      %v803 = vshll.u32 %v343, 16
      %v805 = vrot.slane %v803, 1
      %v806 = vsel %vm740, %v802, %v805
      %v807 = vshrl.u32 %v343, 16
      %v809 = vor.u32 %v807, %v805
      %v810 = vshll.u32 %v344, 16
      %v812 = vrot.slane %v810, 1
      %v813 = vsel %vm740, %v809, %v812
      %v814 = vshrl.u32 %v344, 16
      %v816 = vor.u32 %v814, %v812
      %v817 = vshll.u32 %v345, 16
      %v819 = vrot.slane %v817, 1
      %v820 = vsel %vm740, %v816, %v819
      %v821 = vshrl.u32 %v345, 16
      %v823 = vor.u32 %v821, %v819
      %v824 = vshll.u32 %v346, 16
      %v826 = vrot.slane %v824, 1
      %v827 = vsel %vm740, %v823, %v826
      %v828 = vshrl.u32 %v346, 16
      %v830 = vor.u32 %v828, %v826
      %v831 = vshll.u32 %v347, 16
      %v833 = vrot.slane %v831, 1
      %v834 = vsel %vm740, %v830, %v833
      %v835 = vshrl.u32 %v347, 16
      %v837 = vor.u32 %v835, %v833
      %v838 = vshll.u32 %v348, 16
      %v840 = vrot.slane %v838, 1
      %v841 = vsel %vm740, %v837, %v840
      %v842 = vshrl.u32 %v348, 16
      %v844 = vor.u32 %v842, %v840
      %v845 = vshll.u32 %v349, 16
      %v847 = vrot.slane %v845, 1
      %v848 = vsel %vm740, %v844, %v847
      %v849 = vshrl.u32 %v349, 16
      %v851 = vor.u32 %v849, %v847
      %v852 = vshll.u32 %v350, 16
      %v854 = vrot.slane %v852, 1
      %v855 = vsel %vm740, %v851, %v854
      %v856 = vshrl.u32 %v350, 16
      %v858 = vor.u32 %v856, %v854
      %v859 = vshll.u32 %v351, 16
      %v861 = vrot.slane %v859, 1
      %v862 = vsel %vm740, %v858, %v861
      %v863 = vshrl.u32 %v351, 16
      %v865 = vor.u32 %v863, %v861
      %v867 = vshll.u32 %v701, 16
      %v869 = vrot.slane %v867, 1
      %v870 = vsel %vm740, %v865, %v869
      %v872 = vsel %vm389, %v750, 0
      %v875 = vsel %vm389, %v757, 0
      %v878 = vsel %vm389, %v764, 0
      %v881 = vsel %vm389, %v771, 0
      %v884 = vsel %vm389, %v778, 0
      %v887 = vsel %vm389, %v785, 0
      %v890 = vsel %vm389, %v792, 0
      %v893 = vsel %vm389, %v799, 0
      %v896 = vsel %vm389, %v806, 0
      %v899 = vsel %vm389, %v813, 0
      %v902 = vsel %vm389, %v820, 0
      %v905 = vsel %vm389, %v827, 0
      %v908 = vsel %vm389, %v834, 0
      %v911 = vsel %vm389, %v841, 0
      %v914 = vsel %vm389, %v848, 0
      %v917 = vsel %vm389, %v855, 0
      %v920 = vsel %vm389, %v862, 0
      %v923 = vsel %vm389, %v870, 0
      %v926 = vand.u32 %v739, %v447
      %928 = vmatprep.subr.bf16.mxu0 0
      %929 = vmatpush1.bf16.msra.mxu0 0
      %930 = vmatprep.subr.bf16.mxu0 0
      %931 = vmatpush1.bf16.msra.mxu0 0
      %932 = vmatprep.subr.bf16.mxu0 0
      %933 = vmatpush1.bf16.msra.mxu0 0
      %934 = vmatprep.subr.bf16.mxu0 0
      %935 = vmatpush1.bf16.msra.mxu0 0
      %936 = vmatprep.subr.bf16.mxu0 0
      %937 = vmatpush1.bf16.msra.mxu0 0
      %938 = vmatprep.subr.bf16.mxu0 0
      %939 = vmatpush1.bf16.msra.mxu0 0
      %940 = vmatprep.subr.bf16.mxu0 0
      %941 = vmatpush1.bf16.msra.mxu0 0
      %942 = vmatprep.subr.bf16.mxu0 0
      %943 = vmatpush1.bf16.msra.mxu0 %v926
      %944 = vmatprep.subr.bf16.mxu0 0
      %945 = vmatpush2.bf16.msra.mxu0 0
      %946 = vmatprep.subr.bf16.mxu0 0
      %947 = vmatpush2.bf16.msra.mxu0 0
      %948 = vmatprep.subr.bf16.mxu0 0
      %949 = vmatpush2.bf16.msra.mxu0 0
      %950 = vmatprep.subr.bf16.mxu0 0
      %951 = vmatpush2.bf16.msra.mxu0 0
      %952 = vmatprep.subr.bf16.mxu0 0
      %953 = vmatpush2.bf16.msra.mxu0 0
      %954 = vmatprep.subr.bf16.mxu0 0
      %955 = vmatpush2.bf16.msra.mxu0 0
      %956 = vmatprep.subr.bf16.mxu0 0
      %957 = vmatpush2.bf16.msra.mxu0 0
      %958 = vmatprep.subr.bf16.mxu0 0
      %959 = vmatpush2.bf16.msra.mxu0 0
      %960 = vmatprep.mubr.bf16.mxu0 0
      %961 = vmatmul.mubr.bf16.gmra.mxu0 %v872
      %v962 = vpop.f32.mrf.mxu0
      %v963 = vadd.f32 0.0, %v962
      %v964 = vpop.f32.mrf.mxu0
      %v965 = vpop.f32.mrf.mxu0
      %v966 = vadd.f32 0.0, %v965
      %v967 = vpop.f32.mrf.mxu0
      %968 = vmatprep.mubr.bf16.mxu0 0
      %969 = vmatmul.mubr.bf16.gmra.mxu0 %v875
      %v970 = vpop.f32.mrf.mxu0
      %v971 = vadd.f32 0.0, %v970
      %v972 = vpop.f32.mrf.mxu0
      %v973 = vpop.f32.mrf.mxu0
      %v974 = vadd.f32 0.0, %v973
      %v975 = vpop.f32.mrf.mxu0
      %976 = vmatprep.mubr.bf16.mxu0 0
      %977 = vmatmul.mubr.bf16.gmra.mxu0 %v878
      %v978 = vpop.f32.mrf.mxu0
      %v979 = vadd.f32 0.0, %v978
      %v980 = vpop.f32.mrf.mxu0
      %v981 = vpop.f32.mrf.mxu0
      %v982 = vadd.f32 0.0, %v981
      %v983 = vpop.f32.mrf.mxu0
      %984 = vmatprep.mubr.bf16.mxu0 0
      %985 = vmatmul.mubr.bf16.gmra.mxu0 %v881
      %v986 = vpop.f32.mrf.mxu0
      %v987 = vadd.f32 0.0, %v986
      %v988 = vpop.f32.mrf.mxu0
      %v989 = vpop.f32.mrf.mxu0
      %v990 = vadd.f32 0.0, %v989
      %v991 = vpop.f32.mrf.mxu0
      %992 = vmatprep.mubr.bf16.mxu0 0
      %993 = vmatmul.mubr.bf16.gmra.mxu0 %v884
      %v994 = vpop.f32.mrf.mxu0
      %v995 = vadd.f32 0.0, %v994
      %v996 = vpop.f32.mrf.mxu0
      %v997 = vpop.f32.mrf.mxu0
      %v998 = vadd.f32 0.0, %v997
      %v999 = vpop.f32.mrf.mxu0
      %1000 = vmatprep.mubr.bf16.mxu0 0
      %1001 = vmatmul.mubr.bf16.gmra.mxu0 %v887
      %v1002 = vpop.f32.mrf.mxu0
      %v1003 = vadd.f32 0.0, %v1002
      %v1004 = vpop.f32.mrf.mxu0
      %v1005 = vpop.f32.mrf.mxu0
      %v1006 = vadd.f32 0.0, %v1005
      %v1007 = vpop.f32.mrf.mxu0
      %1008 = vmatprep.mubr.bf16.mxu0 0
      %1009 = vmatmul.mubr.bf16.gmra.mxu0 %v890
      %v1010 = vpop.f32.mrf.mxu0
      %v1011 = vadd.f32 0.0, %v1010
      %v1012 = vpop.f32.mrf.mxu0
      %v1013 = vpop.f32.mrf.mxu0
      %v1014 = vadd.f32 0.0, %v1013
      %v1015 = vpop.f32.mrf.mxu0
      %1016 = vmatprep.mubr.bf16.mxu0 0
      %1017 = vmatmul.mubr.bf16.gmra.mxu0 %v893
      %v1018 = vpop.f32.mrf.mxu0
      %v1019 = vadd.f32 0.0, %v1018
      %v1020 = vpop.f32.mrf.mxu0
      %v1021 = vpop.f32.mrf.mxu0
      %v1022 = vadd.f32 0.0, %v1021
      %v1023 = vpop.f32.mrf.mxu0
      %1024 = vmatprep.mubr.bf16.mxu0 0
      %1025 = vmatmul.mubr.bf16.gmra.mxu0 %v896
      %v1026 = vpop.f32.mrf.mxu0
      %v1027 = vadd.f32 0.0, %v1026
      %v1028 = vpop.f32.mrf.mxu0
      %v1029 = vpop.f32.mrf.mxu0
      %v1030 = vadd.f32 0.0, %v1029
      %v1031 = vpop.f32.mrf.mxu0
      %1032 = vmatprep.mubr.bf16.mxu0 0
      %1033 = vmatmul.mubr.bf16.gmra.mxu0 %v899
      %v1034 = vpop.f32.mrf.mxu0
      %v1035 = vadd.f32 0.0, %v1034
      %v1036 = vpop.f32.mrf.mxu0
      %v1037 = vpop.f32.mrf.mxu0
      %v1038 = vadd.f32 0.0, %v1037
      %v1039 = vpop.f32.mrf.mxu0
      %1040 = vmatprep.mubr.bf16.mxu0 0
      %1041 = vmatmul.mubr.bf16.gmra.mxu0 %v902
      %v1042 = vpop.f32.mrf.mxu0
      %v1043 = vadd.f32 0.0, %v1042
      %v1044 = vpop.f32.mrf.mxu0
      %v1045 = vpop.f32.mrf.mxu0
      %v1046 = vadd.f32 0.0, %v1045
      %v1047 = vpop.f32.mrf.mxu0
      %1048 = vmatprep.mubr.bf16.mxu0 0
      %1049 = vmatmul.mubr.bf16.gmra.mxu0 %v905
      %v1050 = vpop.f32.mrf.mxu0
      %v1051 = vadd.f32 0.0, %v1050
      %v1052 = vpop.f32.mrf.mxu0
      %v1053 = vpop.f32.mrf.mxu0
      %v1054 = vadd.f32 0.0, %v1053
      %v1055 = vpop.f32.mrf.mxu0
      %1056 = vmatprep.mubr.bf16.mxu0 0
      %1057 = vmatmul.mubr.bf16.gmra.mxu0 %v908
      %v1058 = vpop.f32.mrf.mxu0
      %v1059 = vadd.f32 0.0, %v1058
      %v1060 = vpop.f32.mrf.mxu0
      %v1061 = vpop.f32.mrf.mxu0
      %v1062 = vadd.f32 0.0, %v1061
      %v1063 = vpop.f32.mrf.mxu0
      %1064 = vmatprep.mubr.bf16.mxu0 0
      %1065 = vmatmul.mubr.bf16.gmra.mxu0 %v911
      %v1066 = vpop.f32.mrf.mxu0
      %v1067 = vadd.f32 0.0, %v1066
      %v1068 = vpop.f32.mrf.mxu0
      %v1069 = vpop.f32.mrf.mxu0
      %v1070 = vadd.f32 0.0, %v1069
      %v1071 = vpop.f32.mrf.mxu0
      %1072 = vmatprep.mubr.bf16.mxu0 0
      %1073 = vmatmul.mubr.bf16.gmra.mxu0 %v914
      %v1074 = vpop.f32.mrf.mxu0
      %v1075 = vadd.f32 0.0, %v1074
      %v1076 = vpop.f32.mrf.mxu0
      %v1077 = vpop.f32.mrf.mxu0
      %v1078 = vadd.f32 0.0, %v1077
      %v1079 = vpop.f32.mrf.mxu0
      %1080 = vmatprep.mubr.bf16.mxu0 0
      %1081 = vmatmul.mubr.bf16.gmra.mxu0 %v917
      %v1082 = vpop.f32.mrf.mxu0
      %v1083 = vadd.f32 0.0, %v1082
      %v1084 = vpop.f32.mrf.mxu0
      %v1085 = vpop.f32.mrf.mxu0
      %v1086 = vadd.f32 0.0, %v1085
      %v1087 = vpop.f32.mrf.mxu0
      %1088 = vmatprep.mubr.bf16.mxu0 0
      %1089 = vmatmul.mubr.bf16.gmra.mxu0 %v920
      %v1090 = vpop.f32.mrf.mxu0
      %v1091 = vadd.f32 0.0, %v1090
      %v1092 = vpop.f32.mrf.mxu0
      %v1093 = vpop.f32.mrf.mxu0
      %v1094 = vadd.f32 0.0, %v1093
      %v1095 = vpop.f32.mrf.mxu0
      %1096 = vmatprep.mubr.bf16.mxu0 0
      %1097 = vmatmul.mubr.bf16.gmra.mxu0 %v923
      %v1098 = vpop.f32.mrf.mxu0
      %v1099 = vadd.f32 0.0, %v1098
      %v1100 = vpop.f32.mrf.mxu0
      %v1101 = vpop.f32.mrf.mxu0
      %v1102 = vadd.f32 0.0, %v1101
      %v1103 = vpop.f32.mrf.mxu0
      %1104 = vdwg.mxu0
      %v1105 = vadd.f32 %v702, %v963
      %v1106 = vadd.f32 %v703, %v966
      %v1107 = vadd.f32 %v704, %v971
      %v1108 = vadd.f32 %v705, %v974
      %v1109 = vadd.f32 %v706, %v979
      %v1110 = vadd.f32 %v707, %v982
      %v1111 = vadd.f32 %v708, %v987
      %v1112 = vadd.f32 %v709, %v990
      %v1113 = vadd.f32 %v710, %v995
      %v1114 = vadd.f32 %v711, %v998
      %v1115 = vadd.f32 %v712, %v1003
      %v1116 = vadd.f32 %v713, %v1006
      %v1117 = vadd.f32 %v714, %v1011
      %v1118 = vadd.f32 %v715, %v1014
      %v1119 = vadd.f32 %v716, %v1019
      %v1120 = vadd.f32 %v717, %v1022
      %v1121 = vadd.f32 %v718, %v1027
      %v1122 = vadd.f32 %v719, %v1030
      %v1123 = vadd.f32 %v720, %v1035
      %v1124 = vadd.f32 %v721, %v1038
      %v1125 = vadd.f32 %v722, %v1043
      %v1126 = vadd.f32 %v723, %v1046
      %v1127 = vadd.f32 %v724, %v1051
      %v1128 = vadd.f32 %v725, %v1054
      %v1129 = vadd.f32 %v726, %v1059
      %v1130 = vadd.f32 %v727, %v1062
      %v1131 = vadd.f32 %v728, %v1067
      %v1132 = vadd.f32 %v729, %v1070
      %v1133 = vadd.f32 %v730, %v1075
      %v1134 = vadd.f32 %v731, %v1078
      %v1135 = vadd.f32 %v732, %v1083
      %v1136 = vadd.f32 %v733, %v1086
      %v1137 = vadd.f32 %v734, %v1091
      %v1138 = vadd.f32 %v735, %v1094
      %v1139 = vadd.f32 %v736, %v1099
      %v1140 = vadd.f32 %v737, %v1102
      %1141 = vst.msk [vmem:[#allocation2] sm:$0xff] %vm664, %v1105
      %1142 = vst.msk [vmem:[#allocation2 + $0x8] sm:$0xff] %vm664, %v1106
      %1143 = vst.msk [vmem:[#allocation2 + $0x10] sm:$0xff] %vm664, %v1107
      %1144 = vst.msk [vmem:[#allocation2 + $0x18] sm:$0xff] %vm664, %v1108
      %1145 = vst.msk [vmem:[#allocation2 + $0x20] sm:$0xff] %vm664, %v1109
      %1146 = vst.msk [vmem:[#allocation2 + $0x28] sm:$0xff] %vm664, %v1110
      %1147 = vst.msk [vmem:[#allocation2 + $0x30] sm:$0xff] %vm664, %v1111
      %1148 = vst.msk [vmem:[#allocation2 + $0x38] sm:$0xff] %vm664, %v1112
      %1149 = vst.msk [vmem:[#allocation2 + $0x40] sm:$0xff] %vm664, %v1113
      %1150 = vst.msk [vmem:[#allocation2 + $0x48] sm:$0xff] %vm664, %v1114
      %1151 = vst.msk [vmem:[#allocation2 + $0x50] sm:$0xff] %vm664, %v1115
      %1152 = vst.msk [vmem:[#allocation2 + $0x58] sm:$0xff] %vm664, %v1116
      %1153 = vst.msk [vmem:[#allocation2 + $0x60] sm:$0xff] %vm664, %v1117
      %1154 = vst.msk [vmem:[#allocation2 + $0x68] sm:$0xff] %vm664, %v1118
      %1155 = vst.msk [vmem:[#allocation2 + $0x70] sm:$0xff] %vm664, %v1119
      %1156 = vst.msk [vmem:[#allocation2 + $0x78] sm:$0xff] %vm664, %v1120
      %1157 = vst.msk [vmem:[#allocation2 + $0x80] sm:$0xff] %vm664, %v1121
      %1158 = vst.msk [vmem:[#allocation2 + $0x88] sm:$0xff] %vm664, %v1122
      %1159 = vst.msk [vmem:[#allocation2 + $0x90] sm:$0xff] %vm664, %v1123
      %1160 = vst.msk [vmem:[#allocation2 + $0x98] sm:$0xff] %vm664, %v1124
      %1161 = vst.msk [vmem:[#allocation2 + $0xa0] sm:$0xff] %vm664, %v1125
      %1162 = vst.msk [vmem:[#allocation2 + $0xa8] sm:$0xff] %vm664, %v1126
      %1163 = vst.msk [vmem:[#allocation2 + $0xb0] sm:$0xff] %vm664, %v1127
      %1164 = vst.msk [vmem:[#allocation2 + $0xb8] sm:$0xff] %vm664, %v1128
      %1165 = vst.msk [vmem:[#allocation2 + $0xc0] sm:$0xff] %vm664, %v1129
      %1166 = vst.msk [vmem:[#allocation2 + $0xc8] sm:$0xff] %vm664, %v1130
      %1167 = vst.msk [vmem:[#allocation2 + $0xd0] sm:$0xff] %vm664, %v1131
      %1168 = vst.msk [vmem:[#allocation2 + $0xd8] sm:$0xff] %vm664, %v1132
      %1169 = vst.msk [vmem:[#allocation2 + $0xe0] sm:$0xff] %vm664, %v1133
      %1170 = vst.msk [vmem:[#allocation2 + $0xe8] sm:$0xff] %vm664, %v1134
      %1171 = vst.msk [vmem:[#allocation2 + $0xf0] sm:$0xff] %vm664, %v1135
      %1172 = vst.msk [vmem:[#allocation2 + $0xf8] sm:$0xff] %vm664, %v1136
      %1173 = vst.msk [vmem:[#allocation2 + $0x100] sm:$0xff] %vm664, %v1137
      %1174 = vst.msk [vmem:[#allocation2 + $0x108] sm:$0xff] %vm664, %v1138
      %1175 = vst.msk [vmem:[#allocation2 + $0x110] sm:$0xff] %vm664, %v1139
      %1176 = vst.msk [vmem:[#allocation2 + $0x118] sm:$0xff] %vm664, %v1140
      %v1177 = vld [vmem:[#allocation2] sm:$0xff]
      %v1178 = vld [vmem:[#allocation2 + $0x8] sm:$0xff]
      %v1179 = vld [vmem:[#allocation2 + $0x10] sm:$0xff]
      %v1180 = vld [vmem:[#allocation2 + $0x18] sm:$0xff]
      %v1181 = vld [vmem:[#allocation2 + $0x20] sm:$0xff]
      %v1182 = vld [vmem:[#allocation2 + $0x28] sm:$0xff]
      %v1183 = vld [vmem:[#allocation2 + $0x30] sm:$0xff]
      %v1184 = vld [vmem:[#allocation2 + $0x38] sm:$0xff]
      %v1185 = vld [vmem:[#allocation2 + $0x40] sm:$0xff]
      %v1186 = vld [vmem:[#allocation2 + $0x48] sm:$0xff]
      %v1187 = vld [vmem:[#allocation2 + $0x50] sm:$0xff]
      %v1188 = vld [vmem:[#allocation2 + $0x58] sm:$0xff]
      %v1189 = vld [vmem:[#allocation2 + $0x60] sm:$0xff]
      %v1190 = vld [vmem:[#allocation2 + $0x68] sm:$0xff]
      %v1191 = vld [vmem:[#allocation2 + $0x70] sm:$0xff]
      %v1192 = vld [vmem:[#allocation2 + $0x78] sm:$0xff]
      %v1193 = vld [vmem:[#allocation2 + $0x80] sm:$0xff]
      %v1194 = vld [vmem:[#allocation2 + $0x88] sm:$0xff]
      %v1195 = vld [vmem:[#allocation2 + $0x90] sm:$0xff]
      %v1196 = vld [vmem:[#allocation2 + $0x98] sm:$0xff]
      %v1197 = vld [vmem:[#allocation2 + $0xa0] sm:$0xff]
      %v1198 = vld [vmem:[#allocation2 + $0xa8] sm:$0xff]
      %v1199 = vld [vmem:[#allocation2 + $0xb0] sm:$0xff]
      %v1200 = vld [vmem:[#allocation2 + $0xb8] sm:$0xff]
      %v1201 = vld [vmem:[#allocation2 + $0xc0] sm:$0xff]
      %v1202 = vld [vmem:[#allocation2 + $0xc8] sm:$0xff]
      %v1203 = vld [vmem:[#allocation2 + $0xd0] sm:$0xff]
      %v1204 = vld [vmem:[#allocation2 + $0xd8] sm:$0xff]
      %v1205 = vld [vmem:[#allocation2 + $0xe0] sm:$0xff]
      %v1206 = vld [vmem:[#allocation2 + $0xe8] sm:$0xff]
      %v1207 = vld [vmem:[#allocation2 + $0xf0] sm:$0xff]
      %v1208 = vld [vmem:[#allocation2 + $0xf8] sm:$0xff]
      %v1209 = vld [vmem:[#allocation2 + $0x100] sm:$0xff]
      %v1210 = vld [vmem:[#allocation2 + $0x108] sm:$0xff]
      %v1211 = vld [vmem:[#allocation2 + $0x110] sm:$0xff]
      %v1212 = vld [vmem:[#allocation2 + $0x118] sm:$0xff]
      %s1213 = scalar_lea.vmem %s239, 4
      %v1214 = vld [vmem:[%s1213] sm:$0x3]
      %vm1234 = vcmask 1046528
      %v1235 = vrot.slane %v334, 1
      %v1236 = vrot.slane %v335, 1
      %v1237 = vsel %vm1234, %v1235, %v1236
      %v1238 = vrot.slane %v336, 1
      %v1239 = vsel %vm1234, %v1236, %v1238
      %v1240 = vrot.slane %v337, 1
      %v1241 = vsel %vm1234, %v1238, %v1240
      %v1242 = vrot.slane %v338, 1
      %v1243 = vsel %vm1234, %v1240, %v1242
      %v1244 = vrot.slane %v339, 1
      %v1245 = vsel %vm1234, %v1242, %v1244
      %v1246 = vrot.slane %v340, 1
      %v1247 = vsel %vm1234, %v1244, %v1246
      %v1248 = vrot.slane %v341, 1
      %v1249 = vsel %vm1234, %v1246, %v1248
      %v1250 = vrot.slane %v342, 1
      %v1251 = vsel %vm1234, %v1248, %v1250
      %v1252 = vrot.slane %v343, 1
      %v1253 = vsel %vm1234, %v1250, %v1252
      %v1254 = vrot.slane %v344, 1
      %v1255 = vsel %vm1234, %v1252, %v1254
      %v1256 = vrot.slane %v345, 1
      %v1257 = vsel %vm1234, %v1254, %v1256
      %v1258 = vrot.slane %v346, 1
      %v1259 = vsel %vm1234, %v1256, %v1258
      %v1260 = vrot.slane %v347, 1
      %v1261 = vsel %vm1234, %v1258, %v1260
      %v1262 = vrot.slane %v348, 1
      %v1263 = vsel %vm1234, %v1260, %v1262
      %v1264 = vrot.slane %v349, 1
      %v1265 = vsel %vm1234, %v1262, %v1264
      %v1266 = vrot.slane %v350, 1
      %v1267 = vsel %vm1234, %v1264, %v1266
      %v1268 = vrot.slane %v351, 1
      %v1269 = vsel %vm1234, %v1266, %v1268
      %v1270 = vrot.slane %v701, 1
      %v1271 = vsel %vm1234, %v1268, %v1270
      %v1273 = vsel %vm389, %v1237, 0
      %v1276 = vsel %vm389, %v1239, 0
      %v1279 = vsel %vm389, %v1241, 0
      %v1282 = vsel %vm389, %v1243, 0
      %v1285 = vsel %vm389, %v1245, 0
      %v1288 = vsel %vm389, %v1247, 0
      %v1291 = vsel %vm389, %v1249, 0
      %v1294 = vsel %vm389, %v1251, 0
      %v1297 = vsel %vm389, %v1253, 0
      %v1300 = vsel %vm389, %v1255, 0
      %v1303 = vsel %vm389, %v1257, 0
      %v1306 = vsel %vm389, %v1259, 0
      %v1309 = vsel %vm389, %v1261, 0
      %v1312 = vsel %vm389, %v1263, 0
      %v1315 = vsel %vm389, %v1265, 0
      %v1318 = vsel %vm389, %v1267, 0
      %v1321 = vsel %vm389, %v1269, 0
      %v1324 = vsel %vm389, %v1271, 0
      %v1327 = vand.u32 %v1214, %v447
      %1329 = vmatprep.subr.bf16.mxu0 0
      %1330 = vmatpush1.bf16.msra.mxu0 0
      %1331 = vmatprep.subr.bf16.mxu0 0
      %1332 = vmatpush1.bf16.msra.mxu0 0
      %1333 = vmatprep.subr.bf16.mxu0 0
      %1334 = vmatpush1.bf16.msra.mxu0 0
      %1335 = vmatprep.subr.bf16.mxu0 0
      %1336 = vmatpush1.bf16.msra.mxu0 0
      %1337 = vmatprep.subr.bf16.mxu0 0
      %1338 = vmatpush1.bf16.msra.mxu0 0
      %1339 = vmatprep.subr.bf16.mxu0 0
      %1340 = vmatpush1.bf16.msra.mxu0 0
      %1341 = vmatprep.subr.bf16.mxu0 0
      %1342 = vmatpush1.bf16.msra.mxu0 0
      %1343 = vmatprep.subr.bf16.mxu0 0
      %1344 = vmatpush1.bf16.msra.mxu0 %v1327
      %1345 = vmatprep.subr.bf16.mxu0 0
      %1346 = vmatpush2.bf16.msra.mxu0 0
      %1347 = vmatprep.subr.bf16.mxu0 0
      %1348 = vmatpush2.bf16.msra.mxu0 0
      %1349 = vmatprep.subr.bf16.mxu0 0
      %1350 = vmatpush2.bf16.msra.mxu0 0
      %1351 = vmatprep.subr.bf16.mxu0 0
      %1352 = vmatpush2.bf16.msra.mxu0 0
      %1353 = vmatprep.subr.bf16.mxu0 0
      %1354 = vmatpush2.bf16.msra.mxu0 0
      %1355 = vmatprep.subr.bf16.mxu0 0
      %1356 = vmatpush2.bf16.msra.mxu0 0
      %1357 = vmatprep.subr.bf16.mxu0 0
      %1358 = vmatpush2.bf16.msra.mxu0 0
      %1359 = vmatprep.subr.bf16.mxu0 0
      %1360 = vmatpush2.bf16.msra.mxu0 0
      %1361 = vmatprep.mubr.bf16.mxu0 0
      %1362 = vmatmul.mubr.bf16.gmra.mxu0 %v1273
      %v1363 = vpop.f32.mrf.mxu0
      %v1364 = vadd.f32 0.0, %v1363
      %v1365 = vpop.f32.mrf.mxu0
      %v1366 = vpop.f32.mrf.mxu0
      %v1367 = vadd.f32 0.0, %v1366
      %v1368 = vpop.f32.mrf.mxu0
      %1369 = vmatprep.mubr.bf16.mxu0 0
      %1370 = vmatmul.mubr.bf16.gmra.mxu0 %v1276
      %v1371 = vpop.f32.mrf.mxu0
      %v1372 = vadd.f32 0.0, %v1371
      %v1373 = vpop.f32.mrf.mxu0
      %v1374 = vpop.f32.mrf.mxu0
      %v1375 = vadd.f32 0.0, %v1374
      %v1376 = vpop.f32.mrf.mxu0
      %1377 = vmatprep.mubr.bf16.mxu0 0
      %1378 = vmatmul.mubr.bf16.gmra.mxu0 %v1279
      %v1379 = vpop.f32.mrf.mxu0
      %v1380 = vadd.f32 0.0, %v1379
      %v1381 = vpop.f32.mrf.mxu0
      %v1382 = vpop.f32.mrf.mxu0
      %v1383 = vadd.f32 0.0, %v1382
      %v1384 = vpop.f32.mrf.mxu0
      %1385 = vmatprep.mubr.bf16.mxu0 0
      %1386 = vmatmul.mubr.bf16.gmra.mxu0 %v1282
      %v1387 = vpop.f32.mrf.mxu0
      %v1388 = vadd.f32 0.0, %v1387
      %v1389 = vpop.f32.mrf.mxu0
      %v1390 = vpop.f32.mrf.mxu0
      %v1391 = vadd.f32 0.0, %v1390
      %v1392 = vpop.f32.mrf.mxu0
      %1393 = vmatprep.mubr.bf16.mxu0 0
      %1394 = vmatmul.mubr.bf16.gmra.mxu0 %v1285
      %v1395 = vpop.f32.mrf.mxu0
      %v1396 = vadd.f32 0.0, %v1395
      %v1397 = vpop.f32.mrf.mxu0
      %v1398 = vpop.f32.mrf.mxu0
      %v1399 = vadd.f32 0.0, %v1398
      %v1400 = vpop.f32.mrf.mxu0
      %1401 = vmatprep.mubr.bf16.mxu0 0
      %1402 = vmatmul.mubr.bf16.gmra.mxu0 %v1288
      %v1403 = vpop.f32.mrf.mxu0
      %v1404 = vadd.f32 0.0, %v1403
      %v1405 = vpop.f32.mrf.mxu0
      %v1406 = vpop.f32.mrf.mxu0
      %v1407 = vadd.f32 0.0, %v1406
      %v1408 = vpop.f32.mrf.mxu0
      %1409 = vmatprep.mubr.bf16.mxu0 0
      %1410 = vmatmul.mubr.bf16.gmra.mxu0 %v1291
      %v1411 = vpop.f32.mrf.mxu0
      %v1412 = vadd.f32 0.0, %v1411
      %v1413 = vpop.f32.mrf.mxu0
      %v1414 = vpop.f32.mrf.mxu0
      %v1415 = vadd.f32 0.0, %v1414
      %v1416 = vpop.f32.mrf.mxu0
      %1417 = vmatprep.mubr.bf16.mxu0 0
      %1418 = vmatmul.mubr.bf16.gmra.mxu0 %v1294
      %v1419 = vpop.f32.mrf.mxu0
      %v1420 = vadd.f32 0.0, %v1419
      %v1421 = vpop.f32.mrf.mxu0
      %v1422 = vpop.f32.mrf.mxu0
      %v1423 = vadd.f32 0.0, %v1422
      %v1424 = vpop.f32.mrf.mxu0
      %1425 = vmatprep.mubr.bf16.mxu0 0
      %1426 = vmatmul.mubr.bf16.gmra.mxu0 %v1297
      %v1427 = vpop.f32.mrf.mxu0
      %v1428 = vadd.f32 0.0, %v1427
      %v1429 = vpop.f32.mrf.mxu0
      %v1430 = vpop.f32.mrf.mxu0
      %v1431 = vadd.f32 0.0, %v1430
      %v1432 = vpop.f32.mrf.mxu0
      %1433 = vmatprep.mubr.bf16.mxu0 0
      %1434 = vmatmul.mubr.bf16.gmra.mxu0 %v1300
      %v1435 = vpop.f32.mrf.mxu0
      %v1436 = vadd.f32 0.0, %v1435
      %v1437 = vpop.f32.mrf.mxu0
      %v1438 = vpop.f32.mrf.mxu0
      %v1439 = vadd.f32 0.0, %v1438
      %v1440 = vpop.f32.mrf.mxu0
      %1441 = vmatprep.mubr.bf16.mxu0 0
      %1442 = vmatmul.mubr.bf16.gmra.mxu0 %v1303
      %v1443 = vpop.f32.mrf.mxu0
      %v1444 = vadd.f32 0.0, %v1443
      %v1445 = vpop.f32.mrf.mxu0
      %v1446 = vpop.f32.mrf.mxu0
      %v1447 = vadd.f32 0.0, %v1446
      %v1448 = vpop.f32.mrf.mxu0
      %1449 = vmatprep.mubr.bf16.mxu0 0
      %1450 = vmatmul.mubr.bf16.gmra.mxu0 %v1306
      %v1451 = vpop.f32.mrf.mxu0
      %v1452 = vadd.f32 0.0, %v1451
      %v1453 = vpop.f32.mrf.mxu0
      %v1454 = vpop.f32.mrf.mxu0
      %v1455 = vadd.f32 0.0, %v1454
      %v1456 = vpop.f32.mrf.mxu0
      %1457 = vmatprep.mubr.bf16.mxu0 0
      %1458 = vmatmul.mubr.bf16.gmra.mxu0 %v1309
      %v1459 = vpop.f32.mrf.mxu0
      %v1460 = vadd.f32 0.0, %v1459
      %v1461 = vpop.f32.mrf.mxu0
      %v1462 = vpop.f32.mrf.mxu0
      %v1463 = vadd.f32 0.0, %v1462
      %v1464 = vpop.f32.mrf.mxu0
      %1465 = vmatprep.mubr.bf16.mxu0 0
      %1466 = vmatmul.mubr.bf16.gmra.mxu0 %v1312
      %v1467 = vpop.f32.mrf.mxu0
      %v1468 = vadd.f32 0.0, %v1467
      %v1469 = vpop.f32.mrf.mxu0
      %v1470 = vpop.f32.mrf.mxu0
      %v1471 = vadd.f32 0.0, %v1470
      %v1472 = vpop.f32.mrf.mxu0
      %1473 = vmatprep.mubr.bf16.mxu0 0
      %1474 = vmatmul.mubr.bf16.gmra.mxu0 %v1315
      %v1475 = vpop.f32.mrf.mxu0
      %v1476 = vadd.f32 0.0, %v1475
      %v1477 = vpop.f32.mrf.mxu0
      %v1478 = vpop.f32.mrf.mxu0
      %v1479 = vadd.f32 0.0, %v1478
      %v1480 = vpop.f32.mrf.mxu0
      %1481 = vmatprep.mubr.bf16.mxu0 0
      %1482 = vmatmul.mubr.bf16.gmra.mxu0 %v1318
      %v1483 = vpop.f32.mrf.mxu0
      %v1484 = vadd.f32 0.0, %v1483
      %v1485 = vpop.f32.mrf.mxu0
      %v1486 = vpop.f32.mrf.mxu0
      %v1487 = vadd.f32 0.0, %v1486
      %v1488 = vpop.f32.mrf.mxu0
      %1489 = vmatprep.mubr.bf16.mxu0 0
      %1490 = vmatmul.mubr.bf16.gmra.mxu0 %v1321
      %v1491 = vpop.f32.mrf.mxu0
      %v1492 = vadd.f32 0.0, %v1491
      %v1493 = vpop.f32.mrf.mxu0
      %v1494 = vpop.f32.mrf.mxu0
      %v1495 = vadd.f32 0.0, %v1494
      %v1496 = vpop.f32.mrf.mxu0
      %1497 = vmatprep.mubr.bf16.mxu0 0
      %1498 = vmatmul.mubr.bf16.gmra.mxu0 %v1324
      %v1499 = vpop.f32.mrf.mxu0
      %v1500 = vadd.f32 0.0, %v1499
      %v1501 = vpop.f32.mrf.mxu0
      %v1502 = vpop.f32.mrf.mxu0
      %v1503 = vadd.f32 0.0, %v1502
      %v1504 = vpop.f32.mrf.mxu0
      %1505 = vdwg.mxu0
      %v1506 = vadd.f32 %v1177, %v1364
      %v1507 = vadd.f32 %v1178, %v1367
      %v1508 = vadd.f32 %v1179, %v1372
      %v1509 = vadd.f32 %v1180, %v1375
      %v1510 = vadd.f32 %v1181, %v1380
      %v1511 = vadd.f32 %v1182, %v1383
      %v1512 = vadd.f32 %v1183, %v1388
      %v1513 = vadd.f32 %v1184, %v1391
      %v1514 = vadd.f32 %v1185, %v1396
      %v1515 = vadd.f32 %v1186, %v1399
      %v1516 = vadd.f32 %v1187, %v1404
      %v1517 = vadd.f32 %v1188, %v1407
      %v1518 = vadd.f32 %v1189, %v1412
      %v1519 = vadd.f32 %v1190, %v1415
      %v1520 = vadd.f32 %v1191, %v1420
      %v1521 = vadd.f32 %v1192, %v1423
      %v1522 = vadd.f32 %v1193, %v1428
      %v1523 = vadd.f32 %v1194, %v1431
      %v1524 = vadd.f32 %v1195, %v1436
      %v1525 = vadd.f32 %v1196, %v1439
      %v1526 = vadd.f32 %v1197, %v1444
      %v1527 = vadd.f32 %v1198, %v1447
      %v1528 = vadd.f32 %v1199, %v1452
      %v1529 = vadd.f32 %v1200, %v1455
      %v1530 = vadd.f32 %v1201, %v1460
      %v1531 = vadd.f32 %v1202, %v1463
      %v1532 = vadd.f32 %v1203, %v1468
      %v1533 = vadd.f32 %v1204, %v1471
      %v1534 = vadd.f32 %v1205, %v1476
      %v1535 = vadd.f32 %v1206, %v1479
      %v1536 = vadd.f32 %v1207, %v1484
      %v1537 = vadd.f32 %v1208, %v1487
      %v1538 = vadd.f32 %v1209, %v1492
      %v1539 = vadd.f32 %v1210, %v1495
      %v1540 = vadd.f32 %v1211, %v1500
      %v1541 = vadd.f32 %v1212, %v1503
      %1542 = vst.msk [vmem:[#allocation2] sm:$0xff] %vm664, %v1506
      %1543 = vst.msk [vmem:[#allocation2 + $0x8] sm:$0xff] %vm664, %v1507
      %1544 = vst.msk [vmem:[#allocation2 + $0x10] sm:$0xff] %vm664, %v1508
      %1545 = vst.msk [vmem:[#allocation2 + $0x18] sm:$0xff] %vm664, %v1509
      %1546 = vst.msk [vmem:[#allocation2 + $0x20] sm:$0xff] %vm664, %v1510
      %1547 = vst.msk [vmem:[#allocation2 + $0x28] sm:$0xff] %vm664, %v1511
      %1548 = vst.msk [vmem:[#allocation2 + $0x30] sm:$0xff] %vm664, %v1512
      %1549 = vst.msk [vmem:[#allocation2 + $0x38] sm:$0xff] %vm664, %v1513
      %1550 = vst.msk [vmem:[#allocation2 + $0x40] sm:$0xff] %vm664, %v1514
      %1551 = vst.msk [vmem:[#allocation2 + $0x48] sm:$0xff] %vm664, %v1515
      %1552 = vst.msk [vmem:[#allocation2 + $0x50] sm:$0xff] %vm664, %v1516
      %1553 = vst.msk [vmem:[#allocation2 + $0x58] sm:$0xff] %vm664, %v1517
      %1554 = vst.msk [vmem:[#allocation2 + $0x60] sm:$0xff] %vm664, %v1518
      %1555 = vst.msk [vmem:[#allocation2 + $0x68] sm:$0xff] %vm664, %v1519
      %1556 = vst.msk [vmem:[#allocation2 + $0x70] sm:$0xff] %vm664, %v1520
      %1557 = vst.msk [vmem:[#allocation2 + $0x78] sm:$0xff] %vm664, %v1521
      %1558 = vst.msk [vmem:[#allocation2 + $0x80] sm:$0xff] %vm664, %v1522
      %1559 = vst.msk [vmem:[#allocation2 + $0x88] sm:$0xff] %vm664, %v1523
      %1560 = vst.msk [vmem:[#allocation2 + $0x90] sm:$0xff] %vm664, %v1524
      %1561 = vst.msk [vmem:[#allocation2 + $0x98] sm:$0xff] %vm664, %v1525
      %1562 = vst.msk [vmem:[#allocation2 + $0xa0] sm:$0xff] %vm664, %v1526
      %1563 = vst.msk [vmem:[#allocation2 + $0xa8] sm:$0xff] %vm664, %v1527
      %1564 = vst.msk [vmem:[#allocation2 + $0xb0] sm:$0xff] %vm664, %v1528
      %1565 = vst.msk [vmem:[#allocation2 + $0xb8] sm:$0xff] %vm664, %v1529
      %1566 = vst.msk [vmem:[#allocation2 + $0xc0] sm:$0xff] %vm664, %v1530
      %1567 = vst.msk [vmem:[#allocation2 + $0xc8] sm:$0xff] %vm664, %v1531
      %1568 = vst.msk [vmem:[#allocation2 + $0xd0] sm:$0xff] %vm664, %v1532
      %1569 = vst.msk [vmem:[#allocation2 + $0xd8] sm:$0xff] %vm664, %v1533
      %1570 = vst.msk [vmem:[#allocation2 + $0xe0] sm:$0xff] %vm664, %v1534
      %1571 = vst.msk [vmem:[#allocation2 + $0xe8] sm:$0xff] %vm664, %v1535
      %1572 = vst.msk [vmem:[#allocation2 + $0xf0] sm:$0xff] %vm664, %v1536
      %1573 = vst.msk [vmem:[#allocation2 + $0xf8] sm:$0xff] %vm664, %v1537
      %1574 = vst.msk [vmem:[#allocation2 + $0x100] sm:$0xff] %vm664, %v1538
      %1575 = vst.msk [vmem:[#allocation2 + $0x108] sm:$0xff] %vm664, %v1539
      %1576 = vst.msk [vmem:[#allocation2 + $0x110] sm:$0xff] %vm664, %v1540
      %1577 = vst.msk [vmem:[#allocation2 + $0x118] sm:$0xff] %vm664, %v1541
      %v1578 = vpack.c.bf16 %v330, %v329
      %v1579 = vpack.c.bf16 %v331, %v331
      %v1580 = vld [vmem:[#allocation2] sm:$0xff]
      %v1581 = vld [vmem:[#allocation2 + $0x8] sm:$0xff]
      %v1582 = vld [vmem:[#allocation2 + $0x10] sm:$0xff]
      %v1583 = vld [vmem:[#allocation2 + $0x18] sm:$0xff]
      %v1584 = vld [vmem:[#allocation2 + $0x20] sm:$0xff]
      %v1585 = vld [vmem:[#allocation2 + $0x28] sm:$0xff]
      %v1586 = vld [vmem:[#allocation2 + $0x30] sm:$0xff]
      %v1587 = vld [vmem:[#allocation2 + $0x38] sm:$0xff]
      %v1588 = vld [vmem:[#allocation2 + $0x40] sm:$0xff]
      %v1589 = vld [vmem:[#allocation2 + $0x48] sm:$0xff]
      %v1590 = vld [vmem:[#allocation2 + $0x50] sm:$0xff]
      %v1591 = vld [vmem:[#allocation2 + $0x58] sm:$0xff]
      %v1592 = vld [vmem:[#allocation2 + $0x60] sm:$0xff]
      %v1593 = vld [vmem:[#allocation2 + $0x68] sm:$0xff]
      %v1594 = vld [vmem:[#allocation2 + $0x70] sm:$0xff]
      %v1595 = vld [vmem:[#allocation2 + $0x78] sm:$0xff]
      %v1596 = vld [vmem:[#allocation2 + $0x80] sm:$0xff]
      %v1597 = vld [vmem:[#allocation2 + $0x88] sm:$0xff]
      %v1598 = vld [vmem:[#allocation2 + $0x90] sm:$0xff]
      %v1599 = vld [vmem:[#allocation2 + $0x98] sm:$0xff]
      %v1600 = vld [vmem:[#allocation2 + $0xa0] sm:$0xff]
      %v1601 = vld [vmem:[#allocation2 + $0xa8] sm:$0xff]
      %v1602 = vld [vmem:[#allocation2 + $0xb0] sm:$0xff]
      %v1603 = vld [vmem:[#allocation2 + $0xb8] sm:$0xff]
      %v1604 = vld [vmem:[#allocation2 + $0xc0] sm:$0xff]
      %v1605 = vld [vmem:[#allocation2 + $0xc8] sm:$0xff]
      %v1606 = vld [vmem:[#allocation2 + $0xd0] sm:$0xff]
      %v1607 = vld [vmem:[#allocation2 + $0xd8] sm:$0xff]
      %v1608 = vld [vmem:[#allocation2 + $0xe0] sm:$0xff]
      %v1609 = vld [vmem:[#allocation2 + $0xe8] sm:$0xff]
      %v1610 = vld [vmem:[#allocation2 + $0xf0] sm:$0xff]
      %v1611 = vld [vmem:[#allocation2 + $0xf8] sm:$0xff]
      %v1612 = vld [vmem:[#allocation2 + $0x100] sm:$0xff]
      %v1613 = vld [vmem:[#allocation2 + $0x108] sm:$0xff]
      %v1614 = vld [vmem:[#allocation2 + $0x110] sm:$0xff]
      %v1615 = vld [vmem:[#allocation2 + $0x118] sm:$0xff]
      %s1616 = scalar_lea.vmem %s239, 6
      %v1617 = vld [vmem:[%s1616] sm:$0x3]
      %v1620 = vrot.slane %v1578, 1
      %v1621 = vsel %vm1234, %v1268, %v1620
      %v1622 = vrot.slane %v1579, 1
      %v1623 = vsel %vm1234, %v1620, %v1622
      %v1625 = vsel %vm389, %v1621, 0
      %v1628 = vsel %vm389, %v1623, 0
      %v1631 = vand.u32 %v1617, %v447
      %1633 = vmatprep.subr.bf16.mxu0 0
      %1634 = vmatpush1.bf16.msra.mxu0 0
      %1635 = vmatprep.subr.bf16.mxu0 0
      %1636 = vmatpush1.bf16.msra.mxu0 0
      %1637 = vmatprep.subr.bf16.mxu0 0
      %1638 = vmatpush1.bf16.msra.mxu0 0
      %1639 = vmatprep.subr.bf16.mxu0 0
      %1640 = vmatpush1.bf16.msra.mxu0 0
      %1641 = vmatprep.subr.bf16.mxu0 0
      %1642 = vmatpush1.bf16.msra.mxu0 0
      %1643 = vmatprep.subr.bf16.mxu0 0
      %1644 = vmatpush1.bf16.msra.mxu0 0
      %1645 = vmatprep.subr.bf16.mxu0 0
      %1646 = vmatpush1.bf16.msra.mxu0 0
      %1647 = vmatprep.subr.bf16.mxu0 0
      %1648 = vmatpush1.bf16.msra.mxu0 %v1631
      %1649 = vmatprep.subr.bf16.mxu0 0
      %1650 = vmatpush2.bf16.msra.mxu0 0
      %1651 = vmatprep.subr.bf16.mxu0 0
      %1652 = vmatpush2.bf16.msra.mxu0 0
      %1653 = vmatprep.subr.bf16.mxu0 0
      %1654 = vmatpush2.bf16.msra.mxu0 0
      %1655 = vmatprep.subr.bf16.mxu0 0
      %1656 = vmatpush2.bf16.msra.mxu0 0
      %1657 = vmatprep.subr.bf16.mxu0 0
      %1658 = vmatpush2.bf16.msra.mxu0 0
      %1659 = vmatprep.subr.bf16.mxu0 0
      %1660 = vmatpush2.bf16.msra.mxu0 0
      %1661 = vmatprep.subr.bf16.mxu0 0
      %1662 = vmatpush2.bf16.msra.mxu0 0
      %1663 = vmatprep.subr.bf16.mxu0 0
      %1664 = vmatpush2.bf16.msra.mxu0 0
      %1665 = vmatprep.mubr.bf16.mxu0 0
      %1666 = vmatmul.mubr.bf16.gmra.mxu0 %v1276
      %v1667 = vpop.f32.mrf.mxu0
      %v1668 = vadd.f32 0.0, %v1667
      %v1669 = vpop.f32.mrf.mxu0
      %v1670 = vpop.f32.mrf.mxu0
      %v1671 = vadd.f32 0.0, %v1670
      %v1672 = vpop.f32.mrf.mxu0
      %1673 = vmatprep.mubr.bf16.mxu0 0
      %1674 = vmatmul.mubr.bf16.gmra.mxu0 %v1279
      %v1675 = vpop.f32.mrf.mxu0
      %v1676 = vadd.f32 0.0, %v1675
      %v1677 = vpop.f32.mrf.mxu0
      %v1678 = vpop.f32.mrf.mxu0
      %v1679 = vadd.f32 0.0, %v1678
      %v1680 = vpop.f32.mrf.mxu0
      %1681 = vmatprep.mubr.bf16.mxu0 0
      %1682 = vmatmul.mubr.bf16.gmra.mxu0 %v1282
      %v1683 = vpop.f32.mrf.mxu0
      %v1684 = vadd.f32 0.0, %v1683
      %v1685 = vpop.f32.mrf.mxu0
      %v1686 = vpop.f32.mrf.mxu0
      %v1687 = vadd.f32 0.0, %v1686
      %v1688 = vpop.f32.mrf.mxu0
      %1689 = vmatprep.mubr.bf16.mxu0 0
      %1690 = vmatmul.mubr.bf16.gmra.mxu0 %v1285
      %v1691 = vpop.f32.mrf.mxu0
      %v1692 = vadd.f32 0.0, %v1691
      %v1693 = vpop.f32.mrf.mxu0
      %v1694 = vpop.f32.mrf.mxu0
      %v1695 = vadd.f32 0.0, %v1694
      %v1696 = vpop.f32.mrf.mxu0
      %1697 = vmatprep.mubr.bf16.mxu0 0
      %1698 = vmatmul.mubr.bf16.gmra.mxu0 %v1288
      %v1699 = vpop.f32.mrf.mxu0
      %v1700 = vadd.f32 0.0, %v1699
      %v1701 = vpop.f32.mrf.mxu0
      %v1702 = vpop.f32.mrf.mxu0
      %v1703 = vadd.f32 0.0, %v1702
      %v1704 = vpop.f32.mrf.mxu0
      %1705 = vmatprep.mubr.bf16.mxu0 0
      %1706 = vmatmul.mubr.bf16.gmra.mxu0 %v1291
      %v1707 = vpop.f32.mrf.mxu0
      %v1708 = vadd.f32 0.0, %v1707
      %v1709 = vpop.f32.mrf.mxu0
      %v1710 = vpop.f32.mrf.mxu0
      %v1711 = vadd.f32 0.0, %v1710
      %v1712 = vpop.f32.mrf.mxu0
      %1713 = vmatprep.mubr.bf16.mxu0 0
      %1714 = vmatmul.mubr.bf16.gmra.mxu0 %v1294
      %v1715 = vpop.f32.mrf.mxu0
      %v1716 = vadd.f32 0.0, %v1715
      %v1717 = vpop.f32.mrf.mxu0
      %v1718 = vpop.f32.mrf.mxu0
      %v1719 = vadd.f32 0.0, %v1718
      %v1720 = vpop.f32.mrf.mxu0
      %1721 = vmatprep.mubr.bf16.mxu0 0
      %1722 = vmatmul.mubr.bf16.gmra.mxu0 %v1297
      %v1723 = vpop.f32.mrf.mxu0
      %v1724 = vadd.f32 0.0, %v1723
      %v1725 = vpop.f32.mrf.mxu0
      %v1726 = vpop.f32.mrf.mxu0
      %v1727 = vadd.f32 0.0, %v1726
      %v1728 = vpop.f32.mrf.mxu0
      %1729 = vmatprep.mubr.bf16.mxu0 0
      %1730 = vmatmul.mubr.bf16.gmra.mxu0 %v1300
      %v1731 = vpop.f32.mrf.mxu0
      %v1732 = vadd.f32 0.0, %v1731
      %v1733 = vpop.f32.mrf.mxu0
      %v1734 = vpop.f32.mrf.mxu0
      %v1735 = vadd.f32 0.0, %v1734
      %v1736 = vpop.f32.mrf.mxu0
      %1737 = vmatprep.mubr.bf16.mxu0 0
      %1738 = vmatmul.mubr.bf16.gmra.mxu0 %v1303
      %v1739 = vpop.f32.mrf.mxu0
      %v1740 = vadd.f32 0.0, %v1739
      %v1741 = vpop.f32.mrf.mxu0
      %v1742 = vpop.f32.mrf.mxu0
      %v1743 = vadd.f32 0.0, %v1742
      %v1744 = vpop.f32.mrf.mxu0
      %1745 = vmatprep.mubr.bf16.mxu0 0
      %1746 = vmatmul.mubr.bf16.gmra.mxu0 %v1306
      %v1747 = vpop.f32.mrf.mxu0
      %v1748 = vadd.f32 0.0, %v1747
      %v1749 = vpop.f32.mrf.mxu0
      %v1750 = vpop.f32.mrf.mxu0
      %v1751 = vadd.f32 0.0, %v1750
      %v1752 = vpop.f32.mrf.mxu0
      %1753 = vmatprep.mubr.bf16.mxu0 0
      %1754 = vmatmul.mubr.bf16.gmra.mxu0 %v1309
      %v1755 = vpop.f32.mrf.mxu0
      %v1756 = vadd.f32 0.0, %v1755
      %v1757 = vpop.f32.mrf.mxu0
      %v1758 = vpop.f32.mrf.mxu0
      %v1759 = vadd.f32 0.0, %v1758
      %v1760 = vpop.f32.mrf.mxu0
      %1761 = vmatprep.mubr.bf16.mxu0 0
      %1762 = vmatmul.mubr.bf16.gmra.mxu0 %v1312
      %v1763 = vpop.f32.mrf.mxu0
      %v1764 = vadd.f32 0.0, %v1763
      %v1765 = vpop.f32.mrf.mxu0
      %v1766 = vpop.f32.mrf.mxu0
      %v1767 = vadd.f32 0.0, %v1766
      %v1768 = vpop.f32.mrf.mxu0
      %1769 = vmatprep.mubr.bf16.mxu0 0
      %1770 = vmatmul.mubr.bf16.gmra.mxu0 %v1315
      %v1771 = vpop.f32.mrf.mxu0
      %v1772 = vadd.f32 0.0, %v1771
      %v1773 = vpop.f32.mrf.mxu0
      %v1774 = vpop.f32.mrf.mxu0
      %v1775 = vadd.f32 0.0, %v1774
      %v1776 = vpop.f32.mrf.mxu0
      %1777 = vmatprep.mubr.bf16.mxu0 0
      %1778 = vmatmul.mubr.bf16.gmra.mxu0 %v1318
      %v1779 = vpop.f32.mrf.mxu0
      %v1780 = vadd.f32 0.0, %v1779
      %v1781 = vpop.f32.mrf.mxu0
      %v1782 = vpop.f32.mrf.mxu0
      %v1783 = vadd.f32 0.0, %v1782
      %v1784 = vpop.f32.mrf.mxu0
      %1785 = vmatprep.mubr.bf16.mxu0 0
      %1786 = vmatmul.mubr.bf16.gmra.mxu0 %v1321
      %v1787 = vpop.f32.mrf.mxu0
      %v1788 = vadd.f32 0.0, %v1787
      %v1789 = vpop.f32.mrf.mxu0
      %v1790 = vpop.f32.mrf.mxu0
      %v1791 = vadd.f32 0.0, %v1790
      %v1792 = vpop.f32.mrf.mxu0
      %1793 = vmatprep.mubr.bf16.mxu0 0
      %1794 = vmatmul.mubr.bf16.gmra.mxu0 %v1625
      %v1795 = vpop.f32.mrf.mxu0
      %v1796 = vadd.f32 0.0, %v1795
      %v1797 = vpop.f32.mrf.mxu0
      %v1798 = vpop.f32.mrf.mxu0
      %v1799 = vadd.f32 0.0, %v1798
      %v1800 = vpop.f32.mrf.mxu0
      %1801 = vmatprep.mubr.bf16.mxu0 0
      %1802 = vmatmul.mubr.bf16.gmra.mxu0 %v1628
      %v1803 = vpop.f32.mrf.mxu0
      %v1804 = vadd.f32 0.0, %v1803
      %v1805 = vpop.f32.mrf.mxu0
      %v1806 = vpop.f32.mrf.mxu0
      %v1807 = vadd.f32 0.0, %v1806
      %v1808 = vpop.f32.mrf.mxu0
      %1809 = vdwg.mxu0
      %v1810 = vadd.f32 %v1580, %v1668
      %v1811 = vadd.f32 %v1581, %v1671
      %v1812 = vadd.f32 %v1582, %v1676
      %v1813 = vadd.f32 %v1583, %v1679
      %v1814 = vadd.f32 %v1584, %v1684
      %v1815 = vadd.f32 %v1585, %v1687
      %v1816 = vadd.f32 %v1586, %v1692
      %v1817 = vadd.f32 %v1587, %v1695
      %v1818 = vadd.f32 %v1588, %v1700
      %v1819 = vadd.f32 %v1589, %v1703
      %v1820 = vadd.f32 %v1590, %v1708
      %v1821 = vadd.f32 %v1591, %v1711
      %v1822 = vadd.f32 %v1592, %v1716
      %v1823 = vadd.f32 %v1593, %v1719
      %v1824 = vadd.f32 %v1594, %v1724
      %v1825 = vadd.f32 %v1595, %v1727
      %v1826 = vadd.f32 %v1596, %v1732
      %v1827 = vadd.f32 %v1597, %v1735
      %v1828 = vadd.f32 %v1598, %v1740
      %v1829 = vadd.f32 %v1599, %v1743
      %v1830 = vadd.f32 %v1600, %v1748
      %v1831 = vadd.f32 %v1601, %v1751
      %v1832 = vadd.f32 %v1602, %v1756
      %v1833 = vadd.f32 %v1603, %v1759
      %v1834 = vadd.f32 %v1604, %v1764
      %v1835 = vadd.f32 %v1605, %v1767
      %v1836 = vadd.f32 %v1606, %v1772
      %v1837 = vadd.f32 %v1607, %v1775
      %v1838 = vadd.f32 %v1608, %v1780
      %v1839 = vadd.f32 %v1609, %v1783
      %v1840 = vadd.f32 %v1610, %v1788
      %v1841 = vadd.f32 %v1611, %v1791
      %v1842 = vadd.f32 %v1612, %v1796
      %v1843 = vadd.f32 %v1613, %v1799
      %v1844 = vadd.f32 %v1614, %v1804
      %v1845 = vadd.f32 %v1615, %v1807
      %1846 = vst.msk [vmem:[#allocation2] sm:$0xff] %vm664, %v1810
      %1847 = vst.msk [vmem:[#allocation2 + $0x8] sm:$0xff] %vm664, %v1811
      %1848 = vst.msk [vmem:[#allocation2 + $0x10] sm:$0xff] %vm664, %v1812
      %1849 = vst.msk [vmem:[#allocation2 + $0x18] sm:$0xff] %vm664, %v1813
      %1850 = vst.msk [vmem:[#allocation2 + $0x20] sm:$0xff] %vm664, %v1814
      %1851 = vst.msk [vmem:[#allocation2 + $0x28] sm:$0xff] %vm664, %v1815
      %1852 = vst.msk [vmem:[#allocation2 + $0x30] sm:$0xff] %vm664, %v1816
      %1853 = vst.msk [vmem:[#allocation2 + $0x38] sm:$0xff] %vm664, %v1817
      %1854 = vst.msk [vmem:[#allocation2 + $0x40] sm:$0xff] %vm664, %v1818
      %1855 = vst.msk [vmem:[#allocation2 + $0x48] sm:$0xff] %vm664, %v1819
      %1856 = vst.msk [vmem:[#allocation2 + $0x50] sm:$0xff] %vm664, %v1820
      %1857 = vst.msk [vmem:[#allocation2 + $0x58] sm:$0xff] %vm664, %v1821
      %1858 = vst.msk [vmem:[#allocation2 + $0x60] sm:$0xff] %vm664, %v1822
      %1859 = vst.msk [vmem:[#allocation2 + $0x68] sm:$0xff] %vm664, %v1823
      %1860 = vst.msk [vmem:[#allocation2 + $0x70] sm:$0xff] %vm664, %v1824
      %1861 = vst.msk [vmem:[#allocation2 + $0x78] sm:$0xff] %vm664, %v1825
      %1862 = vst.msk [vmem:[#allocation2 + $0x80] sm:$0xff] %vm664, %v1826
      %1863 = vst.msk [vmem:[#allocation2 + $0x88] sm:$0xff] %vm664, %v1827
      %1864 = vst.msk [vmem:[#allocation2 + $0x90] sm:$0xff] %vm664, %v1828
      %1865 = vst.msk [vmem:[#allocation2 + $0x98] sm:$0xff] %vm664, %v1829
      %1866 = vst.msk [vmem:[#allocation2 + $0xa0] sm:$0xff] %vm664, %v1830
      %1867 = vst.msk [vmem:[#allocation2 + $0xa8] sm:$0xff] %vm664, %v1831
      %1868 = vst.msk [vmem:[#allocation2 + $0xb0] sm:$0xff] %vm664, %v1832
      %1869 = vst.msk [vmem:[#allocation2 + $0xb8] sm:$0xff] %vm664, %v1833
      %1870 = vst.msk [vmem:[#allocation2 + $0xc0] sm:$0xff] %vm664, %v1834
      %1871 = vst.msk [vmem:[#allocation2 + $0xc8] sm:$0xff] %vm664, %v1835
      %1872 = vst.msk [vmem:[#allocation2 + $0xd0] sm:$0xff] %vm664, %v1836
      %1873 = vst.msk [vmem:[#allocation2 + $0xd8] sm:$0xff] %vm664, %v1837
      %1874 = vst.msk [vmem:[#allocation2 + $0xe0] sm:$0xff] %vm664, %v1838
      %1875 = vst.msk [vmem:[#allocation2 + $0xe8] sm:$0xff] %vm664, %v1839
      %1876 = vst.msk [vmem:[#allocation2 + $0xf0] sm:$0xff] %vm664, %v1840
      %1877 = vst.msk [vmem:[#allocation2 + $0xf8] sm:$0xff] %vm664, %v1841
      %1878 = vst.msk [vmem:[#allocation2 + $0x100] sm:$0xff] %vm664, %v1842
      %1879 = vst.msk [vmem:[#allocation2 + $0x108] sm:$0xff] %vm664, %v1843
      %1880 = vst.msk [vmem:[#allocation2 + $0x110] sm:$0xff] %vm664, %v1844
      %1881 = vst.msk [vmem:[#allocation2 + $0x118] sm:$0xff] %vm664, %v1845
      %v1882 = vld [vmem:[#allocation2] sm:$0xff]
      %v1883 = vld [vmem:[#allocation2 + $0x8] sm:$0xff]
      %v1884 = vld [vmem:[#allocation2 + $0x10] sm:$0xff]
      %v1885 = vld [vmem:[#allocation2 + $0x18] sm:$0xff]
      %v1886 = vld [vmem:[#allocation2 + $0x20] sm:$0xff]
      %v1887 = vld [vmem:[#allocation2 + $0x28] sm:$0xff]
      %v1888 = vld [vmem:[#allocation2 + $0x30] sm:$0xff]
      %v1889 = vld [vmem:[#allocation2 + $0x38] sm:$0xff]
      %v1890 = vld [vmem:[#allocation2 + $0x40] sm:$0xff]
      %v1891 = vld [vmem:[#allocation2 + $0x48] sm:$0xff]
      %v1892 = vld [vmem:[#allocation2 + $0x50] sm:$0xff]
      %v1893 = vld [vmem:[#allocation2 + $0x58] sm:$0xff]
      %v1894 = vld [vmem:[#allocation2 + $0x60] sm:$0xff]
      %v1895 = vld [vmem:[#allocation2 + $0x68] sm:$0xff]
      %v1896 = vld [vmem:[#allocation2 + $0x70] sm:$0xff]
      %v1897 = vld [vmem:[#allocation2 + $0x78] sm:$0xff]
      %v1898 = vld [vmem:[#allocation2 + $0x80] sm:$0xff]
      %v1899 = vld [vmem:[#allocation2 + $0x88] sm:$0xff]
      %v1900 = vld [vmem:[#allocation2 + $0x90] sm:$0xff]
      %v1901 = vld [vmem:[#allocation2 + $0x98] sm:$0xff]
      %v1902 = vld [vmem:[#allocation2 + $0xa0] sm:$0xff]
      %v1903 = vld [vmem:[#allocation2 + $0xa8] sm:$0xff]
      %v1904 = vld [vmem:[#allocation2 + $0xb0] sm:$0xff]
      %v1905 = vld [vmem:[#allocation2 + $0xb8] sm:$0xff]
      %v1906 = vld [vmem:[#allocation2 + $0xc0] sm:$0xff]
      %v1907 = vld [vmem:[#allocation2 + $0xc8] sm:$0xff]
      %v1908 = vld [vmem:[#allocation2 + $0xd0] sm:$0xff]
      %v1909 = vld [vmem:[#allocation2 + $0xd8] sm:$0xff]
      %v1910 = vld [vmem:[#allocation2 + $0xe0] sm:$0xff]
      %v1911 = vld [vmem:[#allocation2 + $0xe8] sm:$0xff]
      %v1912 = vld [vmem:[#allocation2 + $0xf0] sm:$0xff]
      %v1913 = vld [vmem:[#allocation2 + $0xf8] sm:$0xff]
      %v1914 = vld [vmem:[#allocation2 + $0x100] sm:$0xff]
      %v1915 = vld [vmem:[#allocation2 + $0x108] sm:$0xff]
      %v1916 = vld [vmem:[#allocation2 + $0x110] sm:$0xff]
      %v1917 = vld [vmem:[#allocation2 + $0x118] sm:$0xff]
      %s1918 = scalar_lea.vmem %s239, 8
      %v1919 = vld [vmem:[%s1918] sm:$0x3]
      %vm1920 = vsmask.f32 6400
      %v1921 = vrot.slane %v751, 1
      %v1922 = vrot.slane %v747, 2
      %v1923 = vor.u32 %v1921, %v1922
      %v1924 = vrot.slane %v758, 1
      %v1925 = vrot.slane %v754, 2
      %v1926 = vor.u32 %v1924, %v1925
      %v1927 = vsel %vm1920, %v1923, %v1926
      %v1928 = vrot.slane %v765, 1
      %v1929 = vrot.slane %v761, 2
      %v1930 = vor.u32 %v1928, %v1929
      %v1931 = vsel %vm1920, %v1926, %v1930
      %v1932 = vrot.slane %v772, 1
      %v1933 = vrot.slane %v768, 2
      %v1934 = vor.u32 %v1932, %v1933
      %v1935 = vsel %vm1920, %v1930, %v1934
      %v1936 = vrot.slane %v779, 1
      %v1937 = vrot.slane %v775, 2
      %v1938 = vor.u32 %v1936, %v1937
      %v1939 = vsel %vm1920, %v1934, %v1938
      %v1940 = vrot.slane %v786, 1
      %v1941 = vrot.slane %v782, 2
      %v1942 = vor.u32 %v1940, %v1941
      %v1943 = vsel %vm1920, %v1938, %v1942
      %v1944 = vrot.slane %v793, 1
      %v1945 = vrot.slane %v789, 2
      %v1946 = vor.u32 %v1944, %v1945
      %v1947 = vsel %vm1920, %v1942, %v1946
      %v1948 = vrot.slane %v800, 1
      %v1949 = vrot.slane %v796, 2
      %v1950 = vor.u32 %v1948, %v1949
      %v1951 = vsel %vm1920, %v1946, %v1950
      %v1952 = vrot.slane %v807, 1
      %v1953 = vrot.slane %v803, 2
      %v1954 = vor.u32 %v1952, %v1953
      %v1955 = vsel %vm1920, %v1950, %v1954
      %v1956 = vrot.slane %v814, 1
      %v1957 = vrot.slane %v810, 2
      %v1958 = vor.u32 %v1956, %v1957
      %v1959 = vsel %vm1920, %v1954, %v1958
      %v1960 = vrot.slane %v821, 1
      %v1961 = vrot.slane %v817, 2
      %v1962 = vor.u32 %v1960, %v1961
      %v1963 = vsel %vm1920, %v1958, %v1962
      %v1964 = vrot.slane %v828, 1
      %v1965 = vrot.slane %v824, 2
      %v1966 = vor.u32 %v1964, %v1965
      %v1967 = vsel %vm1920, %v1962, %v1966
      %v1968 = vrot.slane %v835, 1
      %v1969 = vrot.slane %v831, 2
      %v1970 = vor.u32 %v1968, %v1969
      %v1971 = vsel %vm1920, %v1966, %v1970
      %v1972 = vrot.slane %v842, 1
      %v1973 = vrot.slane %v838, 2
      %v1974 = vor.u32 %v1972, %v1973
      %v1975 = vsel %vm1920, %v1970, %v1974
      %v1976 = vrot.slane %v849, 1
      %v1977 = vrot.slane %v845, 2
      %v1978 = vor.u32 %v1976, %v1977
      %v1979 = vsel %vm1920, %v1974, %v1978
      %v1980 = vrot.slane %v856, 1
      %v1981 = vrot.slane %v852, 2
      %v1982 = vor.u32 %v1980, %v1981
      %v1983 = vsel %vm1920, %v1978, %v1982
      %v1984 = vrot.slane %v863, 1
      %v1985 = vrot.slane %v859, 2
      %v1986 = vor.u32 %v1984, %v1985
      %v1987 = vsel %vm1920, %v1982, %v1986
      %v1989 = vshrl.u32 %v1578, 16
      %v1991 = vrot.slane %v1989, 1
      %v1992 = vshll.u32 %v1578, 16
      %v1994 = vrot.slane %v1992, 2
      %v1995 = vor.u32 %v1991, %v1994
      %v1996 = vsel %vm1920, %v1986, %v1995
      %v1998 = vshrl.u32 %v1579, 16
      %v2000 = vrot.slane %v1998, 1
      %v2001 = vshll.u32 %v1579, 16
      %v2003 = vrot.slane %v2001, 2
      %v2004 = vor.u32 %v2000, %v2003
      %v2005 = vsel %vm1920, %v1995, %v2004
      %v2007 = vsel %vm389, %v1927, 0
      %v2010 = vsel %vm389, %v1931, 0
      %v2013 = vsel %vm389, %v1935, 0
      %v2016 = vsel %vm389, %v1939, 0
      %v2019 = vsel %vm389, %v1943, 0
      %v2022 = vsel %vm389, %v1947, 0
      %v2025 = vsel %vm389, %v1951, 0
      %v2028 = vsel %vm389, %v1955, 0
      %v2031 = vsel %vm389, %v1959, 0
      %v2034 = vsel %vm389, %v1963, 0
      %v2037 = vsel %vm389, %v1967, 0
      %v2040 = vsel %vm389, %v1971, 0
      %v2043 = vsel %vm389, %v1975, 0
      %v2046 = vsel %vm389, %v1979, 0
      %v2049 = vsel %vm389, %v1983, 0
      %v2052 = vsel %vm389, %v1987, 0
      %v2055 = vsel %vm389, %v1996, 0
      %v2058 = vsel %vm389, %v2005, 0
      %v2061 = vand.u32 %v1919, %v447
      %2063 = vmatprep.subr.bf16.mxu0 0
      %2064 = vmatpush1.bf16.msra.mxu0 0
      %2065 = vmatprep.subr.bf16.mxu0 0
      %2066 = vmatpush1.bf16.msra.mxu0 0
      %2067 = vmatprep.subr.bf16.mxu0 0
      %2068 = vmatpush1.bf16.msra.mxu0 0
      %2069 = vmatprep.subr.bf16.mxu0 0
      %2070 = vmatpush1.bf16.msra.mxu0 0
      %2071 = vmatprep.subr.bf16.mxu0 0
      %2072 = vmatpush1.bf16.msra.mxu0 0
      %2073 = vmatprep.subr.bf16.mxu0 0
      %2074 = vmatpush1.bf16.msra.mxu0 0
      %2075 = vmatprep.subr.bf16.mxu0 0
      %2076 = vmatpush1.bf16.msra.mxu0 0
      %2077 = vmatprep.subr.bf16.mxu0 0
      %2078 = vmatpush1.bf16.msra.mxu0 %v2061
      %2079 = vmatprep.subr.bf16.mxu0 0
      %2080 = vmatpush2.bf16.msra.mxu0 0
      %2081 = vmatprep.subr.bf16.mxu0 0
      %2082 = vmatpush2.bf16.msra.mxu0 0
      %2083 = vmatprep.subr.bf16.mxu0 0
      %2084 = vmatpush2.bf16.msra.mxu0 0
      %2085 = vmatprep.subr.bf16.mxu0 0
      %2086 = vmatpush2.bf16.msra.mxu0 0
      %2087 = vmatprep.subr.bf16.mxu0 0
      %2088 = vmatpush2.bf16.msra.mxu0 0
      %2089 = vmatprep.subr.bf16.mxu0 0
      %2090 = vmatpush2.bf16.msra.mxu0 0
      %2091 = vmatprep.subr.bf16.mxu0 0
      %2092 = vmatpush2.bf16.msra.mxu0 0
      %2093 = vmatprep.subr.bf16.mxu0 0
      %2094 = vmatpush2.bf16.msra.mxu0 0
      %2095 = vmatprep.mubr.bf16.mxu0 0
      %2096 = vmatmul.mubr.bf16.gmra.mxu0 %v2007
      %v2097 = vpop.f32.mrf.mxu0
      %v2098 = vadd.f32 0.0, %v2097
      %v2099 = vpop.f32.mrf.mxu0
      %v2100 = vpop.f32.mrf.mxu0
      %v2101 = vadd.f32 0.0, %v2100
      %v2102 = vpop.f32.mrf.mxu0
      %2103 = vmatprep.mubr.bf16.mxu0 0
      %2104 = vmatmul.mubr.bf16.gmra.mxu0 %v2010
      %v2105 = vpop.f32.mrf.mxu0
      %v2106 = vadd.f32 0.0, %v2105
      %v2107 = vpop.f32.mrf.mxu0
      %v2108 = vpop.f32.mrf.mxu0
      %v2109 = vadd.f32 0.0, %v2108
      %v2110 = vpop.f32.mrf.mxu0
      %2111 = vmatprep.mubr.bf16.mxu0 0
      %2112 = vmatmul.mubr.bf16.gmra.mxu0 %v2013
      %v2113 = vpop.f32.mrf.mxu0
      %v2114 = vadd.f32 0.0, %v2113
      %v2115 = vpop.f32.mrf.mxu0
      %v2116 = vpop.f32.mrf.mxu0
      %v2117 = vadd.f32 0.0, %v2116
      %v2118 = vpop.f32.mrf.mxu0
      %2119 = vmatprep.mubr.bf16.mxu0 0
      %2120 = vmatmul.mubr.bf16.gmra.mxu0 %v2016
      %v2121 = vpop.f32.mrf.mxu0
      %v2122 = vadd.f32 0.0, %v2121
      %v2123 = vpop.f32.mrf.mxu0
      %v2124 = vpop.f32.mrf.mxu0
      %v2125 = vadd.f32 0.0, %v2124
      %v2126 = vpop.f32.mrf.mxu0
      %2127 = vmatprep.mubr.bf16.mxu0 0
      %2128 = vmatmul.mubr.bf16.gmra.mxu0 %v2019
      %v2129 = vpop.f32.mrf.mxu0
      %v2130 = vadd.f32 0.0, %v2129
      %v2131 = vpop.f32.mrf.mxu0
      %v2132 = vpop.f32.mrf.mxu0
      %v2133 = vadd.f32 0.0, %v2132
      %v2134 = vpop.f32.mrf.mxu0
      %2135 = vmatprep.mubr.bf16.mxu0 0
      %2136 = vmatmul.mubr.bf16.gmra.mxu0 %v2022
      %v2137 = vpop.f32.mrf.mxu0
      %v2138 = vadd.f32 0.0, %v2137
      %v2139 = vpop.f32.mrf.mxu0
      %v2140 = vpop.f32.mrf.mxu0
      %v2141 = vadd.f32 0.0, %v2140
      %v2142 = vpop.f32.mrf.mxu0
      %2143 = vmatprep.mubr.bf16.mxu0 0
      %2144 = vmatmul.mubr.bf16.gmra.mxu0 %v2025
      %v2145 = vpop.f32.mrf.mxu0
      %v2146 = vadd.f32 0.0, %v2145
      %v2147 = vpop.f32.mrf.mxu0
      %v2148 = vpop.f32.mrf.mxu0
      %v2149 = vadd.f32 0.0, %v2148
      %v2150 = vpop.f32.mrf.mxu0
      %2151 = vmatprep.mubr.bf16.mxu0 0
      %2152 = vmatmul.mubr.bf16.gmra.mxu0 %v2028
      %v2153 = vpop.f32.mrf.mxu0
      %v2154 = vadd.f32 0.0, %v2153
      %v2155 = vpop.f32.mrf.mxu0
      %v2156 = vpop.f32.mrf.mxu0
      %v2157 = vadd.f32 0.0, %v2156
      %v2158 = vpop.f32.mrf.mxu0
      %2159 = vmatprep.mubr.bf16.mxu0 0
      %2160 = vmatmul.mubr.bf16.gmra.mxu0 %v2031
      %v2161 = vpop.f32.mrf.mxu0
      %v2162 = vadd.f32 0.0, %v2161
      %v2163 = vpop.f32.mrf.mxu0
      %v2164 = vpop.f32.mrf.mxu0
      %v2165 = vadd.f32 0.0, %v2164
      %v2166 = vpop.f32.mrf.mxu0
      %2167 = vmatprep.mubr.bf16.mxu0 0
      %2168 = vmatmul.mubr.bf16.gmra.mxu0 %v2034
      %v2169 = vpop.f32.mrf.mxu0
      %v2170 = vadd.f32 0.0, %v2169
      %v2171 = vpop.f32.mrf.mxu0
      %v2172 = vpop.f32.mrf.mxu0
      %v2173 = vadd.f32 0.0, %v2172
      %v2174 = vpop.f32.mrf.mxu0
      %2175 = vmatprep.mubr.bf16.mxu0 0
      %2176 = vmatmul.mubr.bf16.gmra.mxu0 %v2037
      %v2177 = vpop.f32.mrf.mxu0
      %v2178 = vadd.f32 0.0, %v2177
      %v2179 = vpop.f32.mrf.mxu0
      %v2180 = vpop.f32.mrf.mxu0
      %v2181 = vadd.f32 0.0, %v2180
      %v2182 = vpop.f32.mrf.mxu0
      %2183 = vmatprep.mubr.bf16.mxu0 0
      %2184 = vmatmul.mubr.bf16.gmra.mxu0 %v2040
      %v2185 = vpop.f32.mrf.mxu0
      %v2186 = vadd.f32 0.0, %v2185
      %v2187 = vpop.f32.mrf.mxu0
      %v2188 = vpop.f32.mrf.mxu0
      %v2189 = vadd.f32 0.0, %v2188
      %v2190 = vpop.f32.mrf.mxu0
      %2191 = vmatprep.mubr.bf16.mxu0 0
      %2192 = vmatmul.mubr.bf16.gmra.mxu0 %v2043
      %v2193 = vpop.f32.mrf.mxu0
      %v2194 = vadd.f32 0.0, %v2193
      %v2195 = vpop.f32.mrf.mxu0
      %v2196 = vpop.f32.mrf.mxu0
      %v2197 = vadd.f32 0.0, %v2196
      %v2198 = vpop.f32.mrf.mxu0
      %2199 = vmatprep.mubr.bf16.mxu0 0
      %2200 = vmatmul.mubr.bf16.gmra.mxu0 %v2046
      %v2201 = vpop.f32.mrf.mxu0
      %v2202 = vadd.f32 0.0, %v2201
      %v2203 = vpop.f32.mrf.mxu0
      %v2204 = vpop.f32.mrf.mxu0
      %v2205 = vadd.f32 0.0, %v2204
      %v2206 = vpop.f32.mrf.mxu0
      %2207 = vmatprep.mubr.bf16.mxu0 0
      %2208 = vmatmul.mubr.bf16.gmra.mxu0 %v2049
      %v2209 = vpop.f32.mrf.mxu0
      %v2210 = vadd.f32 0.0, %v2209
      %v2211 = vpop.f32.mrf.mxu0
      %v2212 = vpop.f32.mrf.mxu0
      %v2213 = vadd.f32 0.0, %v2212
      %v2214 = vpop.f32.mrf.mxu0
      %2215 = vmatprep.mubr.bf16.mxu0 0
      %2216 = vmatmul.mubr.bf16.gmra.mxu0 %v2052
      %v2217 = vpop.f32.mrf.mxu0
      %v2218 = vadd.f32 0.0, %v2217
      %v2219 = vpop.f32.mrf.mxu0
      %v2220 = vpop.f32.mrf.mxu0
      %v2221 = vadd.f32 0.0, %v2220
      %v2222 = vpop.f32.mrf.mxu0
      %2223 = vmatprep.mubr.bf16.mxu0 0
      %2224 = vmatmul.mubr.bf16.gmra.mxu0 %v2055
      %v2225 = vpop.f32.mrf.mxu0
      %v2226 = vadd.f32 0.0, %v2225
      %v2227 = vpop.f32.mrf.mxu0
      %v2228 = vpop.f32.mrf.mxu0
      %v2229 = vadd.f32 0.0, %v2228
      %v2230 = vpop.f32.mrf.mxu0
      %2231 = vmatprep.mubr.bf16.mxu0 0
      %2232 = vmatmul.mubr.bf16.gmra.mxu0 %v2058
      %v2233 = vpop.f32.mrf.mxu0
      %v2234 = vadd.f32 0.0, %v2233
      %v2235 = vpop.f32.mrf.mxu0
      %v2236 = vpop.f32.mrf.mxu0
      %v2237 = vadd.f32 0.0, %v2236
      %v2238 = vpop.f32.mrf.mxu0
      %2239 = vdwg.mxu0
      %v2240 = vadd.f32 %v1882, %v2098
      %v2241 = vadd.f32 %v1883, %v2101
      %v2242 = vadd.f32 %v1884, %v2106
      %v2243 = vadd.f32 %v1885, %v2109
      %v2244 = vadd.f32 %v1886, %v2114
      %v2245 = vadd.f32 %v1887, %v2117
      %v2246 = vadd.f32 %v1888, %v2122
      %v2247 = vadd.f32 %v1889, %v2125
      %v2248 = vadd.f32 %v1890, %v2130
      %v2249 = vadd.f32 %v1891, %v2133
      %v2250 = vadd.f32 %v1892, %v2138
      %v2251 = vadd.f32 %v1893, %v2141
      %v2252 = vadd.f32 %v1894, %v2146
      %v2253 = vadd.f32 %v1895, %v2149
      %v2254 = vadd.f32 %v1896, %v2154
      %v2255 = vadd.f32 %v1897, %v2157
      %v2256 = vadd.f32 %v1898, %v2162
      %v2257 = vadd.f32 %v1899, %v2165
      %v2258 = vadd.f32 %v1900, %v2170
      %v2259 = vadd.f32 %v1901, %v2173
      %v2260 = vadd.f32 %v1902, %v2178
      %v2261 = vadd.f32 %v1903, %v2181
      %v2262 = vadd.f32 %v1904, %v2186
      %v2263 = vadd.f32 %v1905, %v2189
      %v2264 = vadd.f32 %v1906, %v2194
      %v2265 = vadd.f32 %v1907, %v2197
      %v2266 = vadd.f32 %v1908, %v2202
      %v2267 = vadd.f32 %v1909, %v2205
      %v2268 = vadd.f32 %v1910, %v2210
      %v2269 = vadd.f32 %v1911, %v2213
      %v2270 = vadd.f32 %v1912, %v2218
      %v2271 = vadd.f32 %v1913, %v2221
      %v2272 = vadd.f32 %v1914, %v2226
      %v2273 = vadd.f32 %v1915, %v2229
      %v2274 = vadd.f32 %v1916, %v2234
      %v2275 = vadd.f32 %v1917, %v2237
      %2276 = vst.msk [vmem:[#allocation2] sm:$0xff] %vm664, %v2240
      %2277 = vst.msk [vmem:[#allocation2 + $0x8] sm:$0xff] %vm664, %v2241
      %2278 = vst.msk [vmem:[#allocation2 + $0x10] sm:$0xff] %vm664, %v2242
      %2279 = vst.msk [vmem:[#allocation2 + $0x18] sm:$0xff] %vm664, %v2243
      %2280 = vst.msk [vmem:[#allocation2 + $0x20] sm:$0xff] %vm664, %v2244
      %2281 = vst.msk [vmem:[#allocation2 + $0x28] sm:$0xff] %vm664, %v2245
      %2282 = vst.msk [vmem:[#allocation2 + $0x30] sm:$0xff] %vm664, %v2246
      %2283 = vst.msk [vmem:[#allocation2 + $0x38] sm:$0xff] %vm664, %v2247
      %2284 = vst.msk [vmem:[#allocation2 + $0x40] sm:$0xff] %vm664, %v2248
      %2285 = vst.msk [vmem:[#allocation2 + $0x48] sm:$0xff] %vm664, %v2249
      %2286 = vst.msk [vmem:[#allocation2 + $0x50] sm:$0xff] %vm664, %v2250
      %2287 = vst.msk [vmem:[#allocation2 + $0x58] sm:$0xff] %vm664, %v2251
      %2288 = vst.msk [vmem:[#allocation2 + $0x60] sm:$0xff] %vm664, %v2252
      %2289 = vst.msk [vmem:[#allocation2 + $0x68] sm:$0xff] %vm664, %v2253
      %2290 = vst.msk [vmem:[#allocation2 + $0x70] sm:$0xff] %vm664, %v2254
      %2291 = vst.msk [vmem:[#allocation2 + $0x78] sm:$0xff] %vm664, %v2255
      %2292 = vst.msk [vmem:[#allocation2 + $0x80] sm:$0xff] %vm664, %v2256
      %2293 = vst.msk [vmem:[#allocation2 + $0x88] sm:$0xff] %vm664, %v2257
      %2294 = vst.msk [vmem:[#allocation2 + $0x90] sm:$0xff] %vm664, %v2258
      %2295 = vst.msk [vmem:[#allocation2 + $0x98] sm:$0xff] %vm664, %v2259
      %2296 = vst.msk [vmem:[#allocation2 + $0xa0] sm:$0xff] %vm664, %v2260
      %2297 = vst.msk [vmem:[#allocation2 + $0xa8] sm:$0xff] %vm664, %v2261
      %2298 = vst.msk [vmem:[#allocation2 + $0xb0] sm:$0xff] %vm664, %v2262
      %2299 = vst.msk [vmem:[#allocation2 + $0xb8] sm:$0xff] %vm664, %v2263
      %2300 = vst.msk [vmem:[#allocation2 + $0xc0] sm:$0xff] %vm664, %v2264
      %2301 = vst.msk [vmem:[#allocation2 + $0xc8] sm:$0xff] %vm664, %v2265
      %2302 = vst.msk [vmem:[#allocation2 + $0xd0] sm:$0xff] %vm664, %v2266
      %2303 = vst.msk [vmem:[#allocation2 + $0xd8] sm:$0xff] %vm664, %v2267
      %2304 = vst.msk [vmem:[#allocation2 + $0xe0] sm:$0xff] %vm664, %v2268
      %2305 = vst.msk [vmem:[#allocation2 + $0xe8] sm:$0xff] %vm664, %v2269
      %2306 = vst.msk [vmem:[#allocation2 + $0xf0] sm:$0xff] %vm664, %v2270
      %2307 = vst.msk [vmem:[#allocation2 + $0xf8] sm:$0xff] %vm664, %v2271
      %2308 = vst.msk [vmem:[#allocation2 + $0x100] sm:$0xff] %vm664, %v2272
      %2309 = vst.msk [vmem:[#allocation2 + $0x108] sm:$0xff] %vm664, %v2273
      %2310 = vst.msk [vmem:[#allocation2 + $0x110] sm:$0xff] %vm664, %v2274
      %2311 = vst.msk [vmem:[#allocation2 + $0x118] sm:$0xff] %vm664, %v2275
      %v2312 = vld [vmem:[#allocation2] sm:$0xff]
      %v2313 = vld [vmem:[#allocation2 + $0x8] sm:$0xff]
      %v2314 = vld [vmem:[#allocation2 + $0x10] sm:$0xff]
      %v2315 = vld [vmem:[#allocation2 + $0x18] sm:$0xff]
      %v2316 = vld [vmem:[#allocation2 + $0x20] sm:$0xff]
      %v2317 = vld [vmem:[#allocation2 + $0x28] sm:$0xff]
      %v2318 = vld [vmem:[#allocation2 + $0x30] sm:$0xff]
      %v2319 = vld [vmem:[#allocation2 + $0x38] sm:$0xff]
      %v2320 = vld [vmem:[#allocation2 + $0x40] sm:$0xff]
      %v2321 = vld [vmem:[#allocation2 + $0x48] sm:$0xff]
      %v2322 = vld [vmem:[#allocation2 + $0x50] sm:$0xff]
      %v2323 = vld [vmem:[#allocation2 + $0x58] sm:$0xff]
      %v2324 = vld [vmem:[#allocation2 + $0x60] sm:$0xff]
      %v2325 = vld [vmem:[#allocation2 + $0x68] sm:$0xff]
      %v2326 = vld [vmem:[#allocation2 + $0x70] sm:$0xff]
      %v2327 = vld [vmem:[#allocation2 + $0x78] sm:$0xff]
      %v2328 = vld [vmem:[#allocation2 + $0x80] sm:$0xff]
      %v2329 = vld [vmem:[#allocation2 + $0x88] sm:$0xff]
      %v2330 = vld [vmem:[#allocation2 + $0x90] sm:$0xff]
      %v2331 = vld [vmem:[#allocation2 + $0x98] sm:$0xff]
      %v2332 = vld [vmem:[#allocation2 + $0xa0] sm:$0xff]
      %v2333 = vld [vmem:[#allocation2 + $0xa8] sm:$0xff]
      %v2334 = vld [vmem:[#allocation2 + $0xb0] sm:$0xff]
      %v2335 = vld [vmem:[#allocation2 + $0xb8] sm:$0xff]
      %v2336 = vld [vmem:[#allocation2 + $0xc0] sm:$0xff]
      %v2337 = vld [vmem:[#allocation2 + $0xc8] sm:$0xff]
      %v2338 = vld [vmem:[#allocation2 + $0xd0] sm:$0xff]
      %v2339 = vld [vmem:[#allocation2 + $0xd8] sm:$0xff]
      %v2340 = vld [vmem:[#allocation2 + $0xe0] sm:$0xff]
      %v2341 = vld [vmem:[#allocation2 + $0xe8] sm:$0xff]
      %v2342 = vld [vmem:[#allocation2 + $0xf0] sm:$0xff]
      %v2343 = vld [vmem:[#allocation2 + $0xf8] sm:$0xff]
      %v2344 = vld [vmem:[#allocation2 + $0x100] sm:$0xff]
      %v2345 = vld [vmem:[#allocation2 + $0x108] sm:$0xff]
      %v2346 = vld [vmem:[#allocation2 + $0x110] sm:$0xff]
      %v2347 = vld [vmem:[#allocation2 + $0x118] sm:$0xff]
      %s2348 = scalar_lea.vmem %s239, 10
      %v2349 = vld [vmem:[%s2348] sm:$0x3]
      %vm2350 = vcmask 1045504
      %v2351 = vrot.slane %v335, 2
      %v2352 = vrot.slane %v336, 2
      %v2353 = vsel %vm2350, %v2351, %v2352
      %v2354 = vrot.slane %v337, 2
      %v2355 = vsel %vm2350, %v2352, %v2354
      %v2356 = vrot.slane %v338, 2
      %v2357 = vsel %vm2350, %v2354, %v2356
      %v2358 = vrot.slane %v339, 2
      %v2359 = vsel %vm2350, %v2356, %v2358
      %v2360 = vrot.slane %v340, 2
      %v2361 = vsel %vm2350, %v2358, %v2360
      %v2362 = vrot.slane %v341, 2
      %v2363 = vsel %vm2350, %v2360, %v2362
      %v2364 = vrot.slane %v342, 2
      %v2365 = vsel %vm2350, %v2362, %v2364
      %v2366 = vrot.slane %v343, 2
      %v2367 = vsel %vm2350, %v2364, %v2366
      %v2368 = vrot.slane %v344, 2
      %v2369 = vsel %vm2350, %v2366, %v2368
      %v2370 = vrot.slane %v345, 2
      %v2371 = vsel %vm2350, %v2368, %v2370
      %v2372 = vrot.slane %v346, 2
      %v2373 = vsel %vm2350, %v2370, %v2372
      %v2374 = vrot.slane %v347, 2
      %v2375 = vsel %vm2350, %v2372, %v2374
      %v2376 = vrot.slane %v348, 2
      %v2377 = vsel %vm2350, %v2374, %v2376
      %v2378 = vrot.slane %v349, 2
      %v2379 = vsel %vm2350, %v2376, %v2378
      %v2380 = vrot.slane %v350, 2
      %v2381 = vsel %vm2350, %v2378, %v2380
      %v2382 = vrot.slane %v351, 2
      %v2383 = vsel %vm2350, %v2380, %v2382
      %v2384 = vrot.slane %v1578, 2
      %v2385 = vsel %vm2350, %v2382, %v2384
      %v2386 = vrot.slane %v1579, 2
      %v2387 = vsel %vm2350, %v2384, %v2386
      %v2389 = vsel %vm389, %v2353, 0
      %v2392 = vsel %vm389, %v2355, 0
      %v2395 = vsel %vm389, %v2357, 0
      %v2398 = vsel %vm389, %v2359, 0
      %v2401 = vsel %vm389, %v2361, 0
      %v2404 = vsel %vm389, %v2363, 0
      %v2407 = vsel %vm389, %v2365, 0
      %v2410 = vsel %vm389, %v2367, 0
      %v2413 = vsel %vm389, %v2369, 0
      %v2416 = vsel %vm389, %v2371, 0
      %v2419 = vsel %vm389, %v2373, 0
      %v2422 = vsel %vm389, %v2375, 0
      %v2425 = vsel %vm389, %v2377, 0
      %v2428 = vsel %vm389, %v2379, 0
      %v2431 = vsel %vm389, %v2381, 0
      %v2434 = vsel %vm389, %v2383, 0
      %v2437 = vsel %vm389, %v2385, 0
      %v2440 = vsel %vm389, %v2387, 0
      %v2443 = vand.u32 %v2349, %v447
      %2445 = vmatprep.subr.bf16.mxu0 0
      %2446 = vmatpush1.bf16.msra.mxu0 0
      %2447 = vmatprep.subr.bf16.mxu0 0
      %2448 = vmatpush1.bf16.msra.mxu0 0
      %2449 = vmatprep.subr.bf16.mxu0 0
      %2450 = vmatpush1.bf16.msra.mxu0 0
      %2451 = vmatprep.subr.bf16.mxu0 0
      %2452 = vmatpush1.bf16.msra.mxu0 0
      %2453 = vmatprep.subr.bf16.mxu0 0
      %2454 = vmatpush1.bf16.msra.mxu0 0
      %2455 = vmatprep.subr.bf16.mxu0 0
      %2456 = vmatpush1.bf16.msra.mxu0 0
      %2457 = vmatprep.subr.bf16.mxu0 0
      %2458 = vmatpush1.bf16.msra.mxu0 0
      %2459 = vmatprep.subr.bf16.mxu0 0
      %2460 = vmatpush1.bf16.msra.mxu0 %v2443
      %2461 = vmatprep.subr.bf16.mxu0 0
      %2462 = vmatpush2.bf16.msra.mxu0 0
      %2463 = vmatprep.subr.bf16.mxu0 0
      %2464 = vmatpush2.bf16.msra.mxu0 0
      %2465 = vmatprep.subr.bf16.mxu0 0
      %2466 = vmatpush2.bf16.msra.mxu0 0
      %2467 = vmatprep.subr.bf16.mxu0 0
      %2468 = vmatpush2.bf16.msra.mxu0 0
      %2469 = vmatprep.subr.bf16.mxu0 0
      %2470 = vmatpush2.bf16.msra.mxu0 0
      %2471 = vmatprep.subr.bf16.mxu0 0
      %2472 = vmatpush2.bf16.msra.mxu0 0
      %2473 = vmatprep.subr.bf16.mxu0 0
      %2474 = vmatpush2.bf16.msra.mxu0 0
      %2475 = vmatprep.subr.bf16.mxu0 0
      %2476 = vmatpush2.bf16.msra.mxu0 0
      %2477 = vmatprep.mubr.bf16.mxu0 0
      %2478 = vmatmul.mubr.bf16.gmra.mxu0 %v2389
      %v2479 = vpop.f32.mrf.mxu0
      %v2480 = vadd.f32 0.0, %v2479
      %v2481 = vpop.f32.mrf.mxu0
      %v2482 = vpop.f32.mrf.mxu0
      %v2483 = vadd.f32 0.0, %v2482
      %v2484 = vpop.f32.mrf.mxu0
      %2485 = vmatprep.mubr.bf16.mxu0 0
      %2486 = vmatmul.mubr.bf16.gmra.mxu0 %v2392
      %v2487 = vpop.f32.mrf.mxu0
      %v2488 = vadd.f32 0.0, %v2487
      %v2489 = vpop.f32.mrf.mxu0
      %v2490 = vpop.f32.mrf.mxu0
      %v2491 = vadd.f32 0.0, %v2490
      %v2492 = vpop.f32.mrf.mxu0
      %2493 = vmatprep.mubr.bf16.mxu0 0
      %2494 = vmatmul.mubr.bf16.gmra.mxu0 %v2395
      %v2495 = vpop.f32.mrf.mxu0
      %v2496 = vadd.f32 0.0, %v2495
      %v2497 = vpop.f32.mrf.mxu0
      %v2498 = vpop.f32.mrf.mxu0
      %v2499 = vadd.f32 0.0, %v2498
      %v2500 = vpop.f32.mrf.mxu0
      %2501 = vmatprep.mubr.bf16.mxu0 0
      %2502 = vmatmul.mubr.bf16.gmra.mxu0 %v2398
      %v2503 = vpop.f32.mrf.mxu0
      %v2504 = vadd.f32 0.0, %v2503
      %v2505 = vpop.f32.mrf.mxu0
      %v2506 = vpop.f32.mrf.mxu0
      %v2507 = vadd.f32 0.0, %v2506
      %v2508 = vpop.f32.mrf.mxu0
      %2509 = vmatprep.mubr.bf16.mxu0 0
      %2510 = vmatmul.mubr.bf16.gmra.mxu0 %v2401
      %v2511 = vpop.f32.mrf.mxu0
      %v2512 = vadd.f32 0.0, %v2511
      %v2513 = vpop.f32.mrf.mxu0
      %v2514 = vpop.f32.mrf.mxu0
      %v2515 = vadd.f32 0.0, %v2514
      %v2516 = vpop.f32.mrf.mxu0
      %2517 = vmatprep.mubr.bf16.mxu0 0
      %2518 = vmatmul.mubr.bf16.gmra.mxu0 %v2404
      %v2519 = vpop.f32.mrf.mxu0
      %v2520 = vadd.f32 0.0, %v2519
      %v2521 = vpop.f32.mrf.mxu0
      %v2522 = vpop.f32.mrf.mxu0
      %v2523 = vadd.f32 0.0, %v2522
      %v2524 = vpop.f32.mrf.mxu0
      %2525 = vmatprep.mubr.bf16.mxu0 0
      %2526 = vmatmul.mubr.bf16.gmra.mxu0 %v2407
      %v2527 = vpop.f32.mrf.mxu0
      %v2528 = vadd.f32 0.0, %v2527
      %v2529 = vpop.f32.mrf.mxu0
      %v2530 = vpop.f32.mrf.mxu0
      %v2531 = vadd.f32 0.0, %v2530
      %v2532 = vpop.f32.mrf.mxu0
      %2533 = vmatprep.mubr.bf16.mxu0 0
      %2534 = vmatmul.mubr.bf16.gmra.mxu0 %v2410
      %v2535 = vpop.f32.mrf.mxu0
      %v2536 = vadd.f32 0.0, %v2535
      %v2537 = vpop.f32.mrf.mxu0
      %v2538 = vpop.f32.mrf.mxu0
      %v2539 = vadd.f32 0.0, %v2538
      %v2540 = vpop.f32.mrf.mxu0
      %2541 = vmatprep.mubr.bf16.mxu0 0
      %2542 = vmatmul.mubr.bf16.gmra.mxu0 %v2413
      %v2543 = vpop.f32.mrf.mxu0
      %v2544 = vadd.f32 0.0, %v2543
      %v2545 = vpop.f32.mrf.mxu0
      %v2546 = vpop.f32.mrf.mxu0
      %v2547 = vadd.f32 0.0, %v2546
      %v2548 = vpop.f32.mrf.mxu0
      %2549 = vmatprep.mubr.bf16.mxu0 0
      %2550 = vmatmul.mubr.bf16.gmra.mxu0 %v2416
      %v2551 = vpop.f32.mrf.mxu0
      %v2552 = vadd.f32 0.0, %v2551
      %v2553 = vpop.f32.mrf.mxu0
      %v2554 = vpop.f32.mrf.mxu0
      %v2555 = vadd.f32 0.0, %v2554
      %v2556 = vpop.f32.mrf.mxu0
      %2557 = vmatprep.mubr.bf16.mxu0 0
      %2558 = vmatmul.mubr.bf16.gmra.mxu0 %v2419
      %v2559 = vpop.f32.mrf.mxu0
      %v2560 = vadd.f32 0.0, %v2559
      %v2561 = vpop.f32.mrf.mxu0
      %v2562 = vpop.f32.mrf.mxu0
      %v2563 = vadd.f32 0.0, %v2562
      %v2564 = vpop.f32.mrf.mxu0
      %2565 = vmatprep.mubr.bf16.mxu0 0
      %2566 = vmatmul.mubr.bf16.gmra.mxu0 %v2422
      %v2567 = vpop.f32.mrf.mxu0
      %v2568 = vadd.f32 0.0, %v2567
      %v2569 = vpop.f32.mrf.mxu0
      %v2570 = vpop.f32.mrf.mxu0
      %v2571 = vadd.f32 0.0, %v2570
      %v2572 = vpop.f32.mrf.mxu0
      %2573 = vmatprep.mubr.bf16.mxu0 0
      %2574 = vmatmul.mubr.bf16.gmra.mxu0 %v2425
      %v2575 = vpop.f32.mrf.mxu0
      %v2576 = vadd.f32 0.0, %v2575
      %v2577 = vpop.f32.mrf.mxu0
      %v2578 = vpop.f32.mrf.mxu0
      %v2579 = vadd.f32 0.0, %v2578
      %v2580 = vpop.f32.mrf.mxu0
      %2581 = vmatprep.mubr.bf16.mxu0 0
      %2582 = vmatmul.mubr.bf16.gmra.mxu0 %v2428
      %v2583 = vpop.f32.mrf.mxu0
      %v2584 = vadd.f32 0.0, %v2583
      %v2585 = vpop.f32.mrf.mxu0
      %v2586 = vpop.f32.mrf.mxu0
      %v2587 = vadd.f32 0.0, %v2586
      %v2588 = vpop.f32.mrf.mxu0
      %2589 = vmatprep.mubr.bf16.mxu0 0
      %2590 = vmatmul.mubr.bf16.gmra.mxu0 %v2431
      %v2591 = vpop.f32.mrf.mxu0
      %v2592 = vadd.f32 0.0, %v2591
      %v2593 = vpop.f32.mrf.mxu0
      %v2594 = vpop.f32.mrf.mxu0
      %v2595 = vadd.f32 0.0, %v2594
      %v2596 = vpop.f32.mrf.mxu0
      %2597 = vmatprep.mubr.bf16.mxu0 0
      %2598 = vmatmul.mubr.bf16.gmra.mxu0 %v2434
      %v2599 = vpop.f32.mrf.mxu0
      %v2600 = vadd.f32 0.0, %v2599
      %v2601 = vpop.f32.mrf.mxu0
      %v2602 = vpop.f32.mrf.mxu0
      %v2603 = vadd.f32 0.0, %v2602
      %v2604 = vpop.f32.mrf.mxu0
      %2605 = vmatprep.mubr.bf16.mxu0 0
      %2606 = vmatmul.mubr.bf16.gmra.mxu0 %v2437
      %v2607 = vpop.f32.mrf.mxu0
      %v2608 = vadd.f32 0.0, %v2607
      %v2609 = vpop.f32.mrf.mxu0
      %v2610 = vpop.f32.mrf.mxu0
      %v2611 = vadd.f32 0.0, %v2610
      %v2612 = vpop.f32.mrf.mxu0
      %2613 = vmatprep.mubr.bf16.mxu0 0
      %2614 = vmatmul.mubr.bf16.gmra.mxu0 %v2440
      %v2615 = vpop.f32.mrf.mxu0
      %v2616 = vadd.f32 0.0, %v2615
      %v2617 = vpop.f32.mrf.mxu0
      %v2618 = vpop.f32.mrf.mxu0
      %v2619 = vadd.f32 0.0, %v2618
      %v2620 = vpop.f32.mrf.mxu0
      %2621 = vdwg.mxu0
      %v2622 = vadd.f32 %v2312, %v2480
      %v2623 = vadd.f32 %v2313, %v2483
      %v2624 = vadd.f32 %v2314, %v2488
      %v2625 = vadd.f32 %v2315, %v2491
      %v2626 = vadd.f32 %v2316, %v2496
      %v2627 = vadd.f32 %v2317, %v2499
      %v2628 = vadd.f32 %v2318, %v2504
      %v2629 = vadd.f32 %v2319, %v2507
      %v2630 = vadd.f32 %v2320, %v2512
      %v2631 = vadd.f32 %v2321, %v2515
      %v2632 = vadd.f32 %v2322, %v2520
      %v2633 = vadd.f32 %v2323, %v2523
      %v2634 = vadd.f32 %v2324, %v2528
      %v2635 = vadd.f32 %v2325, %v2531
      %v2636 = vadd.f32 %v2326, %v2536
      %v2637 = vadd.f32 %v2327, %v2539
      %v2638 = vadd.f32 %v2328, %v2544
      %v2639 = vadd.f32 %v2329, %v2547
      %v2640 = vadd.f32 %v2330, %v2552
      %v2641 = vadd.f32 %v2331, %v2555
      %v2642 = vadd.f32 %v2332, %v2560
      %v2643 = vadd.f32 %v2333, %v2563
      %v2644 = vadd.f32 %v2334, %v2568
      %v2645 = vadd.f32 %v2335, %v2571
      %v2646 = vadd.f32 %v2336, %v2576
      %v2647 = vadd.f32 %v2337, %v2579
      %v2648 = vadd.f32 %v2338, %v2584
      %v2649 = vadd.f32 %v2339, %v2587
      %v2650 = vadd.f32 %v2340, %v2592
      %v2651 = vadd.f32 %v2341, %v2595
      %v2652 = vadd.f32 %v2342, %v2600
      %v2653 = vadd.f32 %v2343, %v2603
      %v2654 = vadd.f32 %v2344, %v2608
      %v2655 = vadd.f32 %v2345, %v2611
      %v2656 = vadd.f32 %v2346, %v2616
      %v2657 = vadd.f32 %v2347, %v2619
      %2658 = vst.msk [vmem:[#allocation2] sm:$0xff] %vm664, %v2622
      %2659 = vst.msk [vmem:[#allocation2 + $0x8] sm:$0xff] %vm664, %v2623
      %2660 = vst.msk [vmem:[#allocation2 + $0x10] sm:$0xff] %vm664, %v2624
      %2661 = vst.msk [vmem:[#allocation2 + $0x18] sm:$0xff] %vm664, %v2625
      %2662 = vst.msk [vmem:[#allocation2 + $0x20] sm:$0xff] %vm664, %v2626
      %2663 = vst.msk [vmem:[#allocation2 + $0x28] sm:$0xff] %vm664, %v2627
      %2664 = vst.msk [vmem:[#allocation2 + $0x30] sm:$0xff] %vm664, %v2628
      %2665 = vst.msk [vmem:[#allocation2 + $0x38] sm:$0xff] %vm664, %v2629
      %2666 = vst.msk [vmem:[#allocation2 + $0x40] sm:$0xff] %vm664, %v2630
      %2667 = vst.msk [vmem:[#allocation2 + $0x48] sm:$0xff] %vm664, %v2631
      %2668 = vst.msk [vmem:[#allocation2 + $0x50] sm:$0xff] %vm664, %v2632
      %2669 = vst.msk [vmem:[#allocation2 + $0x58] sm:$0xff] %vm664, %v2633
      %2670 = vst.msk [vmem:[#allocation2 + $0x60] sm:$0xff] %vm664, %v2634
      %2671 = vst.msk [vmem:[#allocation2 + $0x68] sm:$0xff] %vm664, %v2635
      %2672 = vst.msk [vmem:[#allocation2 + $0x70] sm:$0xff] %vm664, %v2636
      %2673 = vst.msk [vmem:[#allocation2 + $0x78] sm:$0xff] %vm664, %v2637
      %2674 = vst.msk [vmem:[#allocation2 + $0x80] sm:$0xff] %vm664, %v2638
      %2675 = vst.msk [vmem:[#allocation2 + $0x88] sm:$0xff] %vm664, %v2639
      %2676 = vst.msk [vmem:[#allocation2 + $0x90] sm:$0xff] %vm664, %v2640
      %2677 = vst.msk [vmem:[#allocation2 + $0x98] sm:$0xff] %vm664, %v2641
      %2678 = vst.msk [vmem:[#allocation2 + $0xa0] sm:$0xff] %vm664, %v2642
      %2679 = vst.msk [vmem:[#allocation2 + $0xa8] sm:$0xff] %vm664, %v2643
      %2680 = vst.msk [vmem:[#allocation2 + $0xb0] sm:$0xff] %vm664, %v2644
      %2681 = vst.msk [vmem:[#allocation2 + $0xb8] sm:$0xff] %vm664, %v2645
      %2682 = vst.msk [vmem:[#allocation2 + $0xc0] sm:$0xff] %vm664, %v2646
      %2683 = vst.msk [vmem:[#allocation2 + $0xc8] sm:$0xff] %vm664, %v2647
      %2684 = vst.msk [vmem:[#allocation2 + $0xd0] sm:$0xff] %vm664, %v2648
      %2685 = vst.msk [vmem:[#allocation2 + $0xd8] sm:$0xff] %vm664, %v2649
      %2686 = vst.msk [vmem:[#allocation2 + $0xe0] sm:$0xff] %vm664, %v2650
      %2687 = vst.msk [vmem:[#allocation2 + $0xe8] sm:$0xff] %vm664, %v2651
      %2688 = vst.msk [vmem:[#allocation2 + $0xf0] sm:$0xff] %vm664, %v2652
      %2689 = vst.msk [vmem:[#allocation2 + $0xf8] sm:$0xff] %vm664, %v2653
      %2690 = vst.msk [vmem:[#allocation2 + $0x100] sm:$0xff] %vm664, %v2654
      %2691 = vst.msk [vmem:[#allocation2 + $0x108] sm:$0xff] %vm664, %v2655
      %2692 = vst.msk [vmem:[#allocation2 + $0x110] sm:$0xff] %vm664, %v2656
      %2693 = vst.msk [vmem:[#allocation2 + $0x118] sm:$0xff] %vm664, %v2657
      %v2694 = vpack.c.bf16 %v332, %v331
      %v2695 = vpack.c.bf16 %v333, %v333
      %v2696 = vld [vmem:[#allocation2] sm:$0xff]
      %v2697 = vld [vmem:[#allocation2 + $0x8] sm:$0xff]
      %v2698 = vld [vmem:[#allocation2 + $0x10] sm:$0xff]
      %v2699 = vld [vmem:[#allocation2 + $0x18] sm:$0xff]
      %v2700 = vld [vmem:[#allocation2 + $0x20] sm:$0xff]
      %v2701 = vld [vmem:[#allocation2 + $0x28] sm:$0xff]
      %v2702 = vld [vmem:[#allocation2 + $0x30] sm:$0xff]
      %v2703 = vld [vmem:[#allocation2 + $0x38] sm:$0xff]
      %v2704 = vld [vmem:[#allocation2 + $0x40] sm:$0xff]
      %v2705 = vld [vmem:[#allocation2 + $0x48] sm:$0xff]
      %v2706 = vld [vmem:[#allocation2 + $0x50] sm:$0xff]
      %v2707 = vld [vmem:[#allocation2 + $0x58] sm:$0xff]
      %v2708 = vld [vmem:[#allocation2 + $0x60] sm:$0xff]
      %v2709 = vld [vmem:[#allocation2 + $0x68] sm:$0xff]
      %v2710 = vld [vmem:[#allocation2 + $0x70] sm:$0xff]
      %v2711 = vld [vmem:[#allocation2 + $0x78] sm:$0xff]
      %v2712 = vld [vmem:[#allocation2 + $0x80] sm:$0xff]
      %v2713 = vld [vmem:[#allocation2 + $0x88] sm:$0xff]
      %v2714 = vld [vmem:[#allocation2 + $0x90] sm:$0xff]
      %v2715 = vld [vmem:[#allocation2 + $0x98] sm:$0xff]
      %v2716 = vld [vmem:[#allocation2 + $0xa0] sm:$0xff]
      %v2717 = vld [vmem:[#allocation2 + $0xa8] sm:$0xff]
      %v2718 = vld [vmem:[#allocation2 + $0xb0] sm:$0xff]
      %v2719 = vld [vmem:[#allocation2 + $0xb8] sm:$0xff]
      %v2720 = vld [vmem:[#allocation2 + $0xc0] sm:$0xff]
      %v2721 = vld [vmem:[#allocation2 + $0xc8] sm:$0xff]
      %v2722 = vld [vmem:[#allocation2 + $0xd0] sm:$0xff]
      %v2723 = vld [vmem:[#allocation2 + $0xd8] sm:$0xff]
      %v2724 = vld [vmem:[#allocation2 + $0xe0] sm:$0xff]
      %v2725 = vld [vmem:[#allocation2 + $0xe8] sm:$0xff]
      %v2726 = vld [vmem:[#allocation2 + $0xf0] sm:$0xff]
      %v2727 = vld [vmem:[#allocation2 + $0xf8] sm:$0xff]
      %v2728 = vld [vmem:[#allocation2 + $0x100] sm:$0xff]
      %v2729 = vld [vmem:[#allocation2 + $0x108] sm:$0xff]
      %v2730 = vld [vmem:[#allocation2 + $0x110] sm:$0xff]
      %v2731 = vld [vmem:[#allocation2 + $0x118] sm:$0xff]
      %s2732 = scalar_lea.vmem %s239, 12
      %v2733 = vld [vmem:[%s2732] sm:$0x3]
      %v2736 = vrot.slane %v2694, 2
      %v2737 = vsel %vm2350, %v2384, %v2736
      %v2738 = vrot.slane %v2695, 2
      %v2739 = vsel %vm2350, %v2736, %v2738
      %v2741 = vsel %vm389, %v2737, 0
      %v2744 = vsel %vm389, %v2739, 0
      %v2747 = vand.u32 %v2733, %v447
      %2749 = vmatprep.subr.bf16.mxu0 0
      %2750 = vmatpush1.bf16.msra.mxu0 0
      %2751 = vmatprep.subr.bf16.mxu0 0
      %2752 = vmatpush1.bf16.msra.mxu0 0
      %2753 = vmatprep.subr.bf16.mxu0 0
      %2754 = vmatpush1.bf16.msra.mxu0 0
      %2755 = vmatprep.subr.bf16.mxu0 0
      %2756 = vmatpush1.bf16.msra.mxu0 0
      %2757 = vmatprep.subr.bf16.mxu0 0
      %2758 = vmatpush1.bf16.msra.mxu0 0
      %2759 = vmatprep.subr.bf16.mxu0 0
      %2760 = vmatpush1.bf16.msra.mxu0 0
      %2761 = vmatprep.subr.bf16.mxu0 0
      %2762 = vmatpush1.bf16.msra.mxu0 0
      %2763 = vmatprep.subr.bf16.mxu0 0
      %2764 = vmatpush1.bf16.msra.mxu0 %v2747
      %2765 = vmatprep.subr.bf16.mxu0 0
      %2766 = vmatpush2.bf16.msra.mxu0 0
      %2767 = vmatprep.subr.bf16.mxu0 0
      %2768 = vmatpush2.bf16.msra.mxu0 0
      %2769 = vmatprep.subr.bf16.mxu0 0
      %2770 = vmatpush2.bf16.msra.mxu0 0
      %2771 = vmatprep.subr.bf16.mxu0 0
      %2772 = vmatpush2.bf16.msra.mxu0 0
      %2773 = vmatprep.subr.bf16.mxu0 0
      %2774 = vmatpush2.bf16.msra.mxu0 0
      %2775 = vmatprep.subr.bf16.mxu0 0
      %2776 = vmatpush2.bf16.msra.mxu0 0
      %2777 = vmatprep.subr.bf16.mxu0 0
      %2778 = vmatpush2.bf16.msra.mxu0 0
      %2779 = vmatprep.subr.bf16.mxu0 0
      %2780 = vmatpush2.bf16.msra.mxu0 0
      %2781 = vmatprep.mubr.bf16.mxu0 0
      %2782 = vmatmul.mubr.bf16.gmra.mxu0 %v2392
      %v2783 = vpop.f32.mrf.mxu0
      %v2784 = vadd.f32 0.0, %v2783
      %v2785 = vpop.f32.mrf.mxu0
      %v2786 = vpop.f32.mrf.mxu0
      %v2787 = vadd.f32 0.0, %v2786
      %v2788 = vpop.f32.mrf.mxu0
      %2789 = vmatprep.mubr.bf16.mxu0 0
      %2790 = vmatmul.mubr.bf16.gmra.mxu0 %v2395
      %v2791 = vpop.f32.mrf.mxu0
      %v2792 = vadd.f32 0.0, %v2791
      %v2793 = vpop.f32.mrf.mxu0
      %v2794 = vpop.f32.mrf.mxu0
      %v2795 = vadd.f32 0.0, %v2794
      %v2796 = vpop.f32.mrf.mxu0
      %2797 = vmatprep.mubr.bf16.mxu0 0
      %2798 = vmatmul.mubr.bf16.gmra.mxu0 %v2398
      %v2799 = vpop.f32.mrf.mxu0
      %v2800 = vadd.f32 0.0, %v2799
      %v2801 = vpop.f32.mrf.mxu0
      %v2802 = vpop.f32.mrf.mxu0
      %v2803 = vadd.f32 0.0, %v2802
      %v2804 = vpop.f32.mrf.mxu0
      %2805 = vmatprep.mubr.bf16.mxu0 0
      %2806 = vmatmul.mubr.bf16.gmra.mxu0 %v2401
      %v2807 = vpop.f32.mrf.mxu0
      %v2808 = vadd.f32 0.0, %v2807
      %v2809 = vpop.f32.mrf.mxu0
      %v2810 = vpop.f32.mrf.mxu0
      %v2811 = vadd.f32 0.0, %v2810
      %v2812 = vpop.f32.mrf.mxu0
      %2813 = vmatprep.mubr.bf16.mxu0 0
      %2814 = vmatmul.mubr.bf16.gmra.mxu0 %v2404
      %v2815 = vpop.f32.mrf.mxu0
      %v2816 = vadd.f32 0.0, %v2815
      %v2817 = vpop.f32.mrf.mxu0
      %v2818 = vpop.f32.mrf.mxu0
      %v2819 = vadd.f32 0.0, %v2818
      %v2820 = vpop.f32.mrf.mxu0
      %2821 = vmatprep.mubr.bf16.mxu0 0
      %2822 = vmatmul.mubr.bf16.gmra.mxu0 %v2407
      %v2823 = vpop.f32.mrf.mxu0
      %v2824 = vadd.f32 0.0, %v2823
      %v2825 = vpop.f32.mrf.mxu0
      %v2826 = vpop.f32.mrf.mxu0
      %v2827 = vadd.f32 0.0, %v2826
      %v2828 = vpop.f32.mrf.mxu0
      %2829 = vmatprep.mubr.bf16.mxu0 0
      %2830 = vmatmul.mubr.bf16.gmra.mxu0 %v2410
      %v2831 = vpop.f32.mrf.mxu0
      %v2832 = vadd.f32 0.0, %v2831
      %v2833 = vpop.f32.mrf.mxu0
      %v2834 = vpop.f32.mrf.mxu0
      %v2835 = vadd.f32 0.0, %v2834
      %v2836 = vpop.f32.mrf.mxu0
      %2837 = vmatprep.mubr.bf16.mxu0 0
      %2838 = vmatmul.mubr.bf16.gmra.mxu0 %v2413
      %v2839 = vpop.f32.mrf.mxu0
      %v2840 = vadd.f32 0.0, %v2839
      %v2841 = vpop.f32.mrf.mxu0
      %v2842 = vpop.f32.mrf.mxu0
      %v2843 = vadd.f32 0.0, %v2842
      %v2844 = vpop.f32.mrf.mxu0
      %2845 = vmatprep.mubr.bf16.mxu0 0
      %2846 = vmatmul.mubr.bf16.gmra.mxu0 %v2416
      %v2847 = vpop.f32.mrf.mxu0
      %v2848 = vadd.f32 0.0, %v2847
      %v2849 = vpop.f32.mrf.mxu0
      %v2850 = vpop.f32.mrf.mxu0
      %v2851 = vadd.f32 0.0, %v2850
      %v2852 = vpop.f32.mrf.mxu0
      %2853 = vmatprep.mubr.bf16.mxu0 0
      %2854 = vmatmul.mubr.bf16.gmra.mxu0 %v2419
      %v2855 = vpop.f32.mrf.mxu0
      %v2856 = vadd.f32 0.0, %v2855
      %v2857 = vpop.f32.mrf.mxu0
      %v2858 = vpop.f32.mrf.mxu0
      %v2859 = vadd.f32 0.0, %v2858
      %v2860 = vpop.f32.mrf.mxu0
      %2861 = vmatprep.mubr.bf16.mxu0 0
      %2862 = vmatmul.mubr.bf16.gmra.mxu0 %v2422
      %v2863 = vpop.f32.mrf.mxu0
      %v2864 = vadd.f32 0.0, %v2863
      %v2865 = vpop.f32.mrf.mxu0
      %v2866 = vpop.f32.mrf.mxu0
      %v2867 = vadd.f32 0.0, %v2866
      %v2868 = vpop.f32.mrf.mxu0
      %2869 = vmatprep.mubr.bf16.mxu0 0
      %2870 = vmatmul.mubr.bf16.gmra.mxu0 %v2425
      %v2871 = vpop.f32.mrf.mxu0
      %v2872 = vadd.f32 0.0, %v2871
      %v2873 = vpop.f32.mrf.mxu0
      %v2874 = vpop.f32.mrf.mxu0
      %v2875 = vadd.f32 0.0, %v2874
      %v2876 = vpop.f32.mrf.mxu0
      %2877 = vmatprep.mubr.bf16.mxu0 0
      %2878 = vmatmul.mubr.bf16.gmra.mxu0 %v2428
      %v2879 = vpop.f32.mrf.mxu0
      %v2880 = vadd.f32 0.0, %v2879
      %v2881 = vpop.f32.mrf.mxu0
      %v2882 = vpop.f32.mrf.mxu0
      %v2883 = vadd.f32 0.0, %v2882
      %v2884 = vpop.f32.mrf.mxu0
      %2885 = vmatprep.mubr.bf16.mxu0 0
      %2886 = vmatmul.mubr.bf16.gmra.mxu0 %v2431
      %v2887 = vpop.f32.mrf.mxu0
      %v2888 = vadd.f32 0.0, %v2887
      %v2889 = vpop.f32.mrf.mxu0
      %v2890 = vpop.f32.mrf.mxu0
      %v2891 = vadd.f32 0.0, %v2890
      %v2892 = vpop.f32.mrf.mxu0
      %2893 = vmatprep.mubr.bf16.mxu0 0
      %2894 = vmatmul.mubr.bf16.gmra.mxu0 %v2434
      %v2895 = vpop.f32.mrf.mxu0
      %v2896 = vadd.f32 0.0, %v2895
      %v2897 = vpop.f32.mrf.mxu0
      %v2898 = vpop.f32.mrf.mxu0
      %v2899 = vadd.f32 0.0, %v2898
      %v2900 = vpop.f32.mrf.mxu0
      %2901 = vmatprep.mubr.bf16.mxu0 0
      %2902 = vmatmul.mubr.bf16.gmra.mxu0 %v2437
      %v2903 = vpop.f32.mrf.mxu0
      %v2904 = vadd.f32 0.0, %v2903
      %v2905 = vpop.f32.mrf.mxu0
      %v2906 = vpop.f32.mrf.mxu0
      %v2907 = vadd.f32 0.0, %v2906
      %v2908 = vpop.f32.mrf.mxu0
      %2909 = vmatprep.mubr.bf16.mxu0 0
      %2910 = vmatmul.mubr.bf16.gmra.mxu0 %v2741
      %v2911 = vpop.f32.mrf.mxu0
      %v2912 = vadd.f32 0.0, %v2911
      %v2913 = vpop.f32.mrf.mxu0
      %v2914 = vpop.f32.mrf.mxu0
      %v2915 = vadd.f32 0.0, %v2914
      %v2916 = vpop.f32.mrf.mxu0
      %2917 = vmatprep.mubr.bf16.mxu0 0
      %2918 = vmatmul.mubr.bf16.gmra.mxu0 %v2744
      %v2919 = vpop.f32.mrf.mxu0
      %v2920 = vadd.f32 0.0, %v2919
      %v2921 = vpop.f32.mrf.mxu0
      %v2922 = vpop.f32.mrf.mxu0
      %v2923 = vadd.f32 0.0, %v2922
      %v2924 = vpop.f32.mrf.mxu0
      %2925 = vdwg.mxu0
      %v2926 = vadd.f32 %v2696, %v2784
      %v2927 = vadd.f32 %v2697, %v2787
      %v2928 = vadd.f32 %v2698, %v2792
      %v2929 = vadd.f32 %v2699, %v2795
      %v2930 = vadd.f32 %v2700, %v2800
      %v2931 = vadd.f32 %v2701, %v2803
      %v2932 = vadd.f32 %v2702, %v2808
      %v2933 = vadd.f32 %v2703, %v2811
      %v2934 = vadd.f32 %v2704, %v2816
      %v2935 = vadd.f32 %v2705, %v2819
      %v2936 = vadd.f32 %v2706, %v2824
      %v2937 = vadd.f32 %v2707, %v2827
      %v2938 = vadd.f32 %v2708, %v2832
      %v2939 = vadd.f32 %v2709, %v2835
      %v2940 = vadd.f32 %v2710, %v2840
      %v2941 = vadd.f32 %v2711, %v2843
      %v2942 = vadd.f32 %v2712, %v2848
      %v2943 = vadd.f32 %v2713, %v2851
      %v2944 = vadd.f32 %v2714, %v2856
      %v2945 = vadd.f32 %v2715, %v2859
      %v2946 = vadd.f32 %v2716, %v2864
      %v2947 = vadd.f32 %v2717, %v2867
      %v2948 = vadd.f32 %v2718, %v2872
      %v2949 = vadd.f32 %v2719, %v2875
      %v2950 = vadd.f32 %v2720, %v2880
      %v2951 = vadd.f32 %v2721, %v2883
      %v2952 = vadd.f32 %v2722, %v2888
      %v2953 = vadd.f32 %v2723, %v2891
      %v2954 = vadd.f32 %v2724, %v2896
      %v2955 = vadd.f32 %v2725, %v2899
      %v2956 = vadd.f32 %v2726, %v2904
      %v2957 = vadd.f32 %v2727, %v2907
      %v2958 = vadd.f32 %v2728, %v2912
      %v2959 = vadd.f32 %v2729, %v2915
      %v2960 = vadd.f32 %v2730, %v2920
      %v2961 = vadd.f32 %v2731, %v2923
      %2962 = vst.msk [vmem:[#allocation2] sm:$0xff] %vm664, %v2926
      %2963 = vst.msk [vmem:[#allocation2 + $0x8] sm:$0xff] %vm664, %v2927
      %2964 = vst.msk [vmem:[#allocation2 + $0x10] sm:$0xff] %vm664, %v2928
      %2965 = vst.msk [vmem:[#allocation2 + $0x18] sm:$0xff] %vm664, %v2929
      %2966 = vst.msk [vmem:[#allocation2 + $0x20] sm:$0xff] %vm664, %v2930
      %2967 = vst.msk [vmem:[#allocation2 + $0x28] sm:$0xff] %vm664, %v2931
      %2968 = vst.msk [vmem:[#allocation2 + $0x30] sm:$0xff] %vm664, %v2932
      %2969 = vst.msk [vmem:[#allocation2 + $0x38] sm:$0xff] %vm664, %v2933
      %2970 = vst.msk [vmem:[#allocation2 + $0x40] sm:$0xff] %vm664, %v2934
      %2971 = vst.msk [vmem:[#allocation2 + $0x48] sm:$0xff] %vm664, %v2935
      %2972 = vst.msk [vmem:[#allocation2 + $0x50] sm:$0xff] %vm664, %v2936
      %2973 = vst.msk [vmem:[#allocation2 + $0x58] sm:$0xff] %vm664, %v2937
      %2974 = vst.msk [vmem:[#allocation2 + $0x60] sm:$0xff] %vm664, %v2938
      %2975 = vst.msk [vmem:[#allocation2 + $0x68] sm:$0xff] %vm664, %v2939
      %2976 = vst.msk [vmem:[#allocation2 + $0x70] sm:$0xff] %vm664, %v2940
      %2977 = vst.msk [vmem:[#allocation2 + $0x78] sm:$0xff] %vm664, %v2941
      %2978 = vst.msk [vmem:[#allocation2 + $0x80] sm:$0xff] %vm664, %v2942
      %2979 = vst.msk [vmem:[#allocation2 + $0x88] sm:$0xff] %vm664, %v2943
      %2980 = vst.msk [vmem:[#allocation2 + $0x90] sm:$0xff] %vm664, %v2944
      %2981 = vst.msk [vmem:[#allocation2 + $0x98] sm:$0xff] %vm664, %v2945
      %2982 = vst.msk [vmem:[#allocation2 + $0xa0] sm:$0xff] %vm664, %v2946
      %2983 = vst.msk [vmem:[#allocation2 + $0xa8] sm:$0xff] %vm664, %v2947
      %2984 = vst.msk [vmem:[#allocation2 + $0xb0] sm:$0xff] %vm664, %v2948
      %2985 = vst.msk [vmem:[#allocation2 + $0xb8] sm:$0xff] %vm664, %v2949
      %2986 = vst.msk [vmem:[#allocation2 + $0xc0] sm:$0xff] %vm664, %v2950
      %2987 = vst.msk [vmem:[#allocation2 + $0xc8] sm:$0xff] %vm664, %v2951
      %2988 = vst.msk [vmem:[#allocation2 + $0xd0] sm:$0xff] %vm664, %v2952
      %2989 = vst.msk [vmem:[#allocation2 + $0xd8] sm:$0xff] %vm664, %v2953
      %2990 = vst.msk [vmem:[#allocation2 + $0xe0] sm:$0xff] %vm664, %v2954
      %2991 = vst.msk [vmem:[#allocation2 + $0xe8] sm:$0xff] %vm664, %v2955
      %2992 = vst.msk [vmem:[#allocation2 + $0xf0] sm:$0xff] %vm664, %v2956
      %2993 = vst.msk [vmem:[#allocation2 + $0xf8] sm:$0xff] %vm664, %v2957
      %2994 = vst.msk [vmem:[#allocation2 + $0x100] sm:$0xff] %vm664, %v2958
      %2995 = vst.msk [vmem:[#allocation2 + $0x108] sm:$0xff] %vm664, %v2959
      %2996 = vst.msk [vmem:[#allocation2 + $0x110] sm:$0xff] %vm664, %v2960
      %2997 = vst.msk [vmem:[#allocation2 + $0x118] sm:$0xff] %vm664, %v2961
      %v2998 = vld [vmem:[#allocation2] sm:$0xff]
      %v2999 = vld [vmem:[#allocation2 + $0x8] sm:$0xff]
      %v3000 = vld [vmem:[#allocation2 + $0x10] sm:$0xff]
      %v3001 = vld [vmem:[#allocation2 + $0x18] sm:$0xff]
      %v3002 = vld [vmem:[#allocation2 + $0x20] sm:$0xff]
      %v3003 = vld [vmem:[#allocation2 + $0x28] sm:$0xff]
      %v3004 = vld [vmem:[#allocation2 + $0x30] sm:$0xff]
      %v3005 = vld [vmem:[#allocation2 + $0x38] sm:$0xff]
      %v3006 = vld [vmem:[#allocation2 + $0x40] sm:$0xff]
      %v3007 = vld [vmem:[#allocation2 + $0x48] sm:$0xff]
      %v3008 = vld [vmem:[#allocation2 + $0x50] sm:$0xff]
      %v3009 = vld [vmem:[#allocation2 + $0x58] sm:$0xff]
      %v3010 = vld [vmem:[#allocation2 + $0x60] sm:$0xff]
      %v3011 = vld [vmem:[#allocation2 + $0x68] sm:$0xff]
      %v3012 = vld [vmem:[#allocation2 + $0x70] sm:$0xff]
      %v3013 = vld [vmem:[#allocation2 + $0x78] sm:$0xff]
      %v3014 = vld [vmem:[#allocation2 + $0x80] sm:$0xff]
      %v3015 = vld [vmem:[#allocation2 + $0x88] sm:$0xff]
      %v3016 = vld [vmem:[#allocation2 + $0x90] sm:$0xff]
      %v3017 = vld [vmem:[#allocation2 + $0x98] sm:$0xff]
      %v3018 = vld [vmem:[#allocation2 + $0xa0] sm:$0xff]
      %v3019 = vld [vmem:[#allocation2 + $0xa8] sm:$0xff]
      %v3020 = vld [vmem:[#allocation2 + $0xb0] sm:$0xff]
      %v3021 = vld [vmem:[#allocation2 + $0xb8] sm:$0xff]
      %v3022 = vld [vmem:[#allocation2 + $0xc0] sm:$0xff]
      %v3023 = vld [vmem:[#allocation2 + $0xc8] sm:$0xff]
      %v3024 = vld [vmem:[#allocation2 + $0xd0] sm:$0xff]
      %v3025 = vld [vmem:[#allocation2 + $0xd8] sm:$0xff]
      %v3026 = vld [vmem:[#allocation2 + $0xe0] sm:$0xff]
      %v3027 = vld [vmem:[#allocation2 + $0xe8] sm:$0xff]
      %v3028 = vld [vmem:[#allocation2 + $0xf0] sm:$0xff]
      %v3029 = vld [vmem:[#allocation2 + $0xf8] sm:$0xff]
      %v3030 = vld [vmem:[#allocation2 + $0x100] sm:$0xff]
      %v3031 = vld [vmem:[#allocation2 + $0x108] sm:$0xff]
      %v3032 = vld [vmem:[#allocation2 + $0x110] sm:$0xff]
      %v3033 = vld [vmem:[#allocation2 + $0x118] sm:$0xff]
      %s3034 = scalar_lea.vmem %s239, 14
      %v3035 = vld [vmem:[%s3034] sm:$0x3]
      %vm3036 = vsmask.f32 5376
      %v3037 = vrot.slane %v758, 2
      %v3038 = vrot.slane %v754, 3
      %v3039 = vor.u32 %v3037, %v3038
      %v3040 = vrot.slane %v765, 2
      %v3041 = vrot.slane %v761, 3
      %v3042 = vor.u32 %v3040, %v3041
      %v3043 = vsel %vm3036, %v3039, %v3042
      %v3044 = vrot.slane %v772, 2
      %v3045 = vrot.slane %v768, 3
      %v3046 = vor.u32 %v3044, %v3045
      %v3047 = vsel %vm3036, %v3042, %v3046
      %v3048 = vrot.slane %v779, 2
      %v3049 = vrot.slane %v775, 3
      %v3050 = vor.u32 %v3048, %v3049
      %v3051 = vsel %vm3036, %v3046, %v3050
      %v3052 = vrot.slane %v786, 2
      %v3053 = vrot.slane %v782, 3
      %v3054 = vor.u32 %v3052, %v3053
      %v3055 = vsel %vm3036, %v3050, %v3054
      %v3056 = vrot.slane %v793, 2
      %v3057 = vrot.slane %v789, 3
      %v3058 = vor.u32 %v3056, %v3057
      %v3059 = vsel %vm3036, %v3054, %v3058
      %v3060 = vrot.slane %v800, 2
      %v3061 = vrot.slane %v796, 3
      %v3062 = vor.u32 %v3060, %v3061
      %v3063 = vsel %vm3036, %v3058, %v3062
      %v3064 = vrot.slane %v807, 2
      %v3065 = vrot.slane %v803, 3
      %v3066 = vor.u32 %v3064, %v3065
      %v3067 = vsel %vm3036, %v3062, %v3066
      %v3068 = vrot.slane %v814, 2
      %v3069 = vrot.slane %v810, 3
      %v3070 = vor.u32 %v3068, %v3069
      %v3071 = vsel %vm3036, %v3066, %v3070
      %v3072 = vrot.slane %v821, 2
      %v3073 = vrot.slane %v817, 3
      %v3074 = vor.u32 %v3072, %v3073
      %v3075 = vsel %vm3036, %v3070, %v3074
      %v3076 = vrot.slane %v828, 2
      %v3077 = vrot.slane %v824, 3
      %v3078 = vor.u32 %v3076, %v3077
      %v3079 = vsel %vm3036, %v3074, %v3078
      %v3080 = vrot.slane %v835, 2
      %v3081 = vrot.slane %v831, 3
      %v3082 = vor.u32 %v3080, %v3081
      %v3083 = vsel %vm3036, %v3078, %v3082
      %v3084 = vrot.slane %v842, 2
      %v3085 = vrot.slane %v838, 3
      %v3086 = vor.u32 %v3084, %v3085
      %v3087 = vsel %vm3036, %v3082, %v3086
      %v3088 = vrot.slane %v849, 2
      %v3089 = vrot.slane %v845, 3
      %v3090 = vor.u32 %v3088, %v3089
      %v3091 = vsel %vm3036, %v3086, %v3090
      %v3092 = vrot.slane %v856, 2
      %v3093 = vrot.slane %v852, 3
      %v3094 = vor.u32 %v3092, %v3093
      %v3095 = vsel %vm3036, %v3090, %v3094
      %v3096 = vrot.slane %v863, 2
      %v3097 = vrot.slane %v859, 3
      %v3098 = vor.u32 %v3096, %v3097
      %v3099 = vsel %vm3036, %v3094, %v3098
      %v3100 = vrot.slane %v1989, 2
      %v3101 = vrot.slane %v1992, 3
      %v3102 = vor.u32 %v3100, %v3101
      %v3103 = vsel %vm3036, %v3098, %v3102
      %v3105 = vshrl.u32 %v2694, 16
      %v3107 = vrot.slane %v3105, 2
      %v3108 = vshll.u32 %v2694, 16
      %v3110 = vrot.slane %v3108, 3
      %v3111 = vor.u32 %v3107, %v3110
      %v3112 = vsel %vm3036, %v3102, %v3111
      %v3114 = vshrl.u32 %v2695, 16
      %v3116 = vrot.slane %v3114, 2
      %v3117 = vshll.u32 %v2695, 16
      %v3119 = vrot.slane %v3117, 3
      %v3120 = vor.u32 %v3116, %v3119
      %v3121 = vsel %vm3036, %v3111, %v3120
      %v3123 = vsel %vm389, %v3043, 0
      %v3126 = vsel %vm389, %v3047, 0
      %v3129 = vsel %vm389, %v3051, 0
      %v3132 = vsel %vm389, %v3055, 0
      %v3135 = vsel %vm389, %v3059, 0
      %v3138 = vsel %vm389, %v3063, 0
      %v3141 = vsel %vm389, %v3067, 0
      %v3144 = vsel %vm389, %v3071, 0
      %v3147 = vsel %vm389, %v3075, 0
      %v3150 = vsel %vm389, %v3079, 0
      %v3153 = vsel %vm389, %v3083, 0
      %v3156 = vsel %vm389, %v3087, 0
      %v3159 = vsel %vm389, %v3091, 0
      %v3162 = vsel %vm389, %v3095, 0
      %v3165 = vsel %vm389, %v3099, 0
      %v3168 = vsel %vm389, %v3103, 0
      %v3171 = vsel %vm389, %v3112, 0
      %v3174 = vsel %vm389, %v3121, 0
      %v3177 = vand.u32 %v3035, %v447
      %3179 = vmatprep.subr.bf16.mxu0 0
      %3180 = vmatpush1.bf16.msra.mxu0 0
      %3181 = vmatprep.subr.bf16.mxu0 0
      %3182 = vmatpush1.bf16.msra.mxu0 0
      %3183 = vmatprep.subr.bf16.mxu0 0
      %3184 = vmatpush1.bf16.msra.mxu0 0
      %3185 = vmatprep.subr.bf16.mxu0 0
      %3186 = vmatpush1.bf16.msra.mxu0 0
      %3187 = vmatprep.subr.bf16.mxu0 0
      %3188 = vmatpush1.bf16.msra.mxu0 0
      %3189 = vmatprep.subr.bf16.mxu0 0
      %3190 = vmatpush1.bf16.msra.mxu0 0
      %3191 = vmatprep.subr.bf16.mxu0 0
      %3192 = vmatpush1.bf16.msra.mxu0 0
      %3193 = vmatprep.subr.bf16.mxu0 0
      %3194 = vmatpush1.bf16.msra.mxu0 %v3177
      %3195 = vmatprep.subr.bf16.mxu0 0
      %3196 = vmatpush2.bf16.msra.mxu0 0
      %3197 = vmatprep.subr.bf16.mxu0 0
      %3198 = vmatpush2.bf16.msra.mxu0 0
      %3199 = vmatprep.subr.bf16.mxu0 0
      %3200 = vmatpush2.bf16.msra.mxu0 0
      %3201 = vmatprep.subr.bf16.mxu0 0
      %3202 = vmatpush2.bf16.msra.mxu0 0
      %3203 = vmatprep.subr.bf16.mxu0 0
      %3204 = vmatpush2.bf16.msra.mxu0 0
      %3205 = vmatprep.subr.bf16.mxu0 0
      %3206 = vmatpush2.bf16.msra.mxu0 0
      %3207 = vmatprep.subr.bf16.mxu0 0
      %3208 = vmatpush2.bf16.msra.mxu0 0
      %3209 = vmatprep.subr.bf16.mxu0 0
      %3210 = vmatpush2.bf16.msra.mxu0 0
      %3211 = vmatprep.mubr.bf16.mxu0 0
      %3212 = vmatmul.mubr.bf16.gmra.mxu0 %v3123
      %v3213 = vpop.f32.mrf.mxu0
      %v3214 = vadd.f32 0.0, %v3213
      %v3215 = vpop.f32.mrf.mxu0
      %v3216 = vpop.f32.mrf.mxu0
      %v3217 = vadd.f32 0.0, %v3216
      %v3218 = vpop.f32.mrf.mxu0
      %3219 = vmatprep.mubr.bf16.mxu0 0
      %3220 = vmatmul.mubr.bf16.gmra.mxu0 %v3126
      %v3221 = vpop.f32.mrf.mxu0
      %v3222 = vadd.f32 0.0, %v3221
      %v3223 = vpop.f32.mrf.mxu0
      %v3224 = vpop.f32.mrf.mxu0
      %v3225 = vadd.f32 0.0, %v3224
      %v3226 = vpop.f32.mrf.mxu0
      %3227 = vmatprep.mubr.bf16.mxu0 0
      %3228 = vmatmul.mubr.bf16.gmra.mxu0 %v3129
      %v3229 = vpop.f32.mrf.mxu0
      %v3230 = vadd.f32 0.0, %v3229
      %v3231 = vpop.f32.mrf.mxu0
      %v3232 = vpop.f32.mrf.mxu0
      %v3233 = vadd.f32 0.0, %v3232
      %v3234 = vpop.f32.mrf.mxu0
      %3235 = vmatprep.mubr.bf16.mxu0 0
      %3236 = vmatmul.mubr.bf16.gmra.mxu0 %v3132
      %v3237 = vpop.f32.mrf.mxu0
      %v3238 = vadd.f32 0.0, %v3237
      %v3239 = vpop.f32.mrf.mxu0
      %v3240 = vpop.f32.mrf.mxu0
      %v3241 = vadd.f32 0.0, %v3240
      %v3242 = vpop.f32.mrf.mxu0
      %3243 = vmatprep.mubr.bf16.mxu0 0
      %3244 = vmatmul.mubr.bf16.gmra.mxu0 %v3135
      %v3245 = vpop.f32.mrf.mxu0
      %v3246 = vadd.f32 0.0, %v3245
      %v3247 = vpop.f32.mrf.mxu0
      %v3248 = vpop.f32.mrf.mxu0
      %v3249 = vadd.f32 0.0, %v3248
      %v3250 = vpop.f32.mrf.mxu0
      %3251 = vmatprep.mubr.bf16.mxu0 0
      %3252 = vmatmul.mubr.bf16.gmra.mxu0 %v3138
      %v3253 = vpop.f32.mrf.mxu0
      %v3254 = vadd.f32 0.0, %v3253
      %v3255 = vpop.f32.mrf.mxu0
      %v3256 = vpop.f32.mrf.mxu0
      %v3257 = vadd.f32 0.0, %v3256
      %v3258 = vpop.f32.mrf.mxu0
      %3259 = vmatprep.mubr.bf16.mxu0 0
      %3260 = vmatmul.mubr.bf16.gmra.mxu0 %v3141
      %v3261 = vpop.f32.mrf.mxu0
      %v3262 = vadd.f32 0.0, %v3261
      %v3263 = vpop.f32.mrf.mxu0
      %v3264 = vpop.f32.mrf.mxu0
      %v3265 = vadd.f32 0.0, %v3264
      %v3266 = vpop.f32.mrf.mxu0
      %3267 = vmatprep.mubr.bf16.mxu0 0
      %3268 = vmatmul.mubr.bf16.gmra.mxu0 %v3144
      %v3269 = vpop.f32.mrf.mxu0
      %v3270 = vadd.f32 0.0, %v3269
      %v3271 = vpop.f32.mrf.mxu0
      %v3272 = vpop.f32.mrf.mxu0
      %v3273 = vadd.f32 0.0, %v3272
      %v3274 = vpop.f32.mrf.mxu0
      %3275 = vmatprep.mubr.bf16.mxu0 0
      %3276 = vmatmul.mubr.bf16.gmra.mxu0 %v3147
      %v3277 = vpop.f32.mrf.mxu0
      %v3278 = vadd.f32 0.0, %v3277
      %v3279 = vpop.f32.mrf.mxu0
      %v3280 = vpop.f32.mrf.mxu0
      %v3281 = vadd.f32 0.0, %v3280
      %v3282 = vpop.f32.mrf.mxu0
      %3283 = vmatprep.mubr.bf16.mxu0 0
      %3284 = vmatmul.mubr.bf16.gmra.mxu0 %v3150
      %v3285 = vpop.f32.mrf.mxu0
      %v3286 = vadd.f32 0.0, %v3285
      %v3287 = vpop.f32.mrf.mxu0
      %v3288 = vpop.f32.mrf.mxu0
      %v3289 = vadd.f32 0.0, %v3288
      %v3290 = vpop.f32.mrf.mxu0
      %3291 = vmatprep.mubr.bf16.mxu0 0
      %3292 = vmatmul.mubr.bf16.gmra.mxu0 %v3153
      %v3293 = vpop.f32.mrf.mxu0
      %v3294 = vadd.f32 0.0, %v3293
      %v3295 = vpop.f32.mrf.mxu0
      %v3296 = vpop.f32.mrf.mxu0
      %v3297 = vadd.f32 0.0, %v3296
      %v3298 = vpop.f32.mrf.mxu0
      %3299 = vmatprep.mubr.bf16.mxu0 0
      %3300 = vmatmul.mubr.bf16.gmra.mxu0 %v3156
      %v3301 = vpop.f32.mrf.mxu0
      %v3302 = vadd.f32 0.0, %v3301
      %v3303 = vpop.f32.mrf.mxu0
      %v3304 = vpop.f32.mrf.mxu0
      %v3305 = vadd.f32 0.0, %v3304
      %v3306 = vpop.f32.mrf.mxu0
      %3307 = vmatprep.mubr.bf16.mxu0 0
      %3308 = vmatmul.mubr.bf16.gmra.mxu0 %v3159
      %v3309 = vpop.f32.mrf.mxu0
      %v3310 = vadd.f32 0.0, %v3309
      %v3311 = vpop.f32.mrf.mxu0
      %v3312 = vpop.f32.mrf.mxu0
      %v3313 = vadd.f32 0.0, %v3312
      %v3314 = vpop.f32.mrf.mxu0
      %3315 = vmatprep.mubr.bf16.mxu0 0
      %3316 = vmatmul.mubr.bf16.gmra.mxu0 %v3162
      %v3317 = vpop.f32.mrf.mxu0
      %v3318 = vadd.f32 0.0, %v3317
      %v3319 = vpop.f32.mrf.mxu0
      %v3320 = vpop.f32.mrf.mxu0
      %v3321 = vadd.f32 0.0, %v3320
      %v3322 = vpop.f32.mrf.mxu0
      %3323 = vmatprep.mubr.bf16.mxu0 0
      %3324 = vmatmul.mubr.bf16.gmra.mxu0 %v3165
      %v3325 = vpop.f32.mrf.mxu0
      %v3326 = vadd.f32 0.0, %v3325
      %v3327 = vpop.f32.mrf.mxu0
      %v3328 = vpop.f32.mrf.mxu0
      %v3329 = vadd.f32 0.0, %v3328
      %v3330 = vpop.f32.mrf.mxu0
      %3331 = vmatprep.mubr.bf16.mxu0 0
      %3332 = vmatmul.mubr.bf16.gmra.mxu0 %v3168
      %v3333 = vpop.f32.mrf.mxu0
      %v3334 = vadd.f32 0.0, %v3333
      %v3335 = vpop.f32.mrf.mxu0
      %v3336 = vpop.f32.mrf.mxu0
      %v3337 = vadd.f32 0.0, %v3336
      %v3338 = vpop.f32.mrf.mxu0
      %3339 = vmatprep.mubr.bf16.mxu0 0
      %3340 = vmatmul.mubr.bf16.gmra.mxu0 %v3171
      %v3341 = vpop.f32.mrf.mxu0
      %v3342 = vadd.f32 0.0, %v3341
      %v3343 = vpop.f32.mrf.mxu0
      %v3344 = vpop.f32.mrf.mxu0
      %v3345 = vadd.f32 0.0, %v3344
      %v3346 = vpop.f32.mrf.mxu0
      %3347 = vmatprep.mubr.bf16.mxu0 0
      %3348 = vmatmul.mubr.bf16.gmra.mxu0 %v3174
      %v3349 = vpop.f32.mrf.mxu0
      %v3350 = vadd.f32 0.0, %v3349
      %v3351 = vpop.f32.mrf.mxu0
      %v3352 = vpop.f32.mrf.mxu0
      %v3353 = vadd.f32 0.0, %v3352
      %v3354 = vpop.f32.mrf.mxu0
      %3355 = vdwg.mxu0
      %v3356 = vadd.f32 %v2998, %v3214
      %v3357 = vadd.f32 %v2999, %v3217
      %v3358 = vadd.f32 %v3000, %v3222
      %v3359 = vadd.f32 %v3001, %v3225
      %v3360 = vadd.f32 %v3002, %v3230
      %v3361 = vadd.f32 %v3003, %v3233
      %v3362 = vadd.f32 %v3004, %v3238
      %v3363 = vadd.f32 %v3005, %v3241
      %v3364 = vadd.f32 %v3006, %v3246
      %v3365 = vadd.f32 %v3007, %v3249
      %v3366 = vadd.f32 %v3008, %v3254
      %v3367 = vadd.f32 %v3009, %v3257
      %v3368 = vadd.f32 %v3010, %v3262
      %v3369 = vadd.f32 %v3011, %v3265
      %v3370 = vadd.f32 %v3012, %v3270
      %v3371 = vadd.f32 %v3013, %v3273
      %v3372 = vadd.f32 %v3014, %v3278
      %v3373 = vadd.f32 %v3015, %v3281
      %v3374 = vadd.f32 %v3016, %v3286
      %v3375 = vadd.f32 %v3017, %v3289
      %v3376 = vadd.f32 %v3018, %v3294
      %v3377 = vadd.f32 %v3019, %v3297
      %v3378 = vadd.f32 %v3020, %v3302
      %v3379 = vadd.f32 %v3021, %v3305
      %v3380 = vadd.f32 %v3022, %v3310
      %v3381 = vadd.f32 %v3023, %v3313
      %v3382 = vadd.f32 %v3024, %v3318
      %v3383 = vadd.f32 %v3025, %v3321
      %v3384 = vadd.f32 %v3026, %v3326
      %v3385 = vadd.f32 %v3027, %v3329
      %v3386 = vadd.f32 %v3028, %v3334
      %v3387 = vadd.f32 %v3029, %v3337
      %v3388 = vadd.f32 %v3030, %v3342
      %v3389 = vadd.f32 %v3031, %v3345
      %v3390 = vadd.f32 %v3032, %v3350
      %v3391 = vadd.f32 %v3033, %v3353
      %3392 = vst.msk [vmem:[#allocation2] sm:$0xff] %vm664, %v3356
      %3393 = vst.msk [vmem:[#allocation2 + $0x8] sm:$0xff] %vm664, %v3357
      %3394 = vst.msk [vmem:[#allocation2 + $0x10] sm:$0xff] %vm664, %v3358
      %3395 = vst.msk [vmem:[#allocation2 + $0x18] sm:$0xff] %vm664, %v3359
      %3396 = vst.msk [vmem:[#allocation2 + $0x20] sm:$0xff] %vm664, %v3360
      %3397 = vst.msk [vmem:[#allocation2 + $0x28] sm:$0xff] %vm664, %v3361
      %3398 = vst.msk [vmem:[#allocation2 + $0x30] sm:$0xff] %vm664, %v3362
      %3399 = vst.msk [vmem:[#allocation2 + $0x38] sm:$0xff] %vm664, %v3363
      %3400 = vst.msk [vmem:[#allocation2 + $0x40] sm:$0xff] %vm664, %v3364
      %3401 = vst.msk [vmem:[#allocation2 + $0x48] sm:$0xff] %vm664, %v3365
      %3402 = vst.msk [vmem:[#allocation2 + $0x50] sm:$0xff] %vm664, %v3366
      %3403 = vst.msk [vmem:[#allocation2 + $0x58] sm:$0xff] %vm664, %v3367
      %3404 = vst.msk [vmem:[#allocation2 + $0x60] sm:$0xff] %vm664, %v3368
      %3405 = vst.msk [vmem:[#allocation2 + $0x68] sm:$0xff] %vm664, %v3369
      %3406 = vst.msk [vmem:[#allocation2 + $0x70] sm:$0xff] %vm664, %v3370
      %3407 = vst.msk [vmem:[#allocation2 + $0x78] sm:$0xff] %vm664, %v3371
      %3408 = vst.msk [vmem:[#allocation2 + $0x80] sm:$0xff] %vm664, %v3372
      %3409 = vst.msk [vmem:[#allocation2 + $0x88] sm:$0xff] %vm664, %v3373
      %3410 = vst.msk [vmem:[#allocation2 + $0x90] sm:$0xff] %vm664, %v3374
      %3411 = vst.msk [vmem:[#allocation2 + $0x98] sm:$0xff] %vm664, %v3375
      %3412 = vst.msk [vmem:[#allocation2 + $0xa0] sm:$0xff] %vm664, %v3376
      %3413 = vst.msk [vmem:[#allocation2 + $0xa8] sm:$0xff] %vm664, %v3377
      %3414 = vst.msk [vmem:[#allocation2 + $0xb0] sm:$0xff] %vm664, %v3378
      %3415 = vst.msk [vmem:[#allocation2 + $0xb8] sm:$0xff] %vm664, %v3379
      %3416 = vst.msk [vmem:[#allocation2 + $0xc0] sm:$0xff] %vm664, %v3380
      %3417 = vst.msk [vmem:[#allocation2 + $0xc8] sm:$0xff] %vm664, %v3381
      %3418 = vst.msk [vmem:[#allocation2 + $0xd0] sm:$0xff] %vm664, %v3382
      %3419 = vst.msk [vmem:[#allocation2 + $0xd8] sm:$0xff] %vm664, %v3383
      %3420 = vst.msk [vmem:[#allocation2 + $0xe0] sm:$0xff] %vm664, %v3384
      %3421 = vst.msk [vmem:[#allocation2 + $0xe8] sm:$0xff] %vm664, %v3385
      %3422 = vst.msk [vmem:[#allocation2 + $0xf0] sm:$0xff] %vm664, %v3386
      %3423 = vst.msk [vmem:[#allocation2 + $0xf8] sm:$0xff] %vm664, %v3387
      %3424 = vst.msk [vmem:[#allocation2 + $0x100] sm:$0xff] %vm664, %v3388
      %3425 = vst.msk [vmem:[#allocation2 + $0x108] sm:$0xff] %vm664, %v3389
      %3426 = vst.msk [vmem:[#allocation2 + $0x110] sm:$0xff] %vm664, %v3390
      %3427 = vst.msk [vmem:[#allocation2 + $0x118] sm:$0xff] %vm664, %v3391
      %v3428 = vld [vmem:[#allocation2] sm:$0xff]
      %v3429 = vld [vmem:[#allocation2 + $0x8] sm:$0xff]
      %v3430 = vld [vmem:[#allocation2 + $0x10] sm:$0xff]
      %v3431 = vld [vmem:[#allocation2 + $0x18] sm:$0xff]
      %v3432 = vld [vmem:[#allocation2 + $0x20] sm:$0xff]
      %v3433 = vld [vmem:[#allocation2 + $0x28] sm:$0xff]
      %v3434 = vld [vmem:[#allocation2 + $0x30] sm:$0xff]
      %v3435 = vld [vmem:[#allocation2 + $0x38] sm:$0xff]
      %v3436 = vld [vmem:[#allocation2 + $0x40] sm:$0xff]
      %v3437 = vld [vmem:[#allocation2 + $0x48] sm:$0xff]
      %v3438 = vld [vmem:[#allocation2 + $0x50] sm:$0xff]
      %v3439 = vld [vmem:[#allocation2 + $0x58] sm:$0xff]
      %v3440 = vld [vmem:[#allocation2 + $0x60] sm:$0xff]
      %v3441 = vld [vmem:[#allocation2 + $0x68] sm:$0xff]
      %v3442 = vld [vmem:[#allocation2 + $0x70] sm:$0xff]
      %v3443 = vld [vmem:[#allocation2 + $0x78] sm:$0xff]
      %v3444 = vld [vmem:[#allocation2 + $0x80] sm:$0xff]
      %v3445 = vld [vmem:[#allocation2 + $0x88] sm:$0xff]
      %v3446 = vld [vmem:[#allocation2 + $0x90] sm:$0xff]
      %v3447 = vld [vmem:[#allocation2 + $0x98] sm:$0xff]
      %v3448 = vld [vmem:[#allocation2 + $0xa0] sm:$0xff]
      %v3449 = vld [vmem:[#allocation2 + $0xa8] sm:$0xff]
      %v3450 = vld [vmem:[#allocation2 + $0xb0] sm:$0xff]
      %v3451 = vld [vmem:[#allocation2 + $0xb8] sm:$0xff]
      %v3452 = vld [vmem:[#allocation2 + $0xc0] sm:$0xff]
      %v3453 = vld [vmem:[#allocation2 + $0xc8] sm:$0xff]
      %v3454 = vld [vmem:[#allocation2 + $0xd0] sm:$0xff]
      %v3455 = vld [vmem:[#allocation2 + $0xd8] sm:$0xff]
      %v3456 = vld [vmem:[#allocation2 + $0xe0] sm:$0xff]
      %v3457 = vld [vmem:[#allocation2 + $0xe8] sm:$0xff]
      %v3458 = vld [vmem:[#allocation2 + $0xf0] sm:$0xff]
      %v3459 = vld [vmem:[#allocation2 + $0xf8] sm:$0xff]
      %v3460 = vld [vmem:[#allocation2 + $0x100] sm:$0xff]
      %v3461 = vld [vmem:[#allocation2 + $0x108] sm:$0xff]
      %v3462 = vld [vmem:[#allocation2 + $0x110] sm:$0xff]
      %v3463 = vld [vmem:[#allocation2 + $0x118] sm:$0xff]
      %s3464 = scalar_lea.vmem %s239, 16
      %v3465 = vld [vmem:[%s3464] sm:$0x3]
      %vm3466 = vcmask 1044480
      %v3467 = vrot.slane %v336, 3
      %v3468 = vrot.slane %v337, 3
      %v3469 = vsel %vm3466, %v3467, %v3468
      %v3470 = vrot.slane %v338, 3
      %v3471 = vsel %vm3466, %v3468, %v3470
      %v3472 = vrot.slane %v339, 3
      %v3473 = vsel %vm3466, %v3470, %v3472
      %v3474 = vrot.slane %v340, 3
      %v3475 = vsel %vm3466, %v3472, %v3474
      %v3476 = vrot.slane %v341, 3
      %v3477 = vsel %vm3466, %v3474, %v3476
      %v3478 = vrot.slane %v342, 3
      %v3479 = vsel %vm3466, %v3476, %v3478
      %v3480 = vrot.slane %v343, 3
      %v3481 = vsel %vm3466, %v3478, %v3480
      %v3482 = vrot.slane %v344, 3
      %v3483 = vsel %vm3466, %v3480, %v3482
      %v3484 = vrot.slane %v345, 3
      %v3485 = vsel %vm3466, %v3482, %v3484
      %v3486 = vrot.slane %v346, 3
      %v3487 = vsel %vm3466, %v3484, %v3486
      %v3488 = vrot.slane %v347, 3
      %v3489 = vsel %vm3466, %v3486, %v3488
      %v3490 = vrot.slane %v348, 3
      %v3491 = vsel %vm3466, %v3488, %v3490
      %v3492 = vrot.slane %v349, 3
      %v3493 = vsel %vm3466, %v3490, %v3492
      %v3494 = vrot.slane %v350, 3
      %v3495 = vsel %vm3466, %v3492, %v3494
      %v3496 = vrot.slane %v351, 3
      %v3497 = vsel %vm3466, %v3494, %v3496
      %v3498 = vrot.slane %v1578, 3
      %v3499 = vsel %vm3466, %v3496, %v3498
      %v3500 = vrot.slane %v2694, 3
      %v3501 = vsel %vm3466, %v3498, %v3500
      %v3502 = vrot.slane %v2695, 3
      %v3503 = vsel %vm3466, %v3500, %v3502
      %v3505 = vsel %vm389, %v3469, 0
      %v3508 = vsel %vm389, %v3471, 0
      %v3511 = vsel %vm389, %v3473, 0
      %v3514 = vsel %vm389, %v3475, 0
      %v3517 = vsel %vm389, %v3477, 0
      %v3520 = vsel %vm389, %v3479, 0
      %v3523 = vsel %vm389, %v3481, 0
      %v3526 = vsel %vm389, %v3483, 0
      %v3529 = vsel %vm389, %v3485, 0
      %v3532 = vsel %vm389, %v3487, 0
      %v3535 = vsel %vm389, %v3489, 0
      %v3538 = vsel %vm389, %v3491, 0
      %v3541 = vsel %vm389, %v3493, 0
      %v3544 = vsel %vm389, %v3495, 0
      %v3547 = vsel %vm389, %v3497, 0
      %v3550 = vsel %vm389, %v3499, 0
      %v3553 = vsel %vm389, %v3501, 0
      %v3556 = vsel %vm389, %v3503, 0
      %v3559 = vand.u32 %v3465, %v447
      %3561 = vmatprep.subr.bf16.mxu0 0
      %3562 = vmatpush1.bf16.msra.mxu0 0
      %3563 = vmatprep.subr.bf16.mxu0 0
      %3564 = vmatpush1.bf16.msra.mxu0 0
      %3565 = vmatprep.subr.bf16.mxu0 0
      %3566 = vmatpush1.bf16.msra.mxu0 0
      %3567 = vmatprep.subr.bf16.mxu0 0
      %3568 = vmatpush1.bf16.msra.mxu0 0
      %3569 = vmatprep.subr.bf16.mxu0 0
      %3570 = vmatpush1.bf16.msra.mxu0 0
      %3571 = vmatprep.subr.bf16.mxu0 0
      %3572 = vmatpush1.bf16.msra.mxu0 0
      %3573 = vmatprep.subr.bf16.mxu0 0
      %3574 = vmatpush1.bf16.msra.mxu0 0
      %3575 = vmatprep.subr.bf16.mxu0 0
      %3576 = vmatpush1.bf16.msra.mxu0 %v3559
      %3577 = vmatprep.subr.bf16.mxu0 0
      %3578 = vmatpush2.bf16.msra.mxu0 0
      %3579 = vmatprep.subr.bf16.mxu0 0
      %3580 = vmatpush2.bf16.msra.mxu0 0
      %3581 = vmatprep.subr.bf16.mxu0 0
      %3582 = vmatpush2.bf16.msra.mxu0 0
      %3583 = vmatprep.subr.bf16.mxu0 0
      %3584 = vmatpush2.bf16.msra.mxu0 0
      %3585 = vmatprep.subr.bf16.mxu0 0
      %3586 = vmatpush2.bf16.msra.mxu0 0
      %3587 = vmatprep.subr.bf16.mxu0 0
      %3588 = vmatpush2.bf16.msra.mxu0 0
      %3589 = vmatprep.subr.bf16.mxu0 0
      %3590 = vmatpush2.bf16.msra.mxu0 0
      %3591 = vmatprep.subr.bf16.mxu0 0
      %3592 = vmatpush2.bf16.msra.mxu0 0
      %3593 = vmatprep.mubr.bf16.mxu0 0
      %3594 = vmatmul.mubr.bf16.gmra.mxu0 %v3505
      %v3595 = vpop.f32.mrf.mxu0
      %v3596 = vadd.f32 0.0, %v3595
      %v3597 = vpop.f32.mrf.mxu0
      %v3598 = vpop.f32.mrf.mxu0
      %v3599 = vadd.f32 0.0, %v3598
      %v3600 = vpop.f32.mrf.mxu0
      %3601 = vmatprep.mubr.bf16.mxu0 0
      %3602 = vmatmul.mubr.bf16.gmra.mxu0 %v3508
      %v3603 = vpop.f32.mrf.mxu0
      %v3604 = vadd.f32 0.0, %v3603
      %v3605 = vpop.f32.mrf.mxu0
      %v3606 = vpop.f32.mrf.mxu0
      %v3607 = vadd.f32 0.0, %v3606
      %v3608 = vpop.f32.mrf.mxu0
      %3609 = vmatprep.mubr.bf16.mxu0 0
      %3610 = vmatmul.mubr.bf16.gmra.mxu0 %v3511
      %v3611 = vpop.f32.mrf.mxu0
      %v3612 = vadd.f32 0.0, %v3611
      %v3613 = vpop.f32.mrf.mxu0
      %v3614 = vpop.f32.mrf.mxu0
      %v3615 = vadd.f32 0.0, %v3614
      %v3616 = vpop.f32.mrf.mxu0
      %3617 = vmatprep.mubr.bf16.mxu0 0
      %3618 = vmatmul.mubr.bf16.gmra.mxu0 %v3514
      %v3619 = vpop.f32.mrf.mxu0
      %v3620 = vadd.f32 0.0, %v3619
      %v3621 = vpop.f32.mrf.mxu0
      %v3622 = vpop.f32.mrf.mxu0
      %v3623 = vadd.f32 0.0, %v3622
      %v3624 = vpop.f32.mrf.mxu0
      %3625 = vmatprep.mubr.bf16.mxu0 0
      %3626 = vmatmul.mubr.bf16.gmra.mxu0 %v3517
      %v3627 = vpop.f32.mrf.mxu0
      %v3628 = vadd.f32 0.0, %v3627
      %v3629 = vpop.f32.mrf.mxu0
      %v3630 = vpop.f32.mrf.mxu0
      %v3631 = vadd.f32 0.0, %v3630
      %v3632 = vpop.f32.mrf.mxu0
      %3633 = vmatprep.mubr.bf16.mxu0 0
      %3634 = vmatmul.mubr.bf16.gmra.mxu0 %v3520
      %v3635 = vpop.f32.mrf.mxu0
      %v3636 = vadd.f32 0.0, %v3635
      %v3637 = vpop.f32.mrf.mxu0
      %v3638 = vpop.f32.mrf.mxu0
      %v3639 = vadd.f32 0.0, %v3638
      %v3640 = vpop.f32.mrf.mxu0
      %3641 = vmatprep.mubr.bf16.mxu0 0
      %3642 = vmatmul.mubr.bf16.gmra.mxu0 %v3523
      %v3643 = vpop.f32.mrf.mxu0
      %v3644 = vadd.f32 0.0, %v3643
      %v3645 = vpop.f32.mrf.mxu0
      %v3646 = vpop.f32.mrf.mxu0
      %v3647 = vadd.f32 0.0, %v3646
      %v3648 = vpop.f32.mrf.mxu0
      %3649 = vmatprep.mubr.bf16.mxu0 0
      %3650 = vmatmul.mubr.bf16.gmra.mxu0 %v3526
      %v3651 = vpop.f32.mrf.mxu0
      %v3652 = vadd.f32 0.0, %v3651
      %v3653 = vpop.f32.mrf.mxu0
      %v3654 = vpop.f32.mrf.mxu0
      %v3655 = vadd.f32 0.0, %v3654
      %v3656 = vpop.f32.mrf.mxu0
      %3657 = vmatprep.mubr.bf16.mxu0 0
      %3658 = vmatmul.mubr.bf16.gmra.mxu0 %v3529
      %v3659 = vpop.f32.mrf.mxu0
      %v3660 = vadd.f32 0.0, %v3659
      %v3661 = vpop.f32.mrf.mxu0
      %v3662 = vpop.f32.mrf.mxu0
      %v3663 = vadd.f32 0.0, %v3662
      %v3664 = vpop.f32.mrf.mxu0
      %3665 = vmatprep.mubr.bf16.mxu0 0
      %3666 = vmatmul.mubr.bf16.gmra.mxu0 %v3532
      %v3667 = vpop.f32.mrf.mxu0
      %v3668 = vadd.f32 0.0, %v3667
      %v3669 = vpop.f32.mrf.mxu0
      %v3670 = vpop.f32.mrf.mxu0
      %v3671 = vadd.f32 0.0, %v3670
      %v3672 = vpop.f32.mrf.mxu0
      %3673 = vmatprep.mubr.bf16.mxu0 0
      %3674 = vmatmul.mubr.bf16.gmra.mxu0 %v3535
      %v3675 = vpop.f32.mrf.mxu0
      %v3676 = vadd.f32 0.0, %v3675
      %v3677 = vpop.f32.mrf.mxu0
      %v3678 = vpop.f32.mrf.mxu0
      %v3679 = vadd.f32 0.0, %v3678
      %v3680 = vpop.f32.mrf.mxu0
      %3681 = vmatprep.mubr.bf16.mxu0 0
      %3682 = vmatmul.mubr.bf16.gmra.mxu0 %v3538
      %v3683 = vpop.f32.mrf.mxu0
      %v3684 = vadd.f32 0.0, %v3683
      %v3685 = vpop.f32.mrf.mxu0
      %v3686 = vpop.f32.mrf.mxu0
      %v3687 = vadd.f32 0.0, %v3686
      %v3688 = vpop.f32.mrf.mxu0
      %3689 = vmatprep.mubr.bf16.mxu0 0
      %3690 = vmatmul.mubr.bf16.gmra.mxu0 %v3541
      %v3691 = vpop.f32.mrf.mxu0
      %v3692 = vadd.f32 0.0, %v3691
      %v3693 = vpop.f32.mrf.mxu0
      %v3694 = vpop.f32.mrf.mxu0
      %v3695 = vadd.f32 0.0, %v3694
      %v3696 = vpop.f32.mrf.mxu0
      %3697 = vmatprep.mubr.bf16.mxu0 0
      %3698 = vmatmul.mubr.bf16.gmra.mxu0 %v3544
      %v3699 = vpop.f32.mrf.mxu0
      %v3700 = vadd.f32 0.0, %v3699
      %v3701 = vpop.f32.mrf.mxu0
      %v3702 = vpop.f32.mrf.mxu0
      %v3703 = vadd.f32 0.0, %v3702
      %v3704 = vpop.f32.mrf.mxu0
      %3705 = vmatprep.mubr.bf16.mxu0 0
      %3706 = vmatmul.mubr.bf16.gmra.mxu0 %v3547
      %v3707 = vpop.f32.mrf.mxu0
      %v3708 = vadd.f32 0.0, %v3707
      %v3709 = vpop.f32.mrf.mxu0
      %v3710 = vpop.f32.mrf.mxu0
      %v3711 = vadd.f32 0.0, %v3710
      %v3712 = vpop.f32.mrf.mxu0
      %3713 = vmatprep.mubr.bf16.mxu0 0
      %3714 = vmatmul.mubr.bf16.gmra.mxu0 %v3550
      %v3715 = vpop.f32.mrf.mxu0
      %v3716 = vadd.f32 0.0, %v3715
      %v3717 = vpop.f32.mrf.mxu0
      %v3718 = vpop.f32.mrf.mxu0
      %v3719 = vadd.f32 0.0, %v3718
      %v3720 = vpop.f32.mrf.mxu0
      %3721 = vmatprep.mubr.bf16.mxu0 0
      %3722 = vmatmul.mubr.bf16.gmra.mxu0 %v3553
      %v3723 = vpop.f32.mrf.mxu0
      %v3724 = vadd.f32 0.0, %v3723
      %v3725 = vpop.f32.mrf.mxu0
      %v3726 = vpop.f32.mrf.mxu0
      %v3727 = vadd.f32 0.0, %v3726
      %v3728 = vpop.f32.mrf.mxu0
      %3729 = vmatprep.mubr.bf16.mxu0 0
      %3730 = vmatmul.mubr.bf16.gmra.mxu0 %v3556
      %v3731 = vpop.f32.mrf.mxu0
      %v3732 = vadd.f32 0.0, %v3731
      %v3733 = vpop.f32.mrf.mxu0
      %v3734 = vpop.f32.mrf.mxu0
      %v3735 = vadd.f32 0.0, %v3734
      %v3736 = vpop.f32.mrf.mxu0
      %3737 = vdwg.mxu0
      %v3738 = vadd.f32 %v3428, %v3596
      %v3739 = vadd.f32 %v3429, %v3599
      %v3740 = vadd.f32 %v3430, %v3604
      %v3741 = vadd.f32 %v3431, %v3607
      %v3742 = vadd.f32 %v3432, %v3612
      %v3743 = vadd.f32 %v3433, %v3615
      %v3744 = vadd.f32 %v3434, %v3620
      %v3745 = vadd.f32 %v3435, %v3623
      %v3746 = vadd.f32 %v3436, %v3628
      %v3747 = vadd.f32 %v3437, %v3631
      %v3748 = vadd.f32 %v3438, %v3636
      %v3749 = vadd.f32 %v3439, %v3639
      %v3750 = vadd.f32 %v3440, %v3644
      %v3751 = vadd.f32 %v3441, %v3647
      %v3752 = vadd.f32 %v3442, %v3652
      %v3753 = vadd.f32 %v3443, %v3655
      %v3754 = vadd.f32 %v3444, %v3660
      %v3755 = vadd.f32 %v3445, %v3663
      %v3756 = vadd.f32 %v3446, %v3668
      %v3757 = vadd.f32 %v3447, %v3671
      %v3758 = vadd.f32 %v3448, %v3676
      %v3759 = vadd.f32 %v3449, %v3679
      %v3760 = vadd.f32 %v3450, %v3684
      %v3761 = vadd.f32 %v3451, %v3687
      %v3762 = vadd.f32 %v3452, %v3692
      %v3763 = vadd.f32 %v3453, %v3695
      %v3764 = vadd.f32 %v3454, %v3700
      %v3765 = vadd.f32 %v3455, %v3703
      %v3766 = vadd.f32 %v3456, %v3708
      %v3767 = vadd.f32 %v3457, %v3711
      %v3768 = vadd.f32 %v3458, %v3716
      %v3769 = vadd.f32 %v3459, %v3719
      %v3770 = vadd.f32 %v3460, %v3724
      %v3771 = vadd.f32 %v3461, %v3727
      %v3772 = vadd.f32 %v3462, %v3732
      %v3773 = vadd.f32 %v3463, %v3735
      %3774 = vst.msk [vmem:[#allocation2] sm:$0xff] %vm664, %v3738
      %3775 = vst.msk [vmem:[#allocation2 + $0x8] sm:$0xff] %vm664, %v3739
      %3776 = vst.msk [vmem:[#allocation2 + $0x10] sm:$0xff] %vm664, %v3740
      %3777 = vst.msk [vmem:[#allocation2 + $0x18] sm:$0xff] %vm664, %v3741
      %3778 = vst.msk [vmem:[#allocation2 + $0x20] sm:$0xff] %vm664, %v3742
      %3779 = vst.msk [vmem:[#allocation2 + $0x28] sm:$0xff] %vm664, %v3743
      %3780 = vst.msk [vmem:[#allocation2 + $0x30] sm:$0xff] %vm664, %v3744
      %3781 = vst.msk [vmem:[#allocation2 + $0x38] sm:$0xff] %vm664, %v3745
      %3782 = vst.msk [vmem:[#allocation2 + $0x40] sm:$0xff] %vm664, %v3746
      %3783 = vst.msk [vmem:[#allocation2 + $0x48] sm:$0xff] %vm664, %v3747
      %3784 = vst.msk [vmem:[#allocation2 + $0x50] sm:$0xff] %vm664, %v3748
      %3785 = vst.msk [vmem:[#allocation2 + $0x58] sm:$0xff] %vm664, %v3749
      %3786 = vst.msk [vmem:[#allocation2 + $0x60] sm:$0xff] %vm664, %v3750
      %3787 = vst.msk [vmem:[#allocation2 + $0x68] sm:$0xff] %vm664, %v3751
      %3788 = vst.msk [vmem:[#allocation2 + $0x70] sm:$0xff] %vm664, %v3752
      %3789 = vst.msk [vmem:[#allocation2 + $0x78] sm:$0xff] %vm664, %v3753
      %3790 = vst.msk [vmem:[#allocation2 + $0x80] sm:$0xff] %vm664, %v3754
      %3791 = vst.msk [vmem:[#allocation2 + $0x88] sm:$0xff] %vm664, %v3755
      %3792 = vst.msk [vmem:[#allocation2 + $0x90] sm:$0xff] %vm664, %v3756
      %3793 = vst.msk [vmem:[#allocation2 + $0x98] sm:$0xff] %vm664, %v3757
      %3794 = vst.msk [vmem:[#allocation2 + $0xa0] sm:$0xff] %vm664, %v3758
      %3795 = vst.msk [vmem:[#allocation2 + $0xa8] sm:$0xff] %vm664, %v3759
      %3796 = vst.msk [vmem:[#allocation2 + $0xb0] sm:$0xff] %vm664, %v3760
      %3797 = vst.msk [vmem:[#allocation2 + $0xb8] sm:$0xff] %vm664, %v3761
      %3798 = vst.msk [vmem:[#allocation2 + $0xc0] sm:$0xff] %vm664, %v3762
      %3799 = vst.msk [vmem:[#allocation2 + $0xc8] sm:$0xff] %vm664, %v3763
      %3800 = vst.msk [vmem:[#allocation2 + $0xd0] sm:$0xff] %vm664, %v3764
      %3801 = vst.msk [vmem:[#allocation2 + $0xd8] sm:$0xff] %vm664, %v3765
      %3802 = vst.msk [vmem:[#allocation2 + $0xe0] sm:$0xff] %vm664, %v3766
      %3803 = vst.msk [vmem:[#allocation2 + $0xe8] sm:$0xff] %vm664, %v3767
      %3804 = vst.msk [vmem:[#allocation2 + $0xf0] sm:$0xff] %vm664, %v3768
      %3805 = vst.msk [vmem:[#allocation2 + $0xf8] sm:$0xff] %vm664, %v3769
      %3806 = vst.msk [vmem:[#allocation2 + $0x100] sm:$0xff] %vm664, %v3770
      %3807 = vst.msk [vmem:[#allocation2 + $0x108] sm:$0xff] %vm664, %v3771
      %3808 = vst.msk [vmem:[#allocation2 + $0x110] sm:$0xff] %vm664, %v3772
      %3809 = vst.msk [vmem:[#allocation2 + $0x118] sm:$0xff] %vm664, %v3773
      // Predicated region
      $region37: #{tpu_custom_call.1} parent=31 // pred_check
        %p3810 = pneg %p252
      $region38: #{tpu_custom_call.1} parent=31 // pred_check_branch
        %3812 = sbr.rel (%p3810) target = $region40
      $region39: #{tpu_custom_call.1} parent=31 // pred_region
        %v3813 = vld [vmem:[#allocation2] sm:$0xff]
        %v3814 = vld [vmem:[#allocation2 + $0x8] sm:$0xff]
        %v3815 = vld [vmem:[#allocation2 + $0x10] sm:$0xff]
        %v3816 = vld [vmem:[#allocation2 + $0x18] sm:$0xff]
        %v3817 = vld [vmem:[#allocation2 + $0x20] sm:$0xff]
        %v3818 = vld [vmem:[#allocation2 + $0x28] sm:$0xff]
        %v3819 = vld [vmem:[#allocation2 + $0x30] sm:$0xff]
        %v3820 = vld [vmem:[#allocation2 + $0x38] sm:$0xff]
        %v3821 = vld [vmem:[#allocation2 + $0x40] sm:$0xff]
        %v3822 = vld [vmem:[#allocation2 + $0x48] sm:$0xff]
        %v3823 = vld [vmem:[#allocation2 + $0x50] sm:$0xff]
        %v3824 = vld [vmem:[#allocation2 + $0x58] sm:$0xff]
        %v3825 = vld [vmem:[#allocation2 + $0x60] sm:$0xff]
        %v3826 = vld [vmem:[#allocation2 + $0x68] sm:$0xff]
        %v3827 = vld [vmem:[#allocation2 + $0x70] sm:$0xff]
        %v3828 = vld [vmem:[#allocation2 + $0x78] sm:$0xff]
        %v3829 = vld [vmem:[#allocation2 + $0x80] sm:$0xff]
        %v3830 = vld [vmem:[#allocation2 + $0x88] sm:$0xff]
        %v3831 = vld [vmem:[#allocation2 + $0x90] sm:$0xff]
        %v3832 = vld [vmem:[#allocation2 + $0x98] sm:$0xff]
        %v3833 = vld [vmem:[#allocation2 + $0xa0] sm:$0xff]
        %v3834 = vld [vmem:[#allocation2 + $0xa8] sm:$0xff]
        %v3835 = vld [vmem:[#allocation2 + $0xb0] sm:$0xff]
        %v3836 = vld [vmem:[#allocation2 + $0xb8] sm:$0xff]
        %v3837 = vld [vmem:[#allocation2 + $0xc0] sm:$0xff]
        %v3838 = vld [vmem:[#allocation2 + $0xc8] sm:$0xff]
        %v3839 = vld [vmem:[#allocation2 + $0xd0] sm:$0xff]
        %v3840 = vld [vmem:[#allocation2 + $0xd8] sm:$0xff]
        %v3841 = vld [vmem:[#allocation2 + $0xe0] sm:$0xff]
        %v3842 = vld [vmem:[#allocation2 + $0xe8] sm:$0xff]
        %v3843 = vld [vmem:[#allocation2 + $0xf0] sm:$0xff]
        %v3844 = vld [vmem:[#allocation2 + $0xf8] sm:$0xff]
        %v3845 = vld [vmem:[#allocation2 + $0x100] sm:$0xff]
        %v3846 = vld [vmem:[#allocation2 + $0x108] sm:$0xff]
        %v3847 = vld [vmem:[#allocation2 + $0x110] sm:$0xff]
        %v3848 = vld [vmem:[#allocation2 + $0x118] sm:$0xff]
        %v3849 = vld [vmem:[%s242] sm:$0x1]
        %v3851 = vlaneseq
        %v3852 = vshrl.u32 %v3851, 7
        %v3853 = vsub.s32 0, %v3852
        %v3854 = vrot.slane %v3849, %v3853
        %v3856 = vadd.f32 %v3813, %v3854
        %v3857 = vadd.f32 %v3814, %v3854
        %v3858 = vadd.f32 %v3815, %v3854
        %v3859 = vadd.f32 %v3816, %v3854
        %v3860 = vadd.f32 %v3817, %v3854
        %v3861 = vadd.f32 %v3818, %v3854
        %v3862 = vadd.f32 %v3819, %v3854
        %v3863 = vadd.f32 %v3820, %v3854
        %v3864 = vadd.f32 %v3821, %v3854
        %v3865 = vadd.f32 %v3822, %v3854
        %v3866 = vadd.f32 %v3823, %v3854
        %v3867 = vadd.f32 %v3824, %v3854
        %v3868 = vadd.f32 %v3825, %v3854
        %v3869 = vadd.f32 %v3826, %v3854
        %v3870 = vadd.f32 %v3827, %v3854
        %v3871 = vadd.f32 %v3828, %v3854
        %v3872 = vadd.f32 %v3829, %v3854
        %v3873 = vadd.f32 %v3830, %v3854
        %v3874 = vadd.f32 %v3831, %v3854
        %v3875 = vadd.f32 %v3832, %v3854
        %v3876 = vadd.f32 %v3833, %v3854
        %v3877 = vadd.f32 %v3834, %v3854
        %v3878 = vadd.f32 %v3835, %v3854
        %v3879 = vadd.f32 %v3836, %v3854
        %v3880 = vadd.f32 %v3837, %v3854
        %v3881 = vadd.f32 %v3838, %v3854
        %v3882 = vadd.f32 %v3839, %v3854
        %v3883 = vadd.f32 %v3840, %v3854
        %v3884 = vadd.f32 %v3841, %v3854
        %v3885 = vadd.f32 %v3842, %v3854
        %v3886 = vadd.f32 %v3843, %v3854
        %v3887 = vadd.f32 %v3844, %v3854
        %v3888 = vadd.f32 %v3845, %v3854
        %v3889 = vadd.f32 %v3846, %v3854
        %v3890 = vadd.f32 %v3847, %v3854
        %v3891 = vadd.f32 %v3848, %v3854
        %3892 = vst.msk [vmem:[%s250] sm:$0xff] %vm664, %v3856
        %3893 = vst.msk [vmem:[%s250 + $0x8] sm:$0xff] %vm664, %v3857
        %3894 = vst.msk [vmem:[%s250 + $0x10] sm:$0xff] %vm664, %v3858
        %3895 = vst.msk [vmem:[%s250 + $0x18] sm:$0xff] %vm664, %v3859
        %3896 = vst.msk [vmem:[%s250 + $0x20] sm:$0xff] %vm664, %v3860
        %3897 = vst.msk [vmem:[%s250 + $0x28] sm:$0xff] %vm664, %v3861
        %3898 = vst.msk [vmem:[%s250 + $0x30] sm:$0xff] %vm664, %v3862
        %3899 = vst.msk [vmem:[%s250 + $0x38] sm:$0xff] %vm664, %v3863
        %3900 = vst.msk [vmem:[%s250 + $0x40] sm:$0xff] %vm664, %v3864
        %3901 = vst.msk [vmem:[%s250 + $0x48] sm:$0xff] %vm664, %v3865
        %3902 = vst.msk [vmem:[%s250 + $0x50] sm:$0xff] %vm664, %v3866
        %3903 = vst.msk [vmem:[%s250 + $0x58] sm:$0xff] %vm664, %v3867
        %3904 = vst.msk [vmem:[%s250 + $0x60] sm:$0xff] %vm664, %v3868
        %3905 = vst.msk [vmem:[%s250 + $0x68] sm:$0xff] %vm664, %v3869
        %3906 = vst.msk [vmem:[%s250 + $0x70] sm:$0xff] %vm664, %v3870
        %3907 = vst.msk [vmem:[%s250 + $0x78] sm:$0xff] %vm664, %v3871
        %3908 = vst.msk [vmem:[%s250 + $0x80] sm:$0xff] %vm664, %v3872
        %3909 = vst.msk [vmem:[%s250 + $0x88] sm:$0xff] %vm664, %v3873
        %3910 = vst.msk [vmem:[%s250 + $0x90] sm:$0xff] %vm664, %v3874
        %3911 = vst.msk [vmem:[%s250 + $0x98] sm:$0xff] %vm664, %v3875
        %3912 = vst.msk [vmem:[%s250 + $0xa0] sm:$0xff] %vm664, %v3876
        %3913 = vst.msk [vmem:[%s250 + $0xa8] sm:$0xff] %vm664, %v3877
        %3914 = vst.msk [vmem:[%s250 + $0xb0] sm:$0xff] %vm664, %v3878
        %3915 = vst.msk [vmem:[%s250 + $0xb8] sm:$0xff] %vm664, %v3879
        %3916 = vst.msk [vmem:[%s250 + $0xc0] sm:$0xff] %vm664, %v3880
        %3917 = vst.msk [vmem:[%s250 + $0xc8] sm:$0xff] %vm664, %v3881
        %3918 = vst.msk [vmem:[%s250 + $0xd0] sm:$0xff] %vm664, %v3882
        %3919 = vst.msk [vmem:[%s250 + $0xd8] sm:$0xff] %vm664, %v3883
        %3920 = vst.msk [vmem:[%s250 + $0xe0] sm:$0xff] %vm664, %v3884
        %3921 = vst.msk [vmem:[%s250 + $0xe8] sm:$0xff] %vm664, %v3885
        %3922 = vst.msk [vmem:[%s250 + $0xf0] sm:$0xff] %vm664, %v3886
        %3923 = vst.msk [vmem:[%s250 + $0xf8] sm:$0xff] %vm664, %v3887
        %3924 = vst.msk [vmem:[%s250 + $0x100] sm:$0xff] %vm664, %v3888
        %3925 = vst.msk [vmem:[%s250 + $0x108] sm:$0xff] %vm664, %v3889
        %3926 = vst.msk [vmem:[%s250 + $0x110] sm:$0xff] %vm664, %v3890
        %3927 = vst.msk [vmem:[%s250 + $0x118] sm:$0xff] %vm664, %v3891
      $region40: #{tpu_custom_call.1} parent=31 // pred_fallthru
        _
      %p3928 = scmp.lt.s32.totalorder %s19, 1
      %s3929 = scalar_select %p3928, %s19, 1
      %p3930 = scmp.lt.s32.totalorder %s20, 0
      %s3931 = scalar_select %p3930, %s20, 0
      %s3932 = smul.addr %s3929, 36
      %s3933 = sadd.s32 %s3931, %s3932
      %s3934 = smul.addr %s3933, 8
      %s3935 = scalar_lea.vmem %s3, %s3934
      // Predicated region
      $region41: #{tpu_custom_call.1} parent=31 // pred_check
        %p3936 = pneg %p135
      $region42: #{tpu_custom_call.1} parent=31 // pred_check_branch
        %3938 = sbr.rel (%p3936) target = $region44
      $region43: #{tpu_custom_call.1} parent=31 // pred_region
        _
      $region44: #{tpu_custom_call.1} parent=31 // pred_fallthru
        _
    $region32: #{tpu_custom_call.1} parent=5 // pred_fallthru
      _
    %p3939 = scmp.le.s32.totalorder 2, %s9
    // Predicated region
    $region45: #{tpu_custom_call.1} parent=5 // pred_check
      %p3940 = pneg %p3939
    $region46: #{tpu_custom_call.1} parent=5 // pred_check_branch
      %3942 = sbr.rel (%p3940) target = $region48
    $region47: #{tpu_custom_call.1} parent=5 // pred_region
      %s3943 = ssub.s32 %s9, 2
      // Predicated region
      $region49: #{tpu_custom_call.1} parent=47 // pred_check
        %p3944 = pneg %p141
      $region50: #{tpu_custom_call.1} parent=47 // pred_check_branch
        %3946 = sbr.rel (%p3944) target = $region52
      $region51: #{tpu_custom_call.1} parent=47 // pred_region
        %p3947 = scmp.lt.s32.totalorder %s22, 1
        %s3948 = scalar_select %p3947, %s22, 1
        %p3949 = scmp.lt.s32.totalorder %s23, 0
        %s3950 = scalar_select %p3949, %s23, 0
        %s3951 = smul.addr %s3948, 36
        %s3952 = sadd.s32 %s3950, %s3951
        %s3953 = smul.addr %s3952, 8
        %s3954 = scalar_lea.vmem %s3, %s3953
      $region52: #{tpu_custom_call.1} parent=47 // pred_fallthru
        _
    $region48: #{tpu_custom_call.1} parent=5 // pred_fallthru
      _
  $region6: #{tpu_custom_call.1} parent=0 // loop_footer
    %s13 = sadd.s32 1, %s9
  $region7: #{tpu_custom_call.1} parent=0 // loop_footer_branch
    %8 = sbr.rel target = $region3
  $region8: #{tpu_custom_call.1} parent=0 // loop_exit
    _

</llo_original>
